<compile_context>
chip_gen: v5e
topology: v5e:2x2
jax: 0.10.0
libtpu: 0.0.40
codegen_flags: <defaults>
</compile_context>

<pallas_src>
import functools

import numpy as np

import jax
import jax.numpy as jnp
from jax.experimental import pallas as pl
from jax.experimental.pallas import tpu as pltpu


# ---------------------------------------------------------------------------
# fixed geometry of the module
# ---------------------------------------------------------------------------
C_IN, O1, K1, S1, P1 = 3, 10, 3, 1, 1          # CustomConv2d(3, 10, 3, 1, 1)
O2, K2, S2, P2 = 10, 3, 3, 1                   # Conv2d(10, 10, 3, 3, 1)
KT, ST, PT, OPT = 30, 3, 14, 1                 # ConvTranspose2d(10,1,30,3,14,op=1)
EPS = 1e-5


def _out_size(n, k, s, p):
    return (n + 2 * p - k) // s + 1


def _full_spec(shape):
    """Full-array BlockSpec (single block)."""
    return pl.BlockSpec(shape, lambda *_: (0,) * len(shape))


# ---------------------------------------------------------------------------
# the fused kernel
# ---------------------------------------------------------------------------
def _forecast_kernel(p1_ref, ew1_ref, w2m_ref, pvec_ref, sel_hbm, m_hbm,
                     o_ref, sel_vmem, m_vmem, sem, *, batch, hw2, hw3):
    # Kick off the two large constant DMAs; overlap them with compute and
    # wait only right before each constant's first use.
    sel_cp = pltpu.make_async_copy(sel_hbm, sel_vmem, sem.at[0])
    m_cp = pltpu.make_async_copy(m_hbm, m_vmem, sem.at[1])
    sel_cp.start()
    m_cp.start()

    pv = pvec_ref[...]                      # [10, 8] packed per-channel params
    c1 = pv[:, 0:1]                         # 27 + b1              [10, 1]
    gamma = pv[:, 1:2]                      # BN gamma             [10, 1]
    beta = pv[:, 2:3]                       # BN beta              [10, 1]
    bt = pv[0:1, 3:4]                       # deconv bias          [1, 1]

    # ---- stage 1: CustomConv2d + ReLU  (channel-major [10, 256] per batch) -
    #   sum_j (1 - exp(p_j + w_oj)) + b1 = (27 + b1) - exp(w) @ exp(p)
    # (p1 already holds exp(x) patches; see wrapper.)
    ew1 = ew1_ref[...]                      # [10, 27] f32
    out1 = [jnp.maximum(
                c1 - jnp.dot(ew1, p1_ref[b],
                             preferred_element_type=jnp.float32), 0.0)
            for b in range(batch)]          # each [10, 256] f32

    # ---- stage 2: Conv2d(10,10,3,stride=3,pad=1) ----------------------------
    # One 0/1 selection matmul per batch gathers all 9 taps (tap-major
    # columns), then 9 tiny per-tap weight matmuls contract the channels.
    sel_cp.wait()
    sel = sel_vmem[...]                     # [256, 9*36] bf16 (0/1 -> exact)
    out2 = []
    for b in range(batch):
        q = jnp.dot(out1[b].astype(jnp.bfloat16), sel,
                    preferred_element_type=jnp.float32)          # [10, 324]
        acc = jnp.zeros((O2, hw2), jnp.float32)
        for t in range(K2 * K2):
            acc = acc + jnp.dot(w2m_ref[t], q[:, t * hw2:(t + 1) * hw2],
                                preferred_element_type=jnp.float32)
        out2.append(acc)                    # [10, 36] (conv bias b2 cancels in BN)

    # ---- BatchNorm2d (training-mode batch statistics) + ReLU ---------------
    cnt = float(batch * hw2)
    mean = sum(o.sum(axis=1, keepdims=True) for o in out2) / cnt     # [10, 1]
    var = sum(((o - mean) ** 2).sum(axis=1, keepdims=True)
              for o in out2) / cnt                                   # biased
    scale = jax.lax.rsqrt(var + EPS) * gamma
    x2 = [jnp.maximum((o - mean) * scale + beta, 0.0) for o in out2]  # [10,36]

    # ---- stage 3: ConvTranspose2d (per-channel matmuls vs hoisted M) + Tanh
    m_cp.wait()
    acc3 = jnp.zeros((batch, hw3), jnp.float32)                       # [B,324]
    for c in range(O2):
        rows = jnp.concatenate([x2[b][c:c + 1, :] for b in range(batch)],
                               axis=0)                                # [B, 36]
        acc3 = acc3 + jnp.dot(rows.astype(jnp.bfloat16), m_vmem[c],
                              preferred_element_type=jnp.float32)
    o_ref[...] = jnp.tanh(acc3 + bt)


# ---------------------------------------------------------------------------
# parameter preparation (hoisted; built once)
# ---------------------------------------------------------------------------
def prepare_params(params, *, height=16, width=16):
    H1, W1 = _out_size(height, K1, S1, P1), _out_size(width, K1, S1, P1)
    H2, W2 = _out_size(H1, K2, S2, P2), _out_size(W1, K2, S2, P2)
    H3 = (H2 - 1) * ST - 2 * PT + KT + OPT
    W3 = (W2 - 1) * ST - 2 * PT + KT + OPT

    # stage 1: exp(weight), columns in (c, kh, kw) order (matches im2col rows)
    ew1 = jnp.exp(params["w1"]).reshape(O1, C_IN * K1 * K1).astype(jnp.float32)

    # stage 2: 0/1 tap-selection matrix, tap-major columns:
    #   sel[h*W1+w, t*H2*W2 + i*W2 + j] = 1  iff  h = 3i-1+kh, w = 3j-1+kw
    sel = np.zeros((H1 * W1, K2 * K2 * H2 * W2), np.float32)
    for kh in range(K2):
        for kw in range(K2):
            t = kh * K2 + kw
            for i in range(H2):
                for j in range(W2):
                    h, w = i * S2 - P2 + kh, j * S2 - P2 + kw
                    if 0 <= h < H1 and 0 <= w < W1:
                        sel[h * W1 + w, t * H2 * W2 + i * W2 + j] = 1.0
    selG = jnp.asarray(sel, dtype=jnp.bfloat16)                 # [256, 324]

    # per-tap conv2 weights: w2m[t, o, c] = w2[o, c, kh, kw]
    w2m = jnp.stack([params["w2"][:, :, kh, kw]
                     for kh in range(K2) for kw in range(K2)],
                    axis=0).astype(jnp.float32)                 # [9, 10, 10]

    # stage 3: unfolded ConvTranspose weight  M3[c, i*W2+j, y*W3+x]
    Wt = params["wt"][:, 0]                                     # [10, 30, 30]
    ys, iis = jnp.arange(H3), jnp.arange(H2)
    ky = ys[None, :] + PT - ST * iis[:, None]                   # [H2, H3]
    vy, kyc = (ky >= 0) & (ky < KT), jnp.clip(ky, 0, KT - 1)
    xs, jjs = jnp.arange(W3), jnp.arange(W2)
    kx = xs[None, :] + PT - ST * jjs[:, None]                   # [W2, W3]
    vx, kxc = (kx >= 0) & (kx < KT), jnp.clip(kx, 0, KT - 1)
    M5 = Wt[:, kyc[:, :, None, None], kxc[None, None, :, :]]    # [C,H2,H3,W2,W3]
    M5 = M5 * (vy[:, :, None, None] & vx[None, None, :, :]).astype(M5.dtype)
    M3 = M5.transpose(0, 1, 3, 2, 4).reshape(O2, H2 * W2, H3 * W3)
    M3 = M3.astype(jnp.bfloat16)                                # [10, 36, 324]

    # packed per-channel scalars: [27+b1 | gamma | beta | bt | 0...] -> (10, 8)
    # (Conv2d bias b2 is intentionally dropped: it shifts the batch mean by a
    #  per-channel constant and cancels exactly in training-mode BatchNorm.)
    pvec = jnp.zeros((O2, 8), jnp.float32)
    pvec = pvec.at[:, 0].set(float(C_IN * K1 * K1) + params["b1"])
    pvec = pvec.at[:, 1].set(params["bn_gamma"])
    pvec = pvec.at[:, 2].set(params["bn_beta"])
    pvec = pvec.at[0, 3].set(params["bt"][0])

    return dict(ew1=ew1, selG=selG, w2m=w2m, M3=M3, pvec=pvec)


# ---------------------------------------------------------------------------
# forward pass
# ---------------------------------------------------------------------------
def forecast_net_forward(x, prep):
    B, _, H, W = x.shape
    H1, W1 = _out_size(H, K1, S1, P1), _out_size(W, K1, S1, P1)
    H2, W2 = _out_size(H1, K2, S2, P2), _out_size(W1, K2, S2, P2)
    H3 = (H2 - 1) * ST - 2 * PT + KT + OPT
    W3 = (W2 - 1) * ST - 2 * PT + KT + OPT

    # XLA-side glue on the tiny input: exp first (pad value exp(0)=1), then a
    # 3x3 / stride-1 im2col with features on rows -> [B, 27, 256].
    xe = jnp.pad(jnp.exp(x), ((0, 0), (0, 0), (P1, P1), (P1, P1)),
                 constant_values=1.0)
    cols = [xe[:, :, kh:kh + H1, kw:kw + W1]
            for kh in range(K1) for kw in range(K1)]
    p1 = jnp.stack(cols, axis=2).reshape(B, C_IN * K1 * K1, H1 * W1)

    kernel = functools.partial(_forecast_kernel, batch=B,
                               hw2=H2 * W2, hw3=H3 * W3)
    out = pl.pallas_call(
        kernel,
        grid=(1,),
        out_shape=jax.ShapeDtypeStruct((B, H3 * W3), jnp.float32),
        in_specs=[
            _full_spec(p1.shape),                 # exp'd patches (auto VMEM)
            _full_spec(prep["ew1"].shape),        # exp(w1)
            _full_spec(prep["w2m"].shape),        # per-tap conv2 weights
            _full_spec(prep["pvec"].shape),       # packed per-channel scalars
            pl.BlockSpec(memory_space=pl.ANY),    # sel: manual overlapped DMA
            pl.BlockSpec(memory_space=pl.ANY),    # M3 : manual overlapped DMA
        ],
        out_specs=_full_spec((B, H3 * W3)),
        scratch_shapes=[
            pltpu.VMEM(prep["selG"].shape, jnp.bfloat16),
            pltpu.VMEM(prep["M3"].shape, jnp.bfloat16),
            pltpu.SemaphoreType.DMA((2,)),
        ],
    )(p1, prep["ew1"], prep["w2m"], prep["pvec"], prep["selG"], prep["M3"])
    return out.reshape(B, 1, H3, W3)


# ---------------------------------------------------------------------------
# deterministic parameter initialization (synthetic; shapes from __init__)
# ---------------------------------------------------------------------------
def init_params(key):
    k0, k1, k2, k3 = jax.random.split(key, 4)
    return {
        # CustomConv2d(3, 10, 3): weight = randn, bias = zeros
        "w1": jax.random.normal(k0, (10, 3, 3, 3), jnp.float32),
        "b1": jnp.zeros((10,), jnp.float32),
        # Conv2d(10, 10, 3, stride=3, pad=1)
        "w2": jax.random.normal(k1, (10, 10, 3, 3), jnp.float32) * 0.1,
        "b2": jax.random.normal(k2, (10,), jnp.float32) * 0.05,  # cancels in BN
        # BatchNorm2d(10): affine init
        "bn_gamma": jnp.ones((10,), jnp.float32),
        "bn_beta": jnp.zeros((10,), jnp.float32),
        # ConvTranspose2d(10, 1, 30, stride=3, pad=14, output_padding=1)
        "wt": jax.random.normal(k3, (10, 1, 30, 30), jnp.float32) * 0.05,
        "bt": jnp.zeros((1,), jnp.float32),
    }


if __name__ == "__main__":
    key = jax.random.PRNGKey(0)
    pkey, xkey = jax.random.split(key)
    params = init_params(pkey)
    x = jax.random.normal(xkey, (2, 3, 16, 16), jnp.float32)   # NCHW

    prep = prepare_params(params, height=16, width=16)  # hoisted, built once
    fwd = jax.jit(forecast_net_forward)
    out = jax.block_until_ready(fwd(x, prep))

    assert out.shape == (2, 1, 18, 18), out.shape
    assert bool(jnp.all(jnp.isfinite(out)))
    print("KERNEL_OK")
</pallas_src>

<mosaic_0001>
module attributes {stable_mosaic.version = 11 : i64} {
  func.func @_forecast_kernel(%arg0: i32, %arg1: memref<2x27x256xf32, #tpu.memory_space<vmem>>, %arg2: memref<10x27xf32, #tpu.memory_space<vmem>>, %arg3: memref<9x10x10xf32, #tpu.memory_space<vmem>>, %arg4: memref<10x8xf32, #tpu.memory_space<vmem>>, %arg5: memref<256x324xbf16, #tpu.memory_space<any>>, %arg6: memref<10x36x324xbf16, #tpu.memory_space<any>>, %arg7: memref<2x324xf32, #tpu.memory_space<vmem>>, %arg8: memref<256x324xbf16, #tpu.memory_space<vmem>>, %arg9: memref<10x36x324xbf16, #tpu.memory_space<vmem>>, %arg10: memref<2x!tpu.dma_semaphore, #tpu.memory_space<semaphore_mem>>) attributes {dimension_semantics = [#tpu.dimension_semantics<arbitrary>], iteration_bounds = array<i64: 1>, scalar_prefetch = 0 : i64, scratch_operands = 3 : i64, tpu.core_type = #tpu.core_type<tc>, window_params = [{pipeline_mode = #tpu.pipeline_mode<synchronous>, transform_indices = @transform_0, window_bounds = array<i64: 2, 27, 256>}, {pipeline_mode = #tpu.pipeline_mode<synchronous>, transform_indices = @transform_1, window_bounds = array<i64: 10, 27>}, {pipeline_mode = #tpu.pipeline_mode<synchronous>, transform_indices = @transform_2, window_bounds = array<i64: 9, 10, 10>}, {pipeline_mode = #tpu.pipeline_mode<synchronous>, transform_indices = @transform_3, window_bounds = array<i64: 10, 8>}, {}, {}, {pipeline_mode = #tpu.pipeline_mode<synchronous>, transform_indices = @transform_6, window_bounds = array<i64: 2, 324>}]} {
    %c0_i32 = arith.constant 0 : i32
    %0 = tpu.memref_slice %arg10[%c0_i32] : memref<2x!tpu.dma_semaphore, #tpu.memory_space<semaphore_mem>> -> memref<1x!tpu.dma_semaphore, #tpu.memory_space<semaphore_mem>>
    %1 = tpu.memref_squeeze %0 : memref<1x!tpu.dma_semaphore, #tpu.memory_space<semaphore_mem>> -> memref<!tpu.dma_semaphore, #tpu.memory_space<semaphore_mem>>
    tpu.enqueue_dma source(%arg5 : memref<256x324xbf16, #tpu.memory_space<any>>) target(%arg8 : memref<256x324xbf16, #tpu.memory_space<vmem>>) target_semaphore(%1 : memref<!tpu.dma_semaphore, #tpu.memory_space<semaphore_mem>>)
    %c1_i32 = arith.constant 1 : i32
    %2 = tpu.memref_slice %arg10[%c1_i32] : memref<2x!tpu.dma_semaphore, #tpu.memory_space<semaphore_mem>> -> memref<1x!tpu.dma_semaphore, #tpu.memory_space<semaphore_mem>>
    %3 = tpu.memref_squeeze %2 : memref<1x!tpu.dma_semaphore, #tpu.memory_space<semaphore_mem>> -> memref<!tpu.dma_semaphore, #tpu.memory_space<semaphore_mem>>
    tpu.enqueue_dma source(%arg6 : memref<10x36x324xbf16, #tpu.memory_space<any>>) target(%arg9 : memref<10x36x324xbf16, #tpu.memory_space<vmem>>) target_semaphore(%3 : memref<!tpu.dma_semaphore, #tpu.memory_space<semaphore_mem>>)
    %c0 = arith.constant 0 : index
    %c0_0 = arith.constant 0 : index
    %4 = vector.load %arg4[%c0, %c0_0] : memref<10x8xf32, #tpu.memory_space<vmem>>, vector<10x8xf32>
    %5 = vector.extract_strided_slice %4 {offsets = [0, 0], sizes = [10, 1], strides = [1, 1]} : vector<10x8xf32> to vector<10x1xf32>
    %6 = vector.extract_strided_slice %4 {offsets = [0, 1], sizes = [10, 1], strides = [1, 1]} : vector<10x8xf32> to vector<10x1xf32>
    %7 = vector.extract_strided_slice %4 {offsets = [0, 2], sizes = [10, 1], strides = [1, 1]} : vector<10x8xf32> to vector<10x1xf32>
    %8 = vector.extract_strided_slice %4 {offsets = [0, 3], sizes = [1, 1], strides = [1, 1]} : vector<10x8xf32> to vector<1x1xf32>
    %c0_1 = arith.constant 0 : index
    %c0_2 = arith.constant 0 : index
    %9 = vector.load %arg2[%c0_1, %c0_2] : memref<10x27xf32, #tpu.memory_space<vmem>>, vector<10x27xf32>
    %c0_3 = arith.constant 0 : index
    %c0_4 = arith.constant 0 : index
    %c0_5 = arith.constant 0 : index
    %10 = vector.load %arg1[%c0_3, %c0_4, %c0_5] : memref<2x27x256xf32, #tpu.memory_space<vmem>>, vector<1x27x256xf32>
    %11 = vector.shape_cast %10 : vector<1x27x256xf32> to vector<27x256xf32>
    %cst = arith.constant dense<0.000000e+00> : vector<10x256xf32>
    %12 = tpu.matmul %9, %11, %cst {dimension_numbers = #tpu.dot_dimension_numbers<[1], [0], [0], [1], [0, 0, 1, 1], [], []>} : vector<10x27xf32>, vector<27x256xf32>, vector<10x256xf32> -> vector<10x256xf32>
    %13 = vector.broadcast %5 : vector<10x1xf32> to vector<10x256xf32>
    %14 = arith.subf %13, %12 : vector<10x256xf32>
    %cst_6 = arith.constant 0.000000e+00 : f32
    %15 = vector.broadcast %cst_6 : f32 to vector<10x256xf32>
    %16 = arith.maximumf %14, %15 : vector<10x256xf32>
    %c1 = arith.constant 1 : index
    %c0_7 = arith.constant 0 : index
    %c0_8 = arith.constant 0 : index
    %17 = vector.load %arg1[%c1, %c0_7, %c0_8] : memref<2x27x256xf32, #tpu.memory_space<vmem>>, vector<1x27x256xf32>
    %18 = vector.shape_cast %17 : vector<1x27x256xf32> to vector<27x256xf32>
    %cst_9 = arith.constant dense<0.000000e+00> : vector<10x256xf32>
    %19 = tpu.matmul %9, %18, %cst_9 {dimension_numbers = #tpu.dot_dimension_numbers<[1], [0], [0], [1], [0, 0, 1, 1], [], []>} : vector<10x27xf32>, vector<27x256xf32>, vector<10x256xf32> -> vector<10x256xf32>
    %20 = vector.broadcast %5 : vector<10x1xf32> to vector<10x256xf32>
    %21 = arith.subf %20, %19 : vector<10x256xf32>
    %cst_10 = arith.constant 0.000000e+00 : f32
    %22 = vector.broadcast %cst_10 : f32 to vector<10x256xf32>
    %23 = arith.maximumf %21, %22 : vector<10x256xf32>
    %c0_i32_11 = arith.constant 0 : i32
    %24 = tpu.memref_slice %arg10[%c0_i32_11] : memref<2x!tpu.dma_semaphore, #tpu.memory_space<semaphore_mem>> -> memref<1x!tpu.dma_semaphore, #tpu.memory_space<semaphore_mem>>
    %25 = tpu.memref_squeeze %24 : memref<1x!tpu.dma_semaphore, #tpu.memory_space<semaphore_mem>> -> memref<!tpu.dma_semaphore, #tpu.memory_space<semaphore_mem>>
    tpu.wait_dma2 semaphore(%25 : memref<!tpu.dma_semaphore, #tpu.memory_space<semaphore_mem>>) src(%arg5 : memref<256x324xbf16, #tpu.memory_space<any>>) dst(%arg8 : memref<256x324xbf16, #tpu.memory_space<vmem>>)
    %c0_12 = arith.constant 0 : index
    %c0_13 = arith.constant 0 : index
    %26 = vector.load %arg8[%c0_12, %c0_13] : memref<256x324xbf16, #tpu.memory_space<vmem>>, vector<256x324xbf16>
    %27 = arith.truncf %16 : vector<10x256xf32> to vector<10x256xbf16>
    %cst_14 = arith.constant dense<0.000000e+00> : vector<10x324xf32>
    %28 = tpu.matmul %27, %26, %cst_14 {dimension_numbers = #tpu.dot_dimension_numbers<[1], [0], [0], [1], [0, 0, 1, 1], [], []>} : vector<10x256xbf16>, vector<256x324xbf16>, vector<10x324xf32> -> vector<10x324xf32>
    %cst_15 = arith.constant 0.000000e+00 : f32
    %29 = vector.broadcast %cst_15 : f32 to vector<10x36xf32>
    %c0_16 = arith.constant 0 : index
    %c0_17 = arith.constant 0 : index
    %c0_18 = arith.constant 0 : index
    %30 = vector.load %arg3[%c0_16, %c0_17, %c0_18] : memref<9x10x10xf32, #tpu.memory_space<vmem>>, vector<1x10x10xf32>
    %31 = vector.shape_cast %30 : vector<1x10x10xf32> to vector<10x10xf32>
    %32 = vector.extract_strided_slice %28 {offsets = [0, 0], sizes = [10, 36], strides = [1, 1]} : vector<10x324xf32> to vector<10x36xf32>
    %cst_19 = arith.constant dense<0.000000e+00> : vector<10x36xf32>
    %33 = tpu.matmul %31, %32, %cst_19 {dimension_numbers = #tpu.dot_dimension_numbers<[1], [0], [0], [1], [0, 0, 1, 1], [], []>} : vector<10x10xf32>, vector<10x36xf32>, vector<10x36xf32> -> vector<10x36xf32>
    %34 = arith.addf %29, %33 : vector<10x36xf32>
    %c1_20 = arith.constant 1 : index
    %c0_21 = arith.constant 0 : index
    %c0_22 = arith.constant 0 : index
    %35 = vector.load %arg3[%c1_20, %c0_21, %c0_22] : memref<9x10x10xf32, #tpu.memory_space<vmem>>, vector<1x10x10xf32>
    %36 = vector.shape_cast %35 : vector<1x10x10xf32> to vector<10x10xf32>
    %37 = vector.extract_strided_slice %28 {offsets = [0, 36], sizes = [10, 36], strides = [1, 1]} : vector<10x324xf32> to vector<10x36xf32>
    %cst_23 = arith.constant dense<0.000000e+00> : vector<10x36xf32>
    %38 = tpu.matmul %36, %37, %cst_23 {dimension_numbers = #tpu.dot_dimension_numbers<[1], [0], [0], [1], [0, 0, 1, 1], [], []>} : vector<10x10xf32>, vector<10x36xf32>, vector<10x36xf32> -> vector<10x36xf32>
    %39 = arith.addf %34, %38 : vector<10x36xf32>
    %c2 = arith.constant 2 : index
    %c0_24 = arith.constant 0 : index
    %c0_25 = arith.constant 0 : index
    %40 = vector.load %arg3[%c2, %c0_24, %c0_25] : memref<9x10x10xf32, #tpu.memory_space<vmem>>, vector<1x10x10xf32>
    %41 = vector.shape_cast %40 : vector<1x10x10xf32> to vector<10x10xf32>
    %42 = vector.extract_strided_slice %28 {offsets = [0, 72], sizes = [10, 36], strides = [1, 1]} : vector<10x324xf32> to vector<10x36xf32>
    %cst_26 = arith.constant dense<0.000000e+00> : vector<10x36xf32>
    %43 = tpu.matmul %41, %42, %cst_26 {dimension_numbers = #tpu.dot_dimension_numbers<[1], [0], [0], [1], [0, 0, 1, 1], [], []>} : vector<10x10xf32>, vector<10x36xf32>, vector<10x36xf32> -> vector<10x36xf32>
    %44 = arith.addf %39, %43 : vector<10x36xf32>
    %c3 = arith.constant 3 : index
    %c0_27 = arith.constant 0 : index
    %c0_28 = arith.constant 0 : index
    %45 = vector.load %arg3[%c3, %c0_27, %c0_28] : memref<9x10x10xf32, #tpu.memory_space<vmem>>, vector<1x10x10xf32>
    %46 = vector.shape_cast %45 : vector<1x10x10xf32> to vector<10x10xf32>
    %47 = vector.extract_strided_slice %28 {offsets = [0, 108], sizes = [10, 36], strides = [1, 1]} : vector<10x324xf32> to vector<10x36xf32>
    %cst_29 = arith.constant dense<0.000000e+00> : vector<10x36xf32>
    %48 = tpu.matmul %46, %47, %cst_29 {dimension_numbers = #tpu.dot_dimension_numbers<[1], [0], [0], [1], [0, 0, 1, 1], [], []>} : vector<10x10xf32>, vector<10x36xf32>, vector<10x36xf32> -> vector<10x36xf32>
    %49 = arith.addf %44, %48 : vector<10x36xf32>
    %c4 = arith.constant 4 : index
    %c0_30 = arith.constant 0 : index
    %c0_31 = arith.constant 0 : index
    %50 = vector.load %arg3[%c4, %c0_30, %c0_31] : memref<9x10x10xf32, #tpu.memory_space<vmem>>, vector<1x10x10xf32>
    %51 = vector.shape_cast %50 : vector<1x10x10xf32> to vector<10x10xf32>
    %52 = vector.extract_strided_slice %28 {offsets = [0, 144], sizes = [10, 36], strides = [1, 1]} : vector<10x324xf32> to vector<10x36xf32>
    %cst_32 = arith.constant dense<0.000000e+00> : vector<10x36xf32>
    %53 = tpu.matmul %51, %52, %cst_32 {dimension_numbers = #tpu.dot_dimension_numbers<[1], [0], [0], [1], [0, 0, 1, 1], [], []>} : vector<10x10xf32>, vector<10x36xf32>, vector<10x36xf32> -> vector<10x36xf32>
    %54 = arith.addf %49, %53 : vector<10x36xf32>
    %c5 = arith.constant 5 : index
    %c0_33 = arith.constant 0 : index
    %c0_34 = arith.constant 0 : index
    %55 = vector.load %arg3[%c5, %c0_33, %c0_34] : memref<9x10x10xf32, #tpu.memory_space<vmem>>, vector<1x10x10xf32>
    %56 = vector.shape_cast %55 : vector<1x10x10xf32> to vector<10x10xf32>
    %57 = vector.extract_strided_slice %28 {offsets = [0, 180], sizes = [10, 36], strides = [1, 1]} : vector<10x324xf32> to vector<10x36xf32>
    %cst_35 = arith.constant dense<0.000000e+00> : vector<10x36xf32>
    %58 = tpu.matmul %56, %57, %cst_35 {dimension_numbers = #tpu.dot_dimension_numbers<[1], [0], [0], [1], [0, 0, 1, 1], [], []>} : vector<10x10xf32>, vector<10x36xf32>, vector<10x36xf32> -> vector<10x36xf32>
    %59 = arith.addf %54, %58 : vector<10x36xf32>
    %c6 = arith.constant 6 : index
    %c0_36 = arith.constant 0 : index
    %c0_37 = arith.constant 0 : index
    %60 = vector.load %arg3[%c6, %c0_36, %c0_37] : memref<9x10x10xf32, #tpu.memory_space<vmem>>, vector<1x10x10xf32>
    %61 = vector.shape_cast %60 : vector<1x10x10xf32> to vector<10x10xf32>
    %62 = vector.extract_strided_slice %28 {offsets = [0, 216], sizes = [10, 36], strides = [1, 1]} : vector<10x324xf32> to vector<10x36xf32>
    %cst_38 = arith.constant dense<0.000000e+00> : vector<10x36xf32>
    %63 = tpu.matmul %61, %62, %cst_38 {dimension_numbers = #tpu.dot_dimension_numbers<[1], [0], [0], [1], [0, 0, 1, 1], [], []>} : vector<10x10xf32>, vector<10x36xf32>, vector<10x36xf32> -> vector<10x36xf32>
    %64 = arith.addf %59, %63 : vector<10x36xf32>
    %c7 = arith.constant 7 : index
    %c0_39 = arith.constant 0 : index
    %c0_40 = arith.constant 0 : index
    %65 = vector.load %arg3[%c7, %c0_39, %c0_40] : memref<9x10x10xf32, #tpu.memory_space<vmem>>, vector<1x10x10xf32>
    %66 = vector.shape_cast %65 : vector<1x10x10xf32> to vector<10x10xf32>
    %67 = vector.extract_strided_slice %28 {offsets = [0, 252], sizes = [10, 36], strides = [1, 1]} : vector<10x324xf32> to vector<10x36xf32>
    %cst_41 = arith.constant dense<0.000000e+00> : vector<10x36xf32>
    %68 = tpu.matmul %66, %67, %cst_41 {dimension_numbers = #tpu.dot_dimension_numbers<[1], [0], [0], [1], [0, 0, 1, 1], [], []>} : vector<10x10xf32>, vector<10x36xf32>, vector<10x36xf32> -> vector<10x36xf32>
    %69 = arith.addf %64, %68 : vector<10x36xf32>
    %c8 = arith.constant 8 : index
    %c0_42 = arith.constant 0 : index
    %c0_43 = arith.constant 0 : index
    %70 = vector.load %arg3[%c8, %c0_42, %c0_43] : memref<9x10x10xf32, #tpu.memory_space<vmem>>, vector<1x10x10xf32>
    %71 = vector.shape_cast %70 : vector<1x10x10xf32> to vector<10x10xf32>
    %72 = vector.extract_strided_slice %28 {offsets = [0, 288], sizes = [10, 36], strides = [1, 1]} : vector<10x324xf32> to vector<10x36xf32>
    %cst_44 = arith.constant dense<0.000000e+00> : vector<10x36xf32>
    %73 = tpu.matmul %71, %72, %cst_44 {dimension_numbers = #tpu.dot_dimension_numbers<[1], [0], [0], [1], [0, 0, 1, 1], [], []>} : vector<10x10xf32>, vector<10x36xf32>, vector<10x36xf32> -> vector<10x36xf32>
    %74 = arith.addf %69, %73 : vector<10x36xf32>
    %75 = arith.truncf %23 : vector<10x256xf32> to vector<10x256xbf16>
    %cst_45 = arith.constant dense<0.000000e+00> : vector<10x324xf32>
    %76 = tpu.matmul %75, %26, %cst_45 {dimension_numbers = #tpu.dot_dimension_numbers<[1], [0], [0], [1], [0, 0, 1, 1], [], []>} : vector<10x256xbf16>, vector<256x324xbf16>, vector<10x324xf32> -> vector<10x324xf32>
    %cst_46 = arith.constant 0.000000e+00 : f32
    %77 = vector.broadcast %cst_46 : f32 to vector<10x36xf32>
    %c0_47 = arith.constant 0 : index
    %c0_48 = arith.constant 0 : index
    %c0_49 = arith.constant 0 : index
    %78 = vector.load %arg3[%c0_47, %c0_48, %c0_49] : memref<9x10x10xf32, #tpu.memory_space<vmem>>, vector<1x10x10xf32>
    %79 = vector.shape_cast %78 : vector<1x10x10xf32> to vector<10x10xf32>
    %80 = vector.extract_strided_slice %76 {offsets = [0, 0], sizes = [10, 36], strides = [1, 1]} : vector<10x324xf32> to vector<10x36xf32>
    %cst_50 = arith.constant dense<0.000000e+00> : vector<10x36xf32>
    %81 = tpu.matmul %79, %80, %cst_50 {dimension_numbers = #tpu.dot_dimension_numbers<[1], [0], [0], [1], [0, 0, 1, 1], [], []>} : vector<10x10xf32>, vector<10x36xf32>, vector<10x36xf32> -> vector<10x36xf32>
    %82 = arith.addf %77, %81 : vector<10x36xf32>
    %c1_51 = arith.constant 1 : index
    %c0_52 = arith.constant 0 : index
    %c0_53 = arith.constant 0 : index
    %83 = vector.load %arg3[%c1_51, %c0_52, %c0_53] : memref<9x10x10xf32, #tpu.memory_space<vmem>>, vector<1x10x10xf32>
    %84 = vector.shape_cast %83 : vector<1x10x10xf32> to vector<10x10xf32>
    %85 = vector.extract_strided_slice %76 {offsets = [0, 36], sizes = [10, 36], strides = [1, 1]} : vector<10x324xf32> to vector<10x36xf32>
    %cst_54 = arith.constant dense<0.000000e+00> : vector<10x36xf32>
    %86 = tpu.matmul %84, %85, %cst_54 {dimension_numbers = #tpu.dot_dimension_numbers<[1], [0], [0], [1], [0, 0, 1, 1], [], []>} : vector<10x10xf32>, vector<10x36xf32>, vector<10x36xf32> -> vector<10x36xf32>
    %87 = arith.addf %82, %86 : vector<10x36xf32>
    %c2_55 = arith.constant 2 : index
    %c0_56 = arith.constant 0 : index
    %c0_57 = arith.constant 0 : index
    %88 = vector.load %arg3[%c2_55, %c0_56, %c0_57] : memref<9x10x10xf32, #tpu.memory_space<vmem>>, vector<1x10x10xf32>
    %89 = vector.shape_cast %88 : vector<1x10x10xf32> to vector<10x10xf32>
    %90 = vector.extract_strided_slice %76 {offsets = [0, 72], sizes = [10, 36], strides = [1, 1]} : vector<10x324xf32> to vector<10x36xf32>
    %cst_58 = arith.constant dense<0.000000e+00> : vector<10x36xf32>
    %91 = tpu.matmul %89, %90, %cst_58 {dimension_numbers = #tpu.dot_dimension_numbers<[1], [0], [0], [1], [0, 0, 1, 1], [], []>} : vector<10x10xf32>, vector<10x36xf32>, vector<10x36xf32> -> vector<10x36xf32>
    %92 = arith.addf %87, %91 : vector<10x36xf32>
    %c3_59 = arith.constant 3 : index
    %c0_60 = arith.constant 0 : index
    %c0_61 = arith.constant 0 : index
    %93 = vector.load %arg3[%c3_59, %c0_60, %c0_61] : memref<9x10x10xf32, #tpu.memory_space<vmem>>, vector<1x10x10xf32>
    %94 = vector.shape_cast %93 : vector<1x10x10xf32> to vector<10x10xf32>
    %95 = vector.extract_strided_slice %76 {offsets = [0, 108], sizes = [10, 36], strides = [1, 1]} : vector<10x324xf32> to vector<10x36xf32>
    %cst_62 = arith.constant dense<0.000000e+00> : vector<10x36xf32>
    %96 = tpu.matmul %94, %95, %cst_62 {dimension_numbers = #tpu.dot_dimension_numbers<[1], [0], [0], [1], [0, 0, 1, 1], [], []>} : vector<10x10xf32>, vector<10x36xf32>, vector<10x36xf32> -> vector<10x36xf32>
    %97 = arith.addf %92, %96 : vector<10x36xf32>
    %c4_63 = arith.constant 4 : index
    %c0_64 = arith.constant 0 : index
    %c0_65 = arith.constant 0 : index
    %98 = vector.load %arg3[%c4_63, %c0_64, %c0_65] : memref<9x10x10xf32, #tpu.memory_space<vmem>>, vector<1x10x10xf32>
    %99 = vector.shape_cast %98 : vector<1x10x10xf32> to vector<10x10xf32>
    %100 = vector.extract_strided_slice %76 {offsets = [0, 144], sizes = [10, 36], strides = [1, 1]} : vector<10x324xf32> to vector<10x36xf32>
    %cst_66 = arith.constant dense<0.000000e+00> : vector<10x36xf32>
    %101 = tpu.matmul %99, %100, %cst_66 {dimension_numbers = #tpu.dot_dimension_numbers<[1], [0], [0], [1], [0, 0, 1, 1], [], []>} : vector<10x10xf32>, vector<10x36xf32>, vector<10x36xf32> -> vector<10x36xf32>
    %102 = arith.addf %97, %101 : vector<10x36xf32>
    %c5_67 = arith.constant 5 : index
    %c0_68 = arith.constant 0 : index
    %c0_69 = arith.constant 0 : index
    %103 = vector.load %arg3[%c5_67, %c0_68, %c0_69] : memref<9x10x10xf32, #tpu.memory_space<vmem>>, vector<1x10x10xf32>
    %104 = vector.shape_cast %103 : vector<1x10x10xf32> to vector<10x10xf32>
    %105 = vector.extract_strided_slice %76 {offsets = [0, 180], sizes = [10, 36], strides = [1, 1]} : vector<10x324xf32> to vector<10x36xf32>
    %cst_70 = arith.constant dense<0.000000e+00> : vector<10x36xf32>
    %106 = tpu.matmul %104, %105, %cst_70 {dimension_numbers = #tpu.dot_dimension_numbers<[1], [0], [0], [1], [0, 0, 1, 1], [], []>} : vector<10x10xf32>, vector<10x36xf32>, vector<10x36xf32> -> vector<10x36xf32>
    %107 = arith.addf %102, %106 : vector<10x36xf32>
    %c6_71 = arith.constant 6 : index
    %c0_72 = arith.constant 0 : index
    %c0_73 = arith.constant 0 : index
    %108 = vector.load %arg3[%c6_71, %c0_72, %c0_73] : memref<9x10x10xf32, #tpu.memory_space<vmem>>, vector<1x10x10xf32>
    %109 = vector.shape_cast %108 : vector<1x10x10xf32> to vector<10x10xf32>
    %110 = vector.extract_strided_slice %76 {offsets = [0, 216], sizes = [10, 36], strides = [1, 1]} : vector<10x324xf32> to vector<10x36xf32>
    %cst_74 = arith.constant dense<0.000000e+00> : vector<10x36xf32>
    %111 = tpu.matmul %109, %110, %cst_74 {dimension_numbers = #tpu.dot_dimension_numbers<[1], [0], [0], [1], [0, 0, 1, 1], [], []>} : vector<10x10xf32>, vector<10x36xf32>, vector<10x36xf32> -> vector<10x36xf32>
    %112 = arith.addf %107, %111 : vector<10x36xf32>
    %c7_75 = arith.constant 7 : index
    %c0_76 = arith.constant 0 : index
    %c0_77 = arith.constant 0 : index
    %113 = vector.load %arg3[%c7_75, %c0_76, %c0_77] : memref<9x10x10xf32, #tpu.memory_space<vmem>>, vector<1x10x10xf32>
    %114 = vector.shape_cast %113 : vector<1x10x10xf32> to vector<10x10xf32>
    %115 = vector.extract_strided_slice %76 {offsets = [0, 252], sizes = [10, 36], strides = [1, 1]} : vector<10x324xf32> to vector<10x36xf32>
    %cst_78 = arith.constant dense<0.000000e+00> : vector<10x36xf32>
    %116 = tpu.matmul %114, %115, %cst_78 {dimension_numbers = #tpu.dot_dimension_numbers<[1], [0], [0], [1], [0, 0, 1, 1], [], []>} : vector<10x10xf32>, vector<10x36xf32>, vector<10x36xf32> -> vector<10x36xf32>
    %117 = arith.addf %112, %116 : vector<10x36xf32>
    %c8_79 = arith.constant 8 : index
    %c0_80 = arith.constant 0 : index
    %c0_81 = arith.constant 0 : index
    %118 = vector.load %arg3[%c8_79, %c0_80, %c0_81] : memref<9x10x10xf32, #tpu.memory_space<vmem>>, vector<1x10x10xf32>
    %119 = vector.shape_cast %118 : vector<1x10x10xf32> to vector<10x10xf32>
    %120 = vector.extract_strided_slice %76 {offsets = [0, 288], sizes = [10, 36], strides = [1, 1]} : vector<10x324xf32> to vector<10x36xf32>
    %cst_82 = arith.constant dense<0.000000e+00> : vector<10x36xf32>
    %121 = tpu.matmul %119, %120, %cst_82 {dimension_numbers = #tpu.dot_dimension_numbers<[1], [0], [0], [1], [0, 0, 1, 1], [], []>} : vector<10x10xf32>, vector<10x36xf32>, vector<10x36xf32> -> vector<10x36xf32>
    %122 = arith.addf %117, %121 : vector<10x36xf32>
    %cst_83 = arith.constant dense<0.000000e+00> : vector<10xf32>
    %123 = vector.multi_reduction <add>, %74, %cst_83 [1] : vector<10x36xf32> to vector<10xf32>
    %124 = vector.shape_cast %123 : vector<10xf32> to vector<10x1xf32>
    %cst_84 = arith.constant 0.000000e+00 : f32
    %125 = vector.broadcast %cst_84 : f32 to vector<10x1xf32>
    %126 = arith.addf %125, %124 : vector<10x1xf32>
    %cst_85 = arith.constant dense<0.000000e+00> : vector<10xf32>
    %127 = vector.multi_reduction <add>, %122, %cst_85 [1] : vector<10x36xf32> to vector<10xf32>
    %128 = vector.shape_cast %127 : vector<10xf32> to vector<10x1xf32>
    %129 = arith.addf %126, %128 : vector<10x1xf32>
    %cst_86 = arith.constant 7.200000e+01 : f32
    %130 = vector.broadcast %cst_86 : f32 to vector<10x1xf32>
    %131 = arith.divf %129, %130 : vector<10x1xf32>
    %132 = vector.broadcast %131 : vector<10x1xf32> to vector<10x36xf32>
    %133 = arith.subf %74, %132 : vector<10x36xf32>
    %134 = arith.mulf %133, %133 : vector<10x36xf32>
    %cst_87 = arith.constant dense<0.000000e+00> : vector<10xf32>
    %135 = vector.multi_reduction <add>, %134, %cst_87 [1] : vector<10x36xf32> to vector<10xf32>
    %136 = vector.shape_cast %135 : vector<10xf32> to vector<10x1xf32>
    %cst_88 = arith.constant 0.000000e+00 : f32
    %137 = vector.broadcast %cst_88 : f32 to vector<10x1xf32>
    %138 = arith.addf %137, %136 : vector<10x1xf32>
    %139 = vector.broadcast %131 : vector<10x1xf32> to vector<10x36xf32>
    %140 = arith.subf %122, %139 : vector<10x36xf32>
    %141 = arith.mulf %140, %140 : vector<10x36xf32>
    %cst_89 = arith.constant dense<0.000000e+00> : vector<10xf32>
    %142 = vector.multi_reduction <add>, %141, %cst_89 [1] : vector<10x36xf32> to vector<10xf32>
    %143 = vector.shape_cast %142 : vector<10xf32> to vector<10x1xf32>
    %144 = arith.addf %138, %143 : vector<10x1xf32>
    %cst_90 = arith.constant 7.200000e+01 : f32
    %145 = vector.broadcast %cst_90 : f32 to vector<10x1xf32>
    %146 = arith.divf %144, %145 : vector<10x1xf32>
    %cst_91 = arith.constant 9.99999974E-6 : f32
    %147 = vector.broadcast %cst_91 : f32 to vector<10x1xf32>
    %148 = arith.addf %146, %147 : vector<10x1xf32>
    %149 = math.rsqrt %148 : vector<10x1xf32>
    %150 = arith.mulf %149, %6 : vector<10x1xf32>
    %151 = vector.broadcast %131 : vector<10x1xf32> to vector<10x36xf32>
    %152 = arith.subf %74, %151 : vector<10x36xf32>
    %153 = vector.broadcast %150 : vector<10x1xf32> to vector<10x36xf32>
    %154 = arith.mulf %152, %153 : vector<10x36xf32>
    %155 = vector.broadcast %7 : vector<10x1xf32> to vector<10x36xf32>
    %156 = arith.addf %154, %155 : vector<10x36xf32>
    %cst_92 = arith.constant 0.000000e+00 : f32
    %157 = vector.broadcast %cst_92 : f32 to vector<10x36xf32>
    %158 = arith.maximumf %156, %157 : vector<10x36xf32>
    %159 = vector.broadcast %131 : vector<10x1xf32> to vector<10x36xf32>
    %160 = arith.subf %122, %159 : vector<10x36xf32>
    %161 = vector.broadcast %150 : vector<10x1xf32> to vector<10x36xf32>
    %162 = arith.mulf %160, %161 : vector<10x36xf32>
    %163 = vector.broadcast %7 : vector<10x1xf32> to vector<10x36xf32>
    %164 = arith.addf %162, %163 : vector<10x36xf32>
    %cst_93 = arith.constant 0.000000e+00 : f32
    %165 = vector.broadcast %cst_93 : f32 to vector<10x36xf32>
    %166 = arith.maximumf %164, %165 : vector<10x36xf32>
    %c1_i32_94 = arith.constant 1 : i32
    %167 = tpu.memref_slice %arg10[%c1_i32_94] : memref<2x!tpu.dma_semaphore, #tpu.memory_space<semaphore_mem>> -> memref<1x!tpu.dma_semaphore, #tpu.memory_space<semaphore_mem>>
    %168 = tpu.memref_squeeze %167 : memref<1x!tpu.dma_semaphore, #tpu.memory_space<semaphore_mem>> -> memref<!tpu.dma_semaphore, #tpu.memory_space<semaphore_mem>>
    tpu.wait_dma2 semaphore(%168 : memref<!tpu.dma_semaphore, #tpu.memory_space<semaphore_mem>>) src(%arg6 : memref<10x36x324xbf16, #tpu.memory_space<any>>) dst(%arg9 : memref<10x36x324xbf16, #tpu.memory_space<vmem>>)
    %cst_95 = arith.constant 0.000000e+00 : f32
    %169 = vector.broadcast %cst_95 : f32 to vector<2x324xf32>
    %170 = vector.extract_strided_slice %158 {offsets = [0, 0], sizes = [1, 36], strides = [1, 1]} : vector<10x36xf32> to vector<1x36xf32>
    %171 = vector.extract_strided_slice %166 {offsets = [0, 0], sizes = [1, 36], strides = [1, 1]} : vector<10x36xf32> to vector<1x36xf32>
    %172 = tpu.concatenate %170, %171 in 0 : vector<1x36xf32>, vector<1x36xf32> -> vector<2x36xf32>
    %173 = arith.truncf %172 : vector<2x36xf32> to vector<2x36xbf16>
    %c0_96 = arith.constant 0 : index
    %c0_97 = arith.constant 0 : index
    %c0_98 = arith.constant 0 : index
    %174 = vector.load %arg9[%c0_96, %c0_97, %c0_98] : memref<10x36x324xbf16, #tpu.memory_space<vmem>>, vector<1x36x324xbf16>
    %175 = vector.shape_cast %174 : vector<1x36x324xbf16> to vector<36x324xbf16>
    %cst_99 = arith.constant dense<0.000000e+00> : vector<2x324xf32>
    %176 = tpu.matmul %173, %175, %cst_99 {dimension_numbers = #tpu.dot_dimension_numbers<[1], [0], [0], [1], [0, 0, 1, 1], [], []>} : vector<2x36xbf16>, vector<36x324xbf16>, vector<2x324xf32> -> vector<2x324xf32>
    %177 = arith.addf %169, %176 : vector<2x324xf32>
    %178 = vector.extract_strided_slice %158 {offsets = [1, 0], sizes = [1, 36], strides = [1, 1]} : vector<10x36xf32> to vector<1x36xf32>
    %179 = vector.extract_strided_slice %166 {offsets = [1, 0], sizes = [1, 36], strides = [1, 1]} : vector<10x36xf32> to vector<1x36xf32>
    %180 = tpu.concatenate %178, %179 in 0 : vector<1x36xf32>, vector<1x36xf32> -> vector<2x36xf32>
    %181 = arith.truncf %180 : vector<2x36xf32> to vector<2x36xbf16>
    %c1_100 = arith.constant 1 : index
    %c0_101 = arith.constant 0 : index
    %c0_102 = arith.constant 0 : index
    %182 = vector.load %arg9[%c1_100, %c0_101, %c0_102] : memref<10x36x324xbf16, #tpu.memory_space<vmem>>, vector<1x36x324xbf16>
    %183 = vector.shape_cast %182 : vector<1x36x324xbf16> to vector<36x324xbf16>
    %cst_103 = arith.constant dense<0.000000e+00> : vector<2x324xf32>
    %184 = tpu.matmul %181, %183, %cst_103 {dimension_numbers = #tpu.dot_dimension_numbers<[1], [0], [0], [1], [0, 0, 1, 1], [], []>} : vector<2x36xbf16>, vector<36x324xbf16>, vector<2x324xf32> -> vector<2x324xf32>
    %185 = arith.addf %177, %184 : vector<2x324xf32>
    %186 = vector.extract_strided_slice %158 {offsets = [2, 0], sizes = [1, 36], strides = [1, 1]} : vector<10x36xf32> to vector<1x36xf32>
    %187 = vector.extract_strided_slice %166 {offsets = [2, 0], sizes = [1, 36], strides = [1, 1]} : vector<10x36xf32> to vector<1x36xf32>
    %188 = tpu.concatenate %186, %187 in 0 : vector<1x36xf32>, vector<1x36xf32> -> vector<2x36xf32>
    %189 = arith.truncf %188 : vector<2x36xf32> to vector<2x36xbf16>
    %c2_104 = arith.constant 2 : index
    %c0_105 = arith.constant 0 : index
    %c0_106 = arith.constant 0 : index
    %190 = vector.load %arg9[%c2_104, %c0_105, %c0_106] : memref<10x36x324xbf16, #tpu.memory_space<vmem>>, vector<1x36x324xbf16>
    %191 = vector.shape_cast %190 : vector<1x36x324xbf16> to vector<36x324xbf16>
    %cst_107 = arith.constant dense<0.000000e+00> : vector<2x324xf32>
    %192 = tpu.matmul %189, %191, %cst_107 {dimension_numbers = #tpu.dot_dimension_numbers<[1], [0], [0], [1], [0, 0, 1, 1], [], []>} : vector<2x36xbf16>, vector<36x324xbf16>, vector<2x324xf32> -> vector<2x324xf32>
    %193 = arith.addf %185, %192 : vector<2x324xf32>
    %194 = vector.extract_strided_slice %158 {offsets = [3, 0], sizes = [1, 36], strides = [1, 1]} : vector<10x36xf32> to vector<1x36xf32>
    %195 = vector.extract_strided_slice %166 {offsets = [3, 0], sizes = [1, 36], strides = [1, 1]} : vector<10x36xf32> to vector<1x36xf32>
    %196 = tpu.concatenate %194, %195 in 0 : vector<1x36xf32>, vector<1x36xf32> -> vector<2x36xf32>
    %197 = arith.truncf %196 : vector<2x36xf32> to vector<2x36xbf16>
    %c3_108 = arith.constant 3 : index
    %c0_109 = arith.constant 0 : index
    %c0_110 = arith.constant 0 : index
    %198 = vector.load %arg9[%c3_108, %c0_109, %c0_110] : memref<10x36x324xbf16, #tpu.memory_space<vmem>>, vector<1x36x324xbf16>
    %199 = vector.shape_cast %198 : vector<1x36x324xbf16> to vector<36x324xbf16>
    %cst_111 = arith.constant dense<0.000000e+00> : vector<2x324xf32>
    %200 = tpu.matmul %197, %199, %cst_111 {dimension_numbers = #tpu.dot_dimension_numbers<[1], [0], [0], [1], [0, 0, 1, 1], [], []>} : vector<2x36xbf16>, vector<36x324xbf16>, vector<2x324xf32> -> vector<2x324xf32>
    %201 = arith.addf %193, %200 : vector<2x324xf32>
    %202 = vector.extract_strided_slice %158 {offsets = [4, 0], sizes = [1, 36], strides = [1, 1]} : vector<10x36xf32> to vector<1x36xf32>
    %203 = vector.extract_strided_slice %166 {offsets = [4, 0], sizes = [1, 36], strides = [1, 1]} : vector<10x36xf32> to vector<1x36xf32>
    %204 = tpu.concatenate %202, %203 in 0 : vector<1x36xf32>, vector<1x36xf32> -> vector<2x36xf32>
    %205 = arith.truncf %204 : vector<2x36xf32> to vector<2x36xbf16>
    %c4_112 = arith.constant 4 : index
    %c0_113 = arith.constant 0 : index
    %c0_114 = arith.constant 0 : index
    %206 = vector.load %arg9[%c4_112, %c0_113, %c0_114] : memref<10x36x324xbf16, #tpu.memory_space<vmem>>, vector<1x36x324xbf16>
    %207 = vector.shape_cast %206 : vector<1x36x324xbf16> to vector<36x324xbf16>
    %cst_115 = arith.constant dense<0.000000e+00> : vector<2x324xf32>
    %208 = tpu.matmul %205, %207, %cst_115 {dimension_numbers = #tpu.dot_dimension_numbers<[1], [0], [0], [1], [0, 0, 1, 1], [], []>} : vector<2x36xbf16>, vector<36x324xbf16>, vector<2x324xf32> -> vector<2x324xf32>
    %209 = arith.addf %201, %208 : vector<2x324xf32>
    %210 = vector.extract_strided_slice %158 {offsets = [5, 0], sizes = [1, 36], strides = [1, 1]} : vector<10x36xf32> to vector<1x36xf32>
    %211 = vector.extract_strided_slice %166 {offsets = [5, 0], sizes = [1, 36], strides = [1, 1]} : vector<10x36xf32> to vector<1x36xf32>
    %212 = tpu.concatenate %210, %211 in 0 : vector<1x36xf32>, vector<1x36xf32> -> vector<2x36xf32>
    %213 = arith.truncf %212 : vector<2x36xf32> to vector<2x36xbf16>
    %c5_116 = arith.constant 5 : index
    %c0_117 = arith.constant 0 : index
    %c0_118 = arith.constant 0 : index
    %214 = vector.load %arg9[%c5_116, %c0_117, %c0_118] : memref<10x36x324xbf16, #tpu.memory_space<vmem>>, vector<1x36x324xbf16>
    %215 = vector.shape_cast %214 : vector<1x36x324xbf16> to vector<36x324xbf16>
    %cst_119 = arith.constant dense<0.000000e+00> : vector<2x324xf32>
    %216 = tpu.matmul %213, %215, %cst_119 {dimension_numbers = #tpu.dot_dimension_numbers<[1], [0], [0], [1], [0, 0, 1, 1], [], []>} : vector<2x36xbf16>, vector<36x324xbf16>, vector<2x324xf32> -> vector<2x324xf32>
    %217 = arith.addf %209, %216 : vector<2x324xf32>
    %218 = vector.extract_strided_slice %158 {offsets = [6, 0], sizes = [1, 36], strides = [1, 1]} : vector<10x36xf32> to vector<1x36xf32>
    %219 = vector.extract_strided_slice %166 {offsets = [6, 0], sizes = [1, 36], strides = [1, 1]} : vector<10x36xf32> to vector<1x36xf32>
    %220 = tpu.concatenate %218, %219 in 0 : vector<1x36xf32>, vector<1x36xf32> -> vector<2x36xf32>
    %221 = arith.truncf %220 : vector<2x36xf32> to vector<2x36xbf16>
    %c6_120 = arith.constant 6 : index
    %c0_121 = arith.constant 0 : index
    %c0_122 = arith.constant 0 : index
    %222 = vector.load %arg9[%c6_120, %c0_121, %c0_122] : memref<10x36x324xbf16, #tpu.memory_space<vmem>>, vector<1x36x324xbf16>
    %223 = vector.shape_cast %222 : vector<1x36x324xbf16> to vector<36x324xbf16>
    %cst_123 = arith.constant dense<0.000000e+00> : vector<2x324xf32>
    %224 = tpu.matmul %221, %223, %cst_123 {dimension_numbers = #tpu.dot_dimension_numbers<[1], [0], [0], [1], [0, 0, 1, 1], [], []>} : vector<2x36xbf16>, vector<36x324xbf16>, vector<2x324xf32> -> vector<2x324xf32>
    %225 = arith.addf %217, %224 : vector<2x324xf32>
    %226 = vector.extract_strided_slice %158 {offsets = [7, 0], sizes = [1, 36], strides = [1, 1]} : vector<10x36xf32> to vector<1x36xf32>
    %227 = vector.extract_strided_slice %166 {offsets = [7, 0], sizes = [1, 36], strides = [1, 1]} : vector<10x36xf32> to vector<1x36xf32>
    %228 = tpu.concatenate %226, %227 in 0 : vector<1x36xf32>, vector<1x36xf32> -> vector<2x36xf32>
    %229 = arith.truncf %228 : vector<2x36xf32> to vector<2x36xbf16>
    %c7_124 = arith.constant 7 : index
    %c0_125 = arith.constant 0 : index
    %c0_126 = arith.constant 0 : index
    %230 = vector.load %arg9[%c7_124, %c0_125, %c0_126] : memref<10x36x324xbf16, #tpu.memory_space<vmem>>, vector<1x36x324xbf16>
    %231 = vector.shape_cast %230 : vector<1x36x324xbf16> to vector<36x324xbf16>
    %cst_127 = arith.constant dense<0.000000e+00> : vector<2x324xf32>
    %232 = tpu.matmul %229, %231, %cst_127 {dimension_numbers = #tpu.dot_dimension_numbers<[1], [0], [0], [1], [0, 0, 1, 1], [], []>} : vector<2x36xbf16>, vector<36x324xbf16>, vector<2x324xf32> -> vector<2x324xf32>
    %233 = arith.addf %225, %232 : vector<2x324xf32>
    %234 = vector.extract_strided_slice %158 {offsets = [8, 0], sizes = [1, 36], strides = [1, 1]} : vector<10x36xf32> to vector<1x36xf32>
    %235 = vector.extract_strided_slice %166 {offsets = [8, 0], sizes = [1, 36], strides = [1, 1]} : vector<10x36xf32> to vector<1x36xf32>
    %236 = tpu.concatenate %234, %235 in 0 : vector<1x36xf32>, vector<1x36xf32> -> vector<2x36xf32>
    %237 = arith.truncf %236 : vector<2x36xf32> to vector<2x36xbf16>
    %c8_128 = arith.constant 8 : index
    %c0_129 = arith.constant 0 : index
    %c0_130 = arith.constant 0 : index
    %238 = vector.load %arg9[%c8_128, %c0_129, %c0_130] : memref<10x36x324xbf16, #tpu.memory_space<vmem>>, vector<1x36x324xbf16>
    %239 = vector.shape_cast %238 : vector<1x36x324xbf16> to vector<36x324xbf16>
    %cst_131 = arith.constant dense<0.000000e+00> : vector<2x324xf32>
    %240 = tpu.matmul %237, %239, %cst_131 {dimension_numbers = #tpu.dot_dimension_numbers<[1], [0], [0], [1], [0, 0, 1, 1], [], []>} : vector<2x36xbf16>, vector<36x324xbf16>, vector<2x324xf32> -> vector<2x324xf32>
    %241 = arith.addf %233, %240 : vector<2x324xf32>
    %242 = vector.extract_strided_slice %158 {offsets = [9, 0], sizes = [1, 36], strides = [1, 1]} : vector<10x36xf32> to vector<1x36xf32>
    %243 = vector.extract_strided_slice %166 {offsets = [9, 0], sizes = [1, 36], strides = [1, 1]} : vector<10x36xf32> to vector<1x36xf32>
    %244 = tpu.concatenate %242, %243 in 0 : vector<1x36xf32>, vector<1x36xf32> -> vector<2x36xf32>
    %245 = arith.truncf %244 : vector<2x36xf32> to vector<2x36xbf16>
    %c9 = arith.constant 9 : index
    %c0_132 = arith.constant 0 : index
    %c0_133 = arith.constant 0 : index
    %246 = vector.load %arg9[%c9, %c0_132, %c0_133] : memref<10x36x324xbf16, #tpu.memory_space<vmem>>, vector<1x36x324xbf16>
    %247 = vector.shape_cast %246 : vector<1x36x324xbf16> to vector<36x324xbf16>
    %cst_134 = arith.constant dense<0.000000e+00> : vector<2x324xf32>
    %248 = tpu.matmul %245, %247, %cst_134 {dimension_numbers = #tpu.dot_dimension_numbers<[1], [0], [0], [1], [0, 0, 1, 1], [], []>} : vector<2x36xbf16>, vector<36x324xbf16>, vector<2x324xf32> -> vector<2x324xf32>
    %249 = arith.addf %241, %248 : vector<2x324xf32>
    %250 = vector.broadcast %8 : vector<1x1xf32> to vector<2x324xf32>
    %251 = arith.addf %249, %250 : vector<2x324xf32>
    %252 = math.tanh %251 : vector<2x324xf32>
    %c0_135 = arith.constant 0 : index
    %c0_136 = arith.constant 0 : index
    %253 = vector.load %arg7[%c0_135, %c0_136] : memref<2x324xf32, #tpu.memory_space<vmem>>, vector<2x324xf32>
    tpu.vector_store %arg7[%c0_135, %c0_136], %252 {strides = array<i32>} : memref<2x324xf32, #tpu.memory_space<vmem>>, vector<2x324xf32>,
    return
  }
  func.func @transform_0(%arg0: i32) -> (i32, i32, i32) {
    %c0_i32 = arith.constant 0 : i32
    %c0_i32_0 = arith.constant 0 : i32
    %c0_i32_1 = arith.constant 0 : i32
    %c0_i32_2 = arith.constant 0 : i32
    return %c0_i32, %c0_i32_0, %c0_i32_1 : i32, i32, i32
  }
  func.func @transform_1(%arg0: i32) -> (i32, i32) {
    %c0_i32 = arith.constant 0 : i32
    %c0_i32_0 = arith.constant 0 : i32
    %c0_i32_1 = arith.constant 0 : i32
    return %c0_i32, %c0_i32_0 : i32, i32
  }
  func.func @transform_2(%arg0: i32) -> (i32, i32, i32) {
    %c0_i32 = arith.constant 0 : i32
    %c0_i32_0 = arith.constant 0 : i32
    %c0_i32_1 = arith.constant 0 : i32
    %c0_i32_2 = arith.constant 0 : i32
    return %c0_i32, %c0_i32_0, %c0_i32_1 : i32, i32, i32
  }
  func.func @transform_3(%arg0: i32) -> (i32, i32) {
    %c0_i32 = arith.constant 0 : i32
    %c0_i32_0 = arith.constant 0 : i32
    %c0_i32_1 = arith.constant 0 : i32
    return %c0_i32, %c0_i32_0 : i32, i32
  }
  func.func @transform_6(%arg0: i32) -> (i32, i32) {
    %c0_i32 = arith.constant 0 : i32
    %c0_i32_0 = arith.constant 0 : i32
    %c0_i32_1 = arith.constant 0 : i32
    return %c0_i32, %c0_i32_0 : i32, i32
  }
}

</mosaic_0001>

<llo_original>
// kernel: forecast_net_forward.1
$region0: #{forecast_net_forward.1}
  #allocation0 [shape = 'u32[]', space=smem, size = 0x4, offset = 0x4, fixed_abs, tag = 'smem constant byte address 0x4 - core index']
  #allocation1 [shape = 'u32[72,128]{1,0:T(1,128)}', space=vmem, size = 0x9000, scoped, tag = 'internal scratch']
  #allocation2 [shape = 'bf16[256,324]{1,0:T(8,128)(2,1)}', space=vmem, size = 0x30000, scoped, tag = 'scratch operand']
  #allocation3 [shape = 'bf16[10,36,324]{2,1,0:T(8,128)(2,1)}', space=vmem, size = 0x4b000, scoped, tag = 'scratch operand']
  #allocation4 [shape = 's32[2]{0}', space=sflag, size = 0x8, scoped, tag = 'scratch operand']
  #allocation5 [shape = 's32[]', space=sflag, size = 0x4, offset = 0, fixed_abs, tag = 'sflag constant byte address 0x0 - dummy sync flag']
  #allocation6 [shape = 's32[]', space=sflag, size = 0x4, offset = 0, fixed_abs, tag = 'sflag constant byte address 0x0 - dummy sync flag']
  %s0 = inlined_call_operand.vmem [shape: f32[2,27,256], index: 0, kind: input, shape index: {}]
  %s1 = inlined_call_operand.vmem [shape: f32[10,27], index: 1, kind: input, shape index: {}]
  %s2 = inlined_call_operand.vmem [shape: f32[9,10,10], index: 2, kind: input, shape index: {}]
  %s3 = inlined_call_operand.vmem [shape: f32[10,8], index: 3, kind: input, shape index: {}]
  %s4 = inlined_call_operand.vmem [shape: bf16[256,324], index: 4, kind: input, shape index: {}]
  %s5 = inlined_call_operand.vmem [shape: bf16[10,36,324], index: 5, kind: input, shape index: {}]
  %s6 = inlined_call_operand.vmem [shape: f32[2,324], index: 6, kind: output, shape index: {}]
  %s7 = sld [smem:[#allocation0]]
  $region64: #{forecast_net_forward.1} parent=0
    _
  %s9 = ssub.s32 1, %s7
  %s10 = scalar_select 0, %s9, %s7
  // Predicated region
  $region2: #{forecast_net_forward.1} parent=0 // pred_check
    _
  $region3: #{forecast_net_forward.1} parent=0 // pred_check_branch
    %12 = sbr.rel (0) target = $region5
  $region4: #{forecast_net_forward.1} parent=0 // pred_region
    _
  $region5: #{forecast_net_forward.1} parent=0 // pred_fallthru
    _
  // Predicated region
  $region6: #{forecast_net_forward.1} parent=0 // pred_check
    _
  $region7: #{forecast_net_forward.1} parent=0 // pred_check_branch
    %14 = sbr.rel (0) target = $region9
  $region8: #{forecast_net_forward.1} parent=0 // pred_region
    _
  $region9: #{forecast_net_forward.1} parent=0 // pred_fallthru
    _
  // Predicated region
  $region10: #{forecast_net_forward.1} parent=0 // pred_check
    _
  $region11: #{forecast_net_forward.1} parent=0 // pred_check_branch
    %16 = sbr.rel (0) target = $region13
  $region12: #{forecast_net_forward.1} parent=0 // pred_region
    _
  $region13: #{forecast_net_forward.1} parent=0 // pred_fallthru
    _
  // Predicated region
  $region14: #{forecast_net_forward.1} parent=0 // pred_check
    _
  $region15: #{forecast_net_forward.1} parent=0 // pred_check_branch
    %18 = sbr.rel (0) target = $region17
  $region16: #{forecast_net_forward.1} parent=0 // pred_region
    _
  $region17: #{forecast_net_forward.1} parent=0 // pred_fallthru
    _
  // Predicated region
  $region18: #{forecast_net_forward.1} parent=0 // pred_check
    _
  $region19: #{forecast_net_forward.1} parent=0 // pred_check_branch
    %21 = sbr.rel (0) target = $region21
  $region20: #{forecast_net_forward.1} parent=0 // pred_region
    loop: start=0, step=1, limit=1
    $region22: #{forecast_net_forward.1} parent=20 // loop_pre_header
      _
    $region23: #{forecast_net_forward.1} parent=20 // loop_header
      %s23 = sphi 0, %s27
      %p24 = scmp.ge.s32.totalorder %s23, 1
      %s28 = sphi %s4, %s4
      %s29 = sphi [#allocation2], [#allocation2]
    $region24: #{forecast_net_forward.1} parent=20 // loop_header_branch
      %26 = sbr.rel (%p24) target = $region28
    $region25: #{forecast_net_forward.1} parent=20 // loop_body
      %v30 = vld [vmem:[%s28] sm:$0xff]
      %31 = vst [vmem:[%s29] sm:$0xff] %v30
      %v32 = vld [vmem:[%s28 + $0x8] sm:$0xff]
      %33 = vst [vmem:[%s29 + $0x8] sm:$0xff] %v32
      %v34 = vld [vmem:[%s28 + $0x10] sm:$0xff]
      %35 = vst [vmem:[%s29 + $0x10] sm:$0xff] %v34
      %v36 = vld [vmem:[%s28 + $0x18] sm:$0xff]
      %37 = vst [vmem:[%s29 + $0x18] sm:$0xff] %v36
      %v38 = vld [vmem:[%s28 + $0x20] sm:$0xff]
      %39 = vst [vmem:[%s29 + $0x20] sm:$0xff] %v38
      %v40 = vld [vmem:[%s28 + $0x28] sm:$0xff]
      %41 = vst [vmem:[%s29 + $0x28] sm:$0xff] %v40
      %v42 = vld [vmem:[%s28 + $0x30] sm:$0xff]
      %43 = vst [vmem:[%s29 + $0x30] sm:$0xff] %v42
      %v44 = vld [vmem:[%s28 + $0x38] sm:$0xff]
      %45 = vst [vmem:[%s29 + $0x38] sm:$0xff] %v44
      %v46 = vld [vmem:[%s28 + $0x40] sm:$0xff]
      %47 = vst [vmem:[%s29 + $0x40] sm:$0xff] %v46
      %v48 = vld [vmem:[%s28 + $0x48] sm:$0xff]
      %49 = vst [vmem:[%s29 + $0x48] sm:$0xff] %v48
      %v50 = vld [vmem:[%s28 + $0x50] sm:$0xff]
      %51 = vst [vmem:[%s29 + $0x50] sm:$0xff] %v50
      %v52 = vld [vmem:[%s28 + $0x58] sm:$0xff]
      %53 = vst [vmem:[%s29 + $0x58] sm:$0xff] %v52
      %v54 = vld [vmem:[%s28 + $0x60] sm:$0xff]
      %55 = vst [vmem:[%s29 + $0x60] sm:$0xff] %v54
      %v56 = vld [vmem:[%s28 + $0x68] sm:$0xff]
      %57 = vst [vmem:[%s29 + $0x68] sm:$0xff] %v56
      %v58 = vld [vmem:[%s28 + $0x70] sm:$0xff]
      %59 = vst [vmem:[%s29 + $0x70] sm:$0xff] %v58
      %v60 = vld [vmem:[%s28 + $0x78] sm:$0xff]
      %61 = vst [vmem:[%s29 + $0x78] sm:$0xff] %v60
      %v62 = vld [vmem:[%s28 + $0x80] sm:$0xff]
      %63 = vst [vmem:[%s29 + $0x80] sm:$0xff] %v62
      %v64 = vld [vmem:[%s28 + $0x88] sm:$0xff]
      %65 = vst [vmem:[%s29 + $0x88] sm:$0xff] %v64
      %v66 = vld [vmem:[%s28 + $0x90] sm:$0xff]
      %67 = vst [vmem:[%s29 + $0x90] sm:$0xff] %v66
      %v68 = vld [vmem:[%s28 + $0x98] sm:$0xff]
      %69 = vst [vmem:[%s29 + $0x98] sm:$0xff] %v68
      %v70 = vld [vmem:[%s28 + $0xa0] sm:$0xff]
      %71 = vst [vmem:[%s29 + $0xa0] sm:$0xff] %v70
      %v72 = vld [vmem:[%s28 + $0xa8] sm:$0xff]
      %73 = vst [vmem:[%s29 + $0xa8] sm:$0xff] %v72
      %v74 = vld [vmem:[%s28 + $0xb0] sm:$0xff]
      %75 = vst [vmem:[%s29 + $0xb0] sm:$0xff] %v74
      %v76 = vld [vmem:[%s28 + $0xb8] sm:$0xff]
      %77 = vst [vmem:[%s29 + $0xb8] sm:$0xff] %v76
      %v78 = vld [vmem:[%s28 + $0xc0] sm:$0xff]
      %79 = vst [vmem:[%s29 + $0xc0] sm:$0xff] %v78
      %v80 = vld [vmem:[%s28 + $0xc8] sm:$0xff]
      %81 = vst [vmem:[%s29 + $0xc8] sm:$0xff] %v80
      %v82 = vld [vmem:[%s28 + $0xd0] sm:$0xff]
      %83 = vst [vmem:[%s29 + $0xd0] sm:$0xff] %v82
      %v84 = vld [vmem:[%s28 + $0xd8] sm:$0xff]
      %85 = vst [vmem:[%s29 + $0xd8] sm:$0xff] %v84
      %v86 = vld [vmem:[%s28 + $0xe0] sm:$0xff]
      %87 = vst [vmem:[%s29 + $0xe0] sm:$0xff] %v86
      %v88 = vld [vmem:[%s28 + $0xe8] sm:$0xff]
      %89 = vst [vmem:[%s29 + $0xe8] sm:$0xff] %v88
      %v90 = vld [vmem:[%s28 + $0xf0] sm:$0xff]
      %91 = vst [vmem:[%s29 + $0xf0] sm:$0xff] %v90
      %v92 = vld [vmem:[%s28 + $0xf8] sm:$0xff]
      %93 = vst [vmem:[%s29 + $0xf8] sm:$0xff] %v92
      %v94 = vld [vmem:[%s28 + $0x100] sm:$0xff]
      %95 = vst [vmem:[%s29 + $0x100] sm:$0xff] %v94
      %v96 = vld [vmem:[%s28 + $0x108] sm:$0xff]
      %97 = vst [vmem:[%s29 + $0x108] sm:$0xff] %v96
      %v98 = vld [vmem:[%s28 + $0x110] sm:$0xff]
      %99 = vst [vmem:[%s29 + $0x110] sm:$0xff] %v98
      %v100 = vld [vmem:[%s28 + $0x118] sm:$0xff]
      %101 = vst [vmem:[%s29 + $0x118] sm:$0xff] %v100
      %v102 = vld [vmem:[%s28 + $0x120] sm:$0xff]
      %103 = vst [vmem:[%s29 + $0x120] sm:$0xff] %v102
      %v104 = vld [vmem:[%s28 + $0x128] sm:$0xff]
      %105 = vst [vmem:[%s29 + $0x128] sm:$0xff] %v104
      %v106 = vld [vmem:[%s28 + $0x130] sm:$0xff]
      %107 = vst [vmem:[%s29 + $0x130] sm:$0xff] %v106
      %v108 = vld [vmem:[%s28 + $0x138] sm:$0xff]
      %109 = vst [vmem:[%s29 + $0x138] sm:$0xff] %v108
      %v110 = vld [vmem:[%s28 + $0x140] sm:$0xff]
      %111 = vst [vmem:[%s29 + $0x140] sm:$0xff] %v110
      %v112 = vld [vmem:[%s28 + $0x148] sm:$0xff]
      %113 = vst [vmem:[%s29 + $0x148] sm:$0xff] %v112
      %v114 = vld [vmem:[%s28 + $0x150] sm:$0xff]
      %115 = vst [vmem:[%s29 + $0x150] sm:$0xff] %v114
      %v116 = vld [vmem:[%s28 + $0x158] sm:$0xff]
      %117 = vst [vmem:[%s29 + $0x158] sm:$0xff] %v116
      %v118 = vld [vmem:[%s28 + $0x160] sm:$0xff]
      %119 = vst [vmem:[%s29 + $0x160] sm:$0xff] %v118
      %v120 = vld [vmem:[%s28 + $0x168] sm:$0xff]
      %121 = vst [vmem:[%s29 + $0x168] sm:$0xff] %v120
      %v122 = vld [vmem:[%s28 + $0x170] sm:$0xff]
      %123 = vst [vmem:[%s29 + $0x170] sm:$0xff] %v122
      %v124 = vld [vmem:[%s28 + $0x178] sm:$0xff]
      %125 = vst [vmem:[%s29 + $0x178] sm:$0xff] %v124
    $region26: #{forecast_net_forward.1} parent=20 // loop_footer
      %s27 = sadd.s32 1, %s23
    $region27: #{forecast_net_forward.1} parent=20 // loop_footer_branch
      %22 = sbr.rel target = $region23
    $region28: #{forecast_net_forward.1} parent=20 // loop_exit
      _
  $region21: #{forecast_net_forward.1} parent=0 // pred_fallthru
    _
  // Predicated region
  $region29: #{forecast_net_forward.1} parent=0 // pred_check
    _
  $region30: #{forecast_net_forward.1} parent=0 // pred_check_branch
    %127 = sbr.rel target = $region32
  $region31: #{forecast_net_forward.1} parent=0 // pred_region
    _
  $region32: #{forecast_net_forward.1} parent=0 // pred_fallthru
    _
  // Predicated region
  $region33: #{forecast_net_forward.1} parent=0 // pred_check
    _
  $region34: #{forecast_net_forward.1} parent=0 // pred_check_branch
    %130 = sbr.rel (0) target = $region36
  $region35: #{forecast_net_forward.1} parent=0 // pred_region
    %131 = vsyncadd [#allocation4], 6144
  $region36: #{forecast_net_forward.1} parent=0 // pred_fallthru
    _
  %s132 = scalar_lea.sflag [#allocation4], 1
  // Predicated region
  $region37: #{forecast_net_forward.1} parent=0 // pred_check
    _
  $region38: #{forecast_net_forward.1} parent=0 // pred_check_branch
    %134 = sbr.rel (0) target = $region40
  $region39: #{forecast_net_forward.1} parent=0 // pred_region
    loop: start=0, step=1, limit=1
    $region41: #{forecast_net_forward.1} parent=39 // loop_pre_header
      _
    $region42: #{forecast_net_forward.1} parent=39 // loop_header
      %s136 = sphi 0, %s140
      %p137 = scmp.ge.s32.totalorder %s136, 1
      %s141 = sphi %s5, %s5
      %s142 = sphi [#allocation3], [#allocation3]
    $region43: #{forecast_net_forward.1} parent=39 // loop_header_branch
      %139 = sbr.rel (%p137) target = $region47
    $region44: #{forecast_net_forward.1} parent=39 // loop_body
      %v143 = vld [vmem:[%s141] sm:$0xff]
      %144 = vst [vmem:[%s142] sm:$0xff] %v143
      %v145 = vld [vmem:[%s141 + $0x8] sm:$0xff]
      %146 = vst [vmem:[%s142 + $0x8] sm:$0xff] %v145
      %v147 = vld [vmem:[%s141 + $0x10] sm:$0xff]
      %148 = vst [vmem:[%s142 + $0x10] sm:$0xff] %v147
      %v149 = vld [vmem:[%s141 + $0x18] sm:$0xff]
      %150 = vst [vmem:[%s142 + $0x18] sm:$0xff] %v149
      %v151 = vld [vmem:[%s141 + $0x20] sm:$0xff]
      %152 = vst [vmem:[%s142 + $0x20] sm:$0xff] %v151
      %v153 = vld [vmem:[%s141 + $0x28] sm:$0xff]
      %154 = vst [vmem:[%s142 + $0x28] sm:$0xff] %v153
      %v155 = vld [vmem:[%s141 + $0x30] sm:$0xff]
      %156 = vst [vmem:[%s142 + $0x30] sm:$0xff] %v155
      %v157 = vld [vmem:[%s141 + $0x38] sm:$0xff]
      %158 = vst [vmem:[%s142 + $0x38] sm:$0xff] %v157
      %v159 = vld [vmem:[%s141 + $0x40] sm:$0xff]
      %160 = vst [vmem:[%s142 + $0x40] sm:$0xff] %v159
      %v161 = vld [vmem:[%s141 + $0x48] sm:$0xff]
      %162 = vst [vmem:[%s142 + $0x48] sm:$0xff] %v161
      %v163 = vld [vmem:[%s141 + $0x50] sm:$0xff]
      %164 = vst [vmem:[%s142 + $0x50] sm:$0xff] %v163
      %v165 = vld [vmem:[%s141 + $0x58] sm:$0xff]
      %166 = vst [vmem:[%s142 + $0x58] sm:$0xff] %v165
      %v167 = vld [vmem:[%s141 + $0x60] sm:$0xff]
      %168 = vst [vmem:[%s142 + $0x60] sm:$0xff] %v167
      %v169 = vld [vmem:[%s141 + $0x68] sm:$0xff]
      %170 = vst [vmem:[%s142 + $0x68] sm:$0xff] %v169
      %v171 = vld [vmem:[%s141 + $0x70] sm:$0xff]
      %172 = vst [vmem:[%s142 + $0x70] sm:$0xff] %v171
      %v173 = vld [vmem:[%s141 + $0x78] sm:$0xff]
      %174 = vst [vmem:[%s142 + $0x78] sm:$0xff] %v173
      %v175 = vld [vmem:[%s141 + $0x80] sm:$0xff]
      %176 = vst [vmem:[%s142 + $0x80] sm:$0xff] %v175
      %v177 = vld [vmem:[%s141 + $0x88] sm:$0xff]
      %178 = vst [vmem:[%s142 + $0x88] sm:$0xff] %v177
      %v179 = vld [vmem:[%s141 + $0x90] sm:$0xff]
      %180 = vst [vmem:[%s142 + $0x90] sm:$0xff] %v179
      %v181 = vld [vmem:[%s141 + $0x98] sm:$0xff]
      %182 = vst [vmem:[%s142 + $0x98] sm:$0xff] %v181
      %v183 = vld [vmem:[%s141 + $0xa0] sm:$0xff]
      %184 = vst [vmem:[%s142 + $0xa0] sm:$0xff] %v183
      %v185 = vld [vmem:[%s141 + $0xa8] sm:$0xff]
      %186 = vst [vmem:[%s142 + $0xa8] sm:$0xff] %v185
      %v187 = vld [vmem:[%s141 + $0xb0] sm:$0xff]
      %188 = vst [vmem:[%s142 + $0xb0] sm:$0xff] %v187
      %v189 = vld [vmem:[%s141 + $0xb8] sm:$0xff]
      %190 = vst [vmem:[%s142 + $0xb8] sm:$0xff] %v189
      %v191 = vld [vmem:[%s141 + $0xc0] sm:$0xff]
      %192 = vst [vmem:[%s142 + $0xc0] sm:$0xff] %v191
      %v193 = vld [vmem:[%s141 + $0xc8] sm:$0xff]
      %194 = vst [vmem:[%s142 + $0xc8] sm:$0xff] %v193
      %v195 = vld [vmem:[%s141 + $0xd0] sm:$0xff]
      %196 = vst [vmem:[%s142 + $0xd0] sm:$0xff] %v195
      %v197 = vld [vmem:[%s141 + $0xd8] sm:$0xff]
      %198 = vst [vmem:[%s142 + $0xd8] sm:$0xff] %v197
      %v199 = vld [vmem:[%s141 + $0xe0] sm:$0xff]
      %200 = vst [vmem:[%s142 + $0xe0] sm:$0xff] %v199
      %v201 = vld [vmem:[%s141 + $0xe8] sm:$0xff]
      %202 = vst [vmem:[%s142 + $0xe8] sm:$0xff] %v201
      %v203 = vld [vmem:[%s141 + $0xf0] sm:$0xff]
      %204 = vst [vmem:[%s142 + $0xf0] sm:$0xff] %v203
      %v205 = vld [vmem:[%s141 + $0xf8] sm:$0xff]
      %206 = vst [vmem:[%s142 + $0xf8] sm:$0xff] %v205
      %v207 = vld [vmem:[%s141 + $0x100] sm:$0xff]
      %208 = vst [vmem:[%s142 + $0x100] sm:$0xff] %v207
      %v209 = vld [vmem:[%s141 + $0x108] sm:$0xff]
      %210 = vst [vmem:[%s142 + $0x108] sm:$0xff] %v209
      %v211 = vld [vmem:[%s141 + $0x110] sm:$0xff]
      %212 = vst [vmem:[%s142 + $0x110] sm:$0xff] %v211
      %v213 = vld [vmem:[%s141 + $0x118] sm:$0xff]
      %214 = vst [vmem:[%s142 + $0x118] sm:$0xff] %v213
      %v215 = vld [vmem:[%s141 + $0x120] sm:$0xff]
      %216 = vst [vmem:[%s142 + $0x120] sm:$0xff] %v215
      %v217 = vld [vmem:[%s141 + $0x128] sm:$0xff]
      %218 = vst [vmem:[%s142 + $0x128] sm:$0xff] %v217
      %v219 = vld [vmem:[%s141 + $0x130] sm:$0xff]
      %220 = vst [vmem:[%s142 + $0x130] sm:$0xff] %v219
      %v221 = vld [vmem:[%s141 + $0x138] sm:$0xff]
      %222 = vst [vmem:[%s142 + $0x138] sm:$0xff] %v221
      %v223 = vld [vmem:[%s141 + $0x140] sm:$0xff]
      %224 = vst [vmem:[%s142 + $0x140] sm:$0xff] %v223
      %v225 = vld [vmem:[%s141 + $0x148] sm:$0xff]
      %226 = vst [vmem:[%s142 + $0x148] sm:$0xff] %v225
      %v227 = vld [vmem:[%s141 + $0x150] sm:$0xff]
      %228 = vst [vmem:[%s142 + $0x150] sm:$0xff] %v227
      %v229 = vld [vmem:[%s141 + $0x158] sm:$0xff]
      %230 = vst [vmem:[%s142 + $0x158] sm:$0xff] %v229
      %v231 = vld [vmem:[%s141 + $0x160] sm:$0xff]
      %232 = vst [vmem:[%s142 + $0x160] sm:$0xff] %v231
      %v233 = vld [vmem:[%s141 + $0x168] sm:$0xff]
      %234 = vst [vmem:[%s142 + $0x168] sm:$0xff] %v233
      %v235 = vld [vmem:[%s141 + $0x170] sm:$0xff]
      %236 = vst [vmem:[%s142 + $0x170] sm:$0xff] %v235
      %v237 = vld [vmem:[%s141 + $0x178] sm:$0xff]
      %238 = vst [vmem:[%s142 + $0x178] sm:$0xff] %v237
      %v239 = vld [vmem:[%s141 + $0x180] sm:$0xff]
      %240 = vst [vmem:[%s142 + $0x180] sm:$0xff] %v239
      %v241 = vld [vmem:[%s141 + $0x188] sm:$0xff]
      %242 = vst [vmem:[%s142 + $0x188] sm:$0xff] %v241
      %v243 = vld [vmem:[%s141 + $0x190] sm:$0xff]
      %244 = vst [vmem:[%s142 + $0x190] sm:$0xff] %v243
      %v245 = vld [vmem:[%s141 + $0x198] sm:$0xff]
      %246 = vst [vmem:[%s142 + $0x198] sm:$0xff] %v245
      %v247 = vld [vmem:[%s141 + $0x1a0] sm:$0xff]
      %248 = vst [vmem:[%s142 + $0x1a0] sm:$0xff] %v247
      %v249 = vld [vmem:[%s141 + $0x1a8] sm:$0xff]
      %250 = vst [vmem:[%s142 + $0x1a8] sm:$0xff] %v249
      %v251 = vld [vmem:[%s141 + $0x1b0] sm:$0xff]
      %252 = vst [vmem:[%s142 + $0x1b0] sm:$0xff] %v251
      %v253 = vld [vmem:[%s141 + $0x1b8] sm:$0xff]
      %254 = vst [vmem:[%s142 + $0x1b8] sm:$0xff] %v253
      %v255 = vld [vmem:[%s141 + $0x1c0] sm:$0xff]
      %256 = vst [vmem:[%s142 + $0x1c0] sm:$0xff] %v255
      %v257 = vld [vmem:[%s141 + $0x1c8] sm:$0xff]
      %258 = vst [vmem:[%s142 + $0x1c8] sm:$0xff] %v257
      %v259 = vld [vmem:[%s141 + $0x1d0] sm:$0xff]
      %260 = vst [vmem:[%s142 + $0x1d0] sm:$0xff] %v259
      %v261 = vld [vmem:[%s141 + $0x1d8] sm:$0xff]
      %262 = vst [vmem:[%s142 + $0x1d8] sm:$0xff] %v261
      %v263 = vld [vmem:[%s141 + $0x1e0] sm:$0xff]
      %264 = vst [vmem:[%s142 + $0x1e0] sm:$0xff] %v263
      %v265 = vld [vmem:[%s141 + $0x1e8] sm:$0xff]
      %266 = vst [vmem:[%s142 + $0x1e8] sm:$0xff] %v265
      %v267 = vld [vmem:[%s141 + $0x1f0] sm:$0xff]
      %268 = vst [vmem:[%s142 + $0x1f0] sm:$0xff] %v267
      %v269 = vld [vmem:[%s141 + $0x1f8] sm:$0xff]
      %270 = vst [vmem:[%s142 + $0x1f8] sm:$0xff] %v269
      %v271 = vld [vmem:[%s141 + $0x200] sm:$0xff]
      %272 = vst [vmem:[%s142 + $0x200] sm:$0xff] %v271
      %v273 = vld [vmem:[%s141 + $0x208] sm:$0xff]
      %274 = vst [vmem:[%s142 + $0x208] sm:$0xff] %v273
      %v275 = vld [vmem:[%s141 + $0x210] sm:$0xff]
      %276 = vst [vmem:[%s142 + $0x210] sm:$0xff] %v275
      %v277 = vld [vmem:[%s141 + $0x218] sm:$0xff]
      %278 = vst [vmem:[%s142 + $0x218] sm:$0xff] %v277
      %v279 = vld [vmem:[%s141 + $0x220] sm:$0xff]
      %280 = vst [vmem:[%s142 + $0x220] sm:$0xff] %v279
      %v281 = vld [vmem:[%s141 + $0x228] sm:$0xff]
      %282 = vst [vmem:[%s142 + $0x228] sm:$0xff] %v281
      %v283 = vld [vmem:[%s141 + $0x230] sm:$0xff]
      %284 = vst [vmem:[%s142 + $0x230] sm:$0xff] %v283
      %v285 = vld [vmem:[%s141 + $0x238] sm:$0xff]
      %286 = vst [vmem:[%s142 + $0x238] sm:$0xff] %v285
      %v287 = vld [vmem:[%s141 + $0x240] sm:$0xff]
      %288 = vst [vmem:[%s142 + $0x240] sm:$0xff] %v287
      %v289 = vld [vmem:[%s141 + $0x248] sm:$0xff]
      %290 = vst [vmem:[%s142 + $0x248] sm:$0xff] %v289
      %v291 = vld [vmem:[%s141 + $0x250] sm:$0xff]
      %292 = vst [vmem:[%s142 + $0x250] sm:$0xff] %v291
    $region45: #{forecast_net_forward.1} parent=39 // loop_footer
      %s140 = sadd.s32 1, %s136
    $region46: #{forecast_net_forward.1} parent=39 // loop_footer_branch
      %135 = sbr.rel target = $region42
    $region47: #{forecast_net_forward.1} parent=39 // loop_exit
      _
  $region40: #{forecast_net_forward.1} parent=0 // pred_fallthru
    _
  // Predicated region
  $region48: #{forecast_net_forward.1} parent=0 // pred_check
    _
  $region49: #{forecast_net_forward.1} parent=0 // pred_check_branch
    %294 = sbr.rel target = $region51
  $region50: #{forecast_net_forward.1} parent=0 // pred_region
    _
  $region51: #{forecast_net_forward.1} parent=0 // pred_fallthru
    _
  // Predicated region
  $region52: #{forecast_net_forward.1} parent=0 // pred_check
    _
  $region53: #{forecast_net_forward.1} parent=0 // pred_check_branch
    %297 = sbr.rel (0) target = $region55
  $region54: #{forecast_net_forward.1} parent=0 // pred_region
    %298 = vsyncadd %s132, 9600
  $region55: #{forecast_net_forward.1} parent=0 // pred_fallthru
    _
  %v299 = vld [vmem:[%s3] sm:$0xff]
  %v300 = vld [vmem:[%s3 + $0x8] sm:$0x3]
  %v301 = vld [vmem:[%s1] sm:$0xff]
  %v302 = vld [vmem:[%s1 + $0x8] sm:$0x3]
  %v303 = vld [vmem:[%s0] sm:$0xff]
  %v304 = vld [vmem:[%s0 + $0x8] sm:$0xff]
  %v305 = vld [vmem:[%s0 + $0x10] sm:$0xff]
  %v306 = vld [vmem:[%s0 + $0x18] sm:$0xff]
  %v307 = vld [vmem:[%s0 + $0x20] sm:$0xff]
  %v308 = vld [vmem:[%s0 + $0x28] sm:$0xff]
  %v309 = vld [vmem:[%s0 + $0x30] sm:$0x7]
  %v310 = vld [vmem:[%s0 + $0x38] sm:$0x7]
  %vm311 = vcmask 220160
  %v313 = vsel %vm311, %v301, 0
  %v316 = vsel %vm311, %v302, 0
  %vm318 = vcmask 1042432
  %v320 = vsel %vm318, %v309, 0
  %v323 = vsel %vm318, %v310, 0
  %325 = vmatpush.msra.mxu0 0.0
  %326 = vmatpush.msra.mxu0 0.0
  %327 = vmatpush.msra.mxu0 0.0
  %328 = vmatpush.msra.mxu0 0.0
  %329 = vmatpush.msra.mxu0 0.0
  %330 = vmatpush.msra.mxu0 0.0
  %331 = vmatpush.msra.mxu0 0.0
  %332 = vmatpush.msra.mxu0 0.0
  %333 = vmatpush.msra.mxu0 0.0
  %334 = vmatpush.msra.mxu0 0.0
  %335 = vmatpush.msra.mxu0 0.0
  %336 = vmatpush.msra.mxu0 0.0
  %337 = vmatpush.msra.mxu0 %v320
  %338 = vmatpush.msra.mxu0 %v307
  %339 = vmatpush.msra.mxu0 %v305
  %340 = vmatpush.msra.mxu0 %v303
  %341 = vmatmul.f32.gmra.mxu0 %v313
  %v342 = vpop.f32.mrf.mxu0
  %v343 = vadd.f32 0.0, %v342
  %344 = vmatmul.f32.gmra.mxu0 %v316
  %v345 = vpop.f32.mrf.mxu0
  %v346 = vadd.f32 0.0, %v345
  %347 = vdwg.mxu0
  %348 = vmatpush.msra.mxu0 0.0
  %349 = vmatpush.msra.mxu0 0.0
  %350 = vmatpush.msra.mxu0 0.0
  %351 = vmatpush.msra.mxu0 0.0
  %352 = vmatpush.msra.mxu0 0.0
  %353 = vmatpush.msra.mxu0 0.0
  %354 = vmatpush.msra.mxu0 0.0
  %355 = vmatpush.msra.mxu0 0.0
  %356 = vmatpush.msra.mxu0 0.0
  %357 = vmatpush.msra.mxu0 0.0
  %358 = vmatpush.msra.mxu0 0.0
  %359 = vmatpush.msra.mxu0 0.0
  %360 = vmatpush.msra.mxu0 %v323
  %361 = vmatpush.msra.mxu0 %v308
  %362 = vmatpush.msra.mxu0 %v306
  %363 = vmatpush.msra.mxu0 %v304
  %364 = vmatmul.f32.gmra.mxu0 %v313
  %v365 = vpop.f32.mrf.mxu0
  %v366 = vadd.f32 0.0, %v365
  %367 = vmatmul.f32.gmra.mxu0 %v316
  %v368 = vpop.f32.mrf.mxu0
  %v369 = vadd.f32 0.0, %v368
  %370 = vdwg.mxu0
  %372 = vset.pattern.permute.xlu0 0
  %373 = vperm.xlu0 %372, %v299
  %v374 = vpop.permute.xlu0 %373
  %377 = vset.pattern.permute.xlu0 0
  %378 = vperm.xlu0 %377, %v300
  %v379 = vpop.permute.xlu0 %378
  %v381 = vsub.f32 %v374, %v343
  %v382 = vsub.f32 %v374, %v366
  %v383 = vsub.f32 %v379, %v346
  %v384 = vsub.f32 %v379, %v369
  %v385 = vmax.f32 %v381, 0.0
  %v386 = vmax.f32 %v382, 0.0
  %v387 = vmax.f32 %v383, 0.0
  %v388 = vmax.f32 %v384, 0.0
  %s389 = scalar_lea.vmem %s0, 64
  %v390 = vld [vmem:[%s389] sm:$0xff]
  %v391 = vld [vmem:[%s389 + $0x8] sm:$0xff]
  %v392 = vld [vmem:[%s389 + $0x10] sm:$0xff]
  %v393 = vld [vmem:[%s389 + $0x18] sm:$0xff]
  %v394 = vld [vmem:[%s389 + $0x20] sm:$0xff]
  %v395 = vld [vmem:[%s389 + $0x28] sm:$0xff]
  %v396 = vld [vmem:[%s389 + $0x30] sm:$0x7]
  %v397 = vld [vmem:[%s389 + $0x38] sm:$0x7]
  %v399 = vsel %vm318, %v396, 0
  %v402 = vsel %vm318, %v397, 0
  %404 = vmatpush.msra.mxu0 0.0
  %405 = vmatpush.msra.mxu0 0.0
  %406 = vmatpush.msra.mxu0 0.0
  %407 = vmatpush.msra.mxu0 0.0
  %408 = vmatpush.msra.mxu0 0.0
  %409 = vmatpush.msra.mxu0 0.0
  %410 = vmatpush.msra.mxu0 0.0
  %411 = vmatpush.msra.mxu0 0.0
  %412 = vmatpush.msra.mxu0 0.0
  %413 = vmatpush.msra.mxu0 0.0
  %414 = vmatpush.msra.mxu0 0.0
  %415 = vmatpush.msra.mxu0 0.0
  %416 = vmatpush.msra.mxu0 %v399
  %417 = vmatpush.msra.mxu0 %v394
  %418 = vmatpush.msra.mxu0 %v392
  %419 = vmatpush.msra.mxu0 %v390
  %420 = vmatmul.f32.gmra.mxu0 %v313
  %v421 = vpop.f32.mrf.mxu0
  %v422 = vadd.f32 0.0, %v421
  %423 = vmatmul.f32.gmra.mxu0 %v316
  %v424 = vpop.f32.mrf.mxu0
  %v425 = vadd.f32 0.0, %v424
  %426 = vdwg.mxu0
  %427 = vmatpush.msra.mxu0 0.0
  %428 = vmatpush.msra.mxu0 0.0
  %429 = vmatpush.msra.mxu0 0.0
  %430 = vmatpush.msra.mxu0 0.0
  %431 = vmatpush.msra.mxu0 0.0
  %432 = vmatpush.msra.mxu0 0.0
  %433 = vmatpush.msra.mxu0 0.0
  %434 = vmatpush.msra.mxu0 0.0
  %435 = vmatpush.msra.mxu0 0.0
  %436 = vmatpush.msra.mxu0 0.0
  %437 = vmatpush.msra.mxu0 0.0
  %438 = vmatpush.msra.mxu0 0.0
  %439 = vmatpush.msra.mxu0 %v402
  %440 = vmatpush.msra.mxu0 %v395
  %441 = vmatpush.msra.mxu0 %v393
  %442 = vmatpush.msra.mxu0 %v391
  %443 = vmatmul.f32.gmra.mxu0 %v313
  %v444 = vpop.f32.mrf.mxu0
  %v445 = vadd.f32 0.0, %v444
  %446 = vmatmul.f32.gmra.mxu0 %v316
  %v447 = vpop.f32.mrf.mxu0
  %v448 = vadd.f32 0.0, %v447
  %449 = vdwg.mxu0
  %v450 = vsub.f32 %v374, %v422
  %v451 = vsub.f32 %v374, %v445
  %v452 = vsub.f32 %v379, %v425
  %v453 = vsub.f32 %v379, %v448
  %v454 = vmax.f32 %v450, 0.0
  %v455 = vmax.f32 %v451, 0.0
  %v456 = vmax.f32 %v452, 0.0
  %v457 = vmax.f32 %v453, 0.0
  %s458 = smul.u32 4, 32
  %s459 = smul.u32 %s458, 3
  %s460 = sshll.u32 %s459, 4
  %461 = dma.done [#allocation4], %s460
  %v462 = vld [vmem:[#allocation2] sm:$0xff]
  %v463 = vld [vmem:[#allocation2 + $0x8] sm:$0xf]
  %v464 = vld [vmem:[#allocation2 + $0xc] sm:$0xff]
  %v465 = vld [vmem:[#allocation2 + $0x14] sm:$0xf]
  %v466 = vld [vmem:[#allocation2 + $0x18] sm:$0xff]
  %v467 = vld [vmem:[#allocation2 + $0x20] sm:$0xf]
  %v468 = vld [vmem:[#allocation2 + $0x24] sm:$0xff]
  %v469 = vld [vmem:[#allocation2 + $0x2c] sm:$0xf]
  %v470 = vld [vmem:[#allocation2 + $0x30] sm:$0xff]
  %v471 = vld [vmem:[#allocation2 + $0x38] sm:$0xf]
  %v472 = vld [vmem:[#allocation2 + $0x3c] sm:$0xff]
  %v473 = vld [vmem:[#allocation2 + $0x44] sm:$0xf]
  %v474 = vld [vmem:[#allocation2 + $0x48] sm:$0xff]
  %v475 = vld [vmem:[#allocation2 + $0x50] sm:$0xf]
  %v476 = vld [vmem:[#allocation2 + $0x54] sm:$0xff]
  %v477 = vld [vmem:[#allocation2 + $0x5c] sm:$0xf]
  %v478 = vld [vmem:[#allocation2 + $0x60] sm:$0xff]
  %v479 = vld [vmem:[#allocation2 + $0x68] sm:$0xf]
  %v480 = vld [vmem:[#allocation2 + $0x6c] sm:$0xff]
  %v481 = vld [vmem:[#allocation2 + $0x74] sm:$0xf]
  %v482 = vld [vmem:[#allocation2 + $0x78] sm:$0xff]
  %v483 = vld [vmem:[#allocation2 + $0x80] sm:$0xf]
  %v484 = vld [vmem:[#allocation2 + $0x84] sm:$0xff]
  %v485 = vld [vmem:[#allocation2 + $0x8c] sm:$0xf]
  %v486 = vld [vmem:[#allocation2 + $0x90] sm:$0xff]
  %v487 = vld [vmem:[#allocation2 + $0x98] sm:$0xf]
  %v488 = vld [vmem:[#allocation2 + $0x9c] sm:$0xff]
  %v489 = vld [vmem:[#allocation2 + $0xa4] sm:$0xf]
  %v490 = vld [vmem:[#allocation2 + $0xa8] sm:$0xff]
  %v491 = vld [vmem:[#allocation2 + $0xb0] sm:$0xf]
  %v492 = vld [vmem:[#allocation2 + $0xb4] sm:$0xff]
  %v493 = vld [vmem:[#allocation2 + $0xbc] sm:$0xf]
  %v494 = vld [vmem:[#allocation2 + $0xc0] sm:$0xff]
  %v495 = vld [vmem:[#allocation2 + $0xc8] sm:$0xf]
  %v496 = vld [vmem:[#allocation2 + $0xcc] sm:$0xff]
  %v497 = vld [vmem:[#allocation2 + $0xd4] sm:$0xf]
  %v498 = vld [vmem:[#allocation2 + $0xd8] sm:$0xff]
  %v499 = vld [vmem:[#allocation2 + $0xe0] sm:$0xf]
  %v500 = vld [vmem:[#allocation2 + $0xe4] sm:$0xff]
  %v501 = vld [vmem:[#allocation2 + $0xec] sm:$0xf]
  %v502 = vld [vmem:[#allocation2 + $0xf0] sm:$0xff]
  %v503 = vld [vmem:[#allocation2 + $0xf8] sm:$0xf]
  %v504 = vld [vmem:[#allocation2 + $0xfc] sm:$0xff]
  %v505 = vld [vmem:[#allocation2 + $0x104] sm:$0xf]
  %v506 = vld [vmem:[#allocation2 + $0x108] sm:$0xff]
  %v507 = vld [vmem:[#allocation2 + $0x110] sm:$0xf]
  %v508 = vld [vmem:[#allocation2 + $0x114] sm:$0xff]
  %v509 = vld [vmem:[#allocation2 + $0x11c] sm:$0xf]
  %v510 = vld [vmem:[#allocation2 + $0x120] sm:$0xff]
  %v511 = vld [vmem:[#allocation2 + $0x128] sm:$0xf]
  %v512 = vld [vmem:[#allocation2 + $0x12c] sm:$0xff]
  %v513 = vld [vmem:[#allocation2 + $0x134] sm:$0xf]
  %v514 = vld [vmem:[#allocation2 + $0x138] sm:$0xff]
  %v515 = vld [vmem:[#allocation2 + $0x140] sm:$0xf]
  %v516 = vld [vmem:[#allocation2 + $0x144] sm:$0xff]
  %v517 = vld [vmem:[#allocation2 + $0x14c] sm:$0xf]
  %v518 = vld [vmem:[#allocation2 + $0x150] sm:$0xff]
  %v519 = vld [vmem:[#allocation2 + $0x158] sm:$0xf]
  %v520 = vld [vmem:[#allocation2 + $0x15c] sm:$0xff]
  %v521 = vld [vmem:[#allocation2 + $0x164] sm:$0xf]
  %v522 = vld [vmem:[#allocation2 + $0x168] sm:$0xff]
  %v523 = vld [vmem:[#allocation2 + $0x170] sm:$0xf]
  %v524 = vld [vmem:[#allocation2 + $0x174] sm:$0xff]
  %v525 = vld [vmem:[#allocation2 + $0x17c] sm:$0xf]
  %v526 = vpack.c.bf16 %v387, %v385
  %v527 = vpack.c.bf16 %v388, %v386
  %v592 = vunpack.c.l.b16 %v462
  %v593 = vunpack.c.h.b16 %v462
  %v594 = vunpack.c.l.b16 %v463
  %v595 = vunpack.c.l.b16 %v464
  %v596 = vunpack.c.h.b16 %v464
  %v597 = vunpack.c.l.b16 %v465
  %v598 = vunpack.c.l.b16 %v466
  %v599 = vunpack.c.h.b16 %v466
  %v600 = vunpack.c.l.b16 %v467
  %v601 = vunpack.c.l.b16 %v468
  %v602 = vunpack.c.h.b16 %v468
  %v603 = vunpack.c.l.b16 %v469
  %v604 = vunpack.c.l.b16 %v470
  %v605 = vunpack.c.h.b16 %v470
  %v606 = vunpack.c.l.b16 %v471
  %v607 = vunpack.c.l.b16 %v472
  %v608 = vunpack.c.h.b16 %v472
  %v609 = vunpack.c.l.b16 %v473
  %v610 = vunpack.c.l.b16 %v474
  %v611 = vunpack.c.h.b16 %v474
  %v612 = vunpack.c.l.b16 %v475
  %v613 = vunpack.c.l.b16 %v476
  %v614 = vunpack.c.h.b16 %v476
  %v615 = vunpack.c.l.b16 %v477
  %v616 = vunpack.c.l.b16 %v478
  %v617 = vunpack.c.h.b16 %v478
  %v618 = vunpack.c.l.b16 %v479
  %v619 = vunpack.c.l.b16 %v480
  %v620 = vunpack.c.h.b16 %v480
  %v621 = vunpack.c.l.b16 %v481
  %v622 = vunpack.c.l.b16 %v482
  %v623 = vunpack.c.h.b16 %v482
  %v624 = vunpack.c.l.b16 %v483
  %v625 = vunpack.c.l.b16 %v484
  %v626 = vunpack.c.h.b16 %v484
  %v627 = vunpack.c.l.b16 %v485
  %v628 = vunpack.c.l.b16 %v486
  %v629 = vunpack.c.h.b16 %v486
  %v630 = vunpack.c.l.b16 %v487
  %v631 = vunpack.c.l.b16 %v488
  %v632 = vunpack.c.h.b16 %v488
  %v633 = vunpack.c.l.b16 %v489
  %v634 = vunpack.c.l.b16 %v490
  %v635 = vunpack.c.h.b16 %v490
  %v636 = vunpack.c.l.b16 %v491
  %v637 = vunpack.c.l.b16 %v492
  %v638 = vunpack.c.h.b16 %v492
  %v639 = vunpack.c.l.b16 %v493
  %v640 = vunpack.c.l.b16 %v494
  %v641 = vunpack.c.h.b16 %v494
  %v642 = vunpack.c.l.b16 %v495
  %v643 = vunpack.c.l.b16 %v496
  %v644 = vunpack.c.h.b16 %v496
  %v645 = vunpack.c.l.b16 %v497
  %v646 = vunpack.c.l.b16 %v498
  %v647 = vunpack.c.h.b16 %v498
  %v648 = vunpack.c.l.b16 %v499
  %v649 = vunpack.c.l.b16 %v500
  %v650 = vunpack.c.h.b16 %v500
  %v651 = vunpack.c.l.b16 %v501
  %v652 = vunpack.c.l.b16 %v502
  %v653 = vunpack.c.h.b16 %v502
  %v654 = vunpack.c.l.b16 %v503
  %v655 = vunpack.c.l.b16 %v504
  %v656 = vunpack.c.h.b16 %v504
  %v657 = vunpack.c.l.b16 %v505
  %v658 = vunpack.c.l.b16 %v506
  %v659 = vunpack.c.h.b16 %v506
  %v660 = vunpack.c.l.b16 %v507
  %v661 = vunpack.c.l.b16 %v508
  %v662 = vunpack.c.h.b16 %v508
  %v663 = vunpack.c.l.b16 %v509
  %v664 = vunpack.c.l.b16 %v510
  %v665 = vunpack.c.h.b16 %v510
  %v666 = vunpack.c.l.b16 %v511
  %v667 = vunpack.c.l.b16 %v512
  %v668 = vunpack.c.h.b16 %v512
  %v669 = vunpack.c.l.b16 %v513
  %v670 = vunpack.c.l.b16 %v514
  %v671 = vunpack.c.h.b16 %v514
  %v672 = vunpack.c.l.b16 %v515
  %v673 = vunpack.c.l.b16 %v516
  %v674 = vunpack.c.h.b16 %v516
  %v675 = vunpack.c.l.b16 %v517
  %v676 = vunpack.c.l.b16 %v518
  %v677 = vunpack.c.h.b16 %v518
  %v678 = vunpack.c.l.b16 %v519
  %v679 = vunpack.c.l.b16 %v520
  %v680 = vunpack.c.h.b16 %v520
  %v681 = vunpack.c.l.b16 %v521
  %v682 = vunpack.c.l.b16 %v522
  %v683 = vunpack.c.h.b16 %v522
  %v684 = vunpack.c.l.b16 %v523
  %v685 = vunpack.c.l.b16 %v524
  %v686 = vunpack.c.h.b16 %v524
  %v687 = vunpack.c.l.b16 %v525
  %v688 = vpack.c.b16 %v595, %v592
  %v689 = vpack.c.b16 %v596, %v593
  %v690 = vpack.c.b16 %v597, %v594
  %v691 = vpack.c.b16 %v601, %v598
  %v692 = vpack.c.b16 %v602, %v599
  %v693 = vpack.c.b16 %v603, %v600
  %v694 = vpack.c.b16 %v607, %v604
  %v695 = vpack.c.b16 %v608, %v605
  %v696 = vpack.c.b16 %v609, %v606
  %v697 = vpack.c.b16 %v613, %v610
  %v698 = vpack.c.b16 %v614, %v611
  %v699 = vpack.c.b16 %v615, %v612
  %v700 = vpack.c.b16 %v619, %v616
  %v701 = vpack.c.b16 %v620, %v617
  %v702 = vpack.c.b16 %v621, %v618
  %v703 = vpack.c.b16 %v625, %v622
  %v704 = vpack.c.b16 %v626, %v623
  %v705 = vpack.c.b16 %v627, %v624
  %v706 = vpack.c.b16 %v631, %v628
  %v707 = vpack.c.b16 %v632, %v629
  %v708 = vpack.c.b16 %v633, %v630
  %v709 = vpack.c.b16 %v637, %v634
  %v710 = vpack.c.b16 %v638, %v635
  %v711 = vpack.c.b16 %v639, %v636
  %v712 = vpack.c.b16 %v643, %v640
  %v713 = vpack.c.b16 %v644, %v641
  %v714 = vpack.c.b16 %v645, %v642
  %v715 = vpack.c.b16 %v649, %v646
  %v716 = vpack.c.b16 %v650, %v647
  %v717 = vpack.c.b16 %v651, %v648
  %v718 = vpack.c.b16 %v655, %v652
  %v719 = vpack.c.b16 %v656, %v653
  %v720 = vpack.c.b16 %v657, %v654
  %v721 = vpack.c.b16 %v661, %v658
  %v722 = vpack.c.b16 %v662, %v659
  %v723 = vpack.c.b16 %v663, %v660
  %v724 = vpack.c.b16 %v667, %v664
  %v725 = vpack.c.b16 %v668, %v665
  %v726 = vpack.c.b16 %v669, %v666
  %v727 = vpack.c.b16 %v673, %v670
  %v728 = vpack.c.b16 %v674, %v671
  %v729 = vpack.c.b16 %v675, %v672
  %v730 = vpack.c.b16 %v679, %v676
  %v731 = vpack.c.b16 %v680, %v677
  %v732 = vpack.c.b16 %v681, %v678
  %v733 = vpack.c.b16 %v685, %v682
  %v734 = vpack.c.b16 %v686, %v683
  %v735 = vpack.c.b16 %v687, %v684
  %784 = vmatpush.bf16.msra.mxu0 %v709
  %785 = vmatpush.bf16.msra.mxu0 %v706
  %786 = vmatpush.bf16.msra.mxu0 %v703
  %787 = vmatpush.bf16.msra.mxu0 %v700
  %788 = vmatpush.bf16.msra.mxu0 %v697
  %789 = vmatpush.bf16.msra.mxu0 %v694
  %790 = vmatpush.bf16.msra.mxu0 %v691
  %791 = vmatpush.bf16.msra.mxu0 %v688
  %792 = vmatmul.bf16.gmra.mxu0 %v526
  %v793 = vpop.f32.mrf.mxu0
  %v794 = vadd.f32 0.0, %v793
  %v795 = vpop.f32.mrf.mxu0
  %v796 = vadd.f32 0.0, %v795
  %797 = vdwg.mxu0
  %798 = vmatpush.bf16.msra.mxu0 %v733
  %799 = vmatpush.bf16.msra.mxu0 %v730
  %800 = vmatpush.bf16.msra.mxu0 %v727
  %801 = vmatpush.bf16.msra.mxu0 %v724
  %802 = vmatpush.bf16.msra.mxu0 %v721
  %803 = vmatpush.bf16.msra.mxu0 %v718
  %804 = vmatpush.bf16.msra.mxu0 %v715
  %805 = vmatpush.bf16.msra.mxu0 %v712
  %806 = vmatmul.bf16.gmra.mxu0 %v527
  %v807 = vpop.f32.mrf.mxu0
  %v808 = vadd.f32 %v794, %v807
  %v809 = vpop.f32.mrf.mxu0
  %v810 = vadd.f32 %v796, %v809
  %811 = vdwg.mxu0
  %812 = vmatpush.bf16.msra.mxu0 %v710
  %813 = vmatpush.bf16.msra.mxu0 %v707
  %814 = vmatpush.bf16.msra.mxu0 %v704
  %815 = vmatpush.bf16.msra.mxu0 %v701
  %816 = vmatpush.bf16.msra.mxu0 %v698
  %817 = vmatpush.bf16.msra.mxu0 %v695
  %818 = vmatpush.bf16.msra.mxu0 %v692
  %819 = vmatpush.bf16.msra.mxu0 %v689
  %820 = vmatmul.bf16.gmra.mxu0 %v526
  %v821 = vpop.f32.mrf.mxu0
  %v822 = vadd.f32 0.0, %v821
  %v823 = vpop.f32.mrf.mxu0
  %v824 = vadd.f32 0.0, %v823
  %825 = vdwg.mxu0
  %826 = vmatpush.bf16.msra.mxu0 %v734
  %827 = vmatpush.bf16.msra.mxu0 %v731
  %828 = vmatpush.bf16.msra.mxu0 %v728
  %829 = vmatpush.bf16.msra.mxu0 %v725
  %830 = vmatpush.bf16.msra.mxu0 %v722
  %831 = vmatpush.bf16.msra.mxu0 %v719
  %832 = vmatpush.bf16.msra.mxu0 %v716
  %833 = vmatpush.bf16.msra.mxu0 %v713
  %834 = vmatmul.bf16.gmra.mxu0 %v527
  %v835 = vpop.f32.mrf.mxu0
  %v836 = vadd.f32 %v822, %v835
  %v837 = vpop.f32.mrf.mxu0
  %v838 = vadd.f32 %v824, %v837
  %839 = vdwg.mxu0
  %840 = vmatpush.bf16.msra.mxu0 %v711
  %841 = vmatpush.bf16.msra.mxu0 %v708
  %842 = vmatpush.bf16.msra.mxu0 %v705
  %843 = vmatpush.bf16.msra.mxu0 %v702
  %844 = vmatpush.bf16.msra.mxu0 %v699
  %845 = vmatpush.bf16.msra.mxu0 %v696
  %846 = vmatpush.bf16.msra.mxu0 %v693
  %847 = vmatpush.bf16.msra.mxu0 %v690
  %848 = vmatmul.bf16.gmra.mxu0 %v526
  %v849 = vpop.f32.mrf.mxu0
  %v850 = vadd.f32 0.0, %v849
  %v851 = vpop.f32.mrf.mxu0
  %v852 = vadd.f32 0.0, %v851
  %853 = vdwg.mxu0
  %854 = vmatpush.bf16.msra.mxu0 %v735
  %855 = vmatpush.bf16.msra.mxu0 %v732
  %856 = vmatpush.bf16.msra.mxu0 %v729
  %857 = vmatpush.bf16.msra.mxu0 %v726
  %858 = vmatpush.bf16.msra.mxu0 %v723
  %859 = vmatpush.bf16.msra.mxu0 %v720
  %860 = vmatpush.bf16.msra.mxu0 %v717
  %861 = vmatpush.bf16.msra.mxu0 %v714
  %862 = vmatmul.bf16.gmra.mxu0 %v527
  %v863 = vpop.f32.mrf.mxu0
  %v864 = vadd.f32 %v850, %v863
  %v865 = vpop.f32.mrf.mxu0
  %v866 = vadd.f32 %v852, %v865
  %867 = vdwg.mxu0
  %v868 = vld [vmem:[%s2] sm:$0xff]
  %v869 = vld [vmem:[%s2 + $0x8] sm:$0x3]
  %s870 = scalar_lea.vmem %s2, 16
  %v871 = vld [vmem:[%s870] sm:$0xff]
  %v872 = vld [vmem:[%s870 + $0x8] sm:$0x3]
  %875 = vrot.lane.b32.xlu0 %v808, 92
  %v876 = vpop.permute.xlu0 %875
  %877 = vrot.lane.b32.xlu0 %v810, 92
  %v878 = vpop.permute.xlu0 %877
  %vm880 = vcmask 80896
  %v882 = vsel %vm880, %v871, 0
  %v885 = vsel %vm880, %v872, 0
  %vm887 = vcmask 1041408
  %v888 = vsel %vm887, %v878, 0
  %890 = vmatpush.msra.mxu0 0.0
  %891 = vmatpush.msra.mxu0 0.0
  %892 = vmatpush.msra.mxu0 0.0
  %893 = vmatpush.msra.mxu0 0.0
  %894 = vmatpush.msra.mxu0 0.0
  %895 = vmatpush.msra.mxu0 0.0
  %896 = vmatpush.msra.mxu0 0.0
  %897 = vmatpush.msra.mxu0 0.0
  %898 = vmatpush.msra.mxu0 0.0
  %899 = vmatpush.msra.mxu0 0.0
  %900 = vmatpush.msra.mxu0 0.0
  %901 = vmatpush.msra.mxu0 0.0
  %902 = vmatpush.msra.mxu0 0.0
  %903 = vmatpush.msra.mxu0 0.0
  %904 = vmatpush.msra.mxu0 %v888
  %905 = vmatpush.msra.mxu0 %v876
  %906 = vmatmul.f32.gmra.mxu0 %v882
  %v907 = vpop.f32.mrf.mxu0
  %v908 = vadd.f32 0.0, %v907
  %909 = vmatmul.f32.gmra.mxu0 %v885
  %v910 = vpop.f32.mrf.mxu0
  %v911 = vadd.f32 0.0, %v910
  %912 = vdwg.mxu0
  %v914 = vsel %vm880, %v868, 0
  %v917 = vsel %vm880, %v869, 0
  %v919 = vsel %vm887, %v810, 0
  %921 = vmatpush.msra.mxu0 0.0
  %922 = vmatpush.msra.mxu0 0.0
  %923 = vmatpush.msra.mxu0 0.0
  %924 = vmatpush.msra.mxu0 0.0
  %925 = vmatpush.msra.mxu0 0.0
  %926 = vmatpush.msra.mxu0 0.0
  %927 = vmatpush.msra.mxu0 0.0
  %928 = vmatpush.msra.mxu0 0.0
  %929 = vmatpush.msra.mxu0 0.0
  %930 = vmatpush.msra.mxu0 0.0
  %931 = vmatpush.msra.mxu0 0.0
  %932 = vmatpush.msra.mxu0 0.0
  %933 = vmatpush.msra.mxu0 0.0
  %934 = vmatpush.msra.mxu0 0.0
  %935 = vmatpush.msra.mxu0 %v919
  %936 = vmatpush.msra.mxu0 %v808
  %937 = vmatmul.f32.gmra.mxu0 %v914
  %v938 = vpop.f32.mrf.mxu0
  %v939 = vadd.f32 %v908, %v938
  %940 = vmatmul.f32.gmra.mxu0 %v917
  %v941 = vpop.f32.mrf.mxu0
  %v942 = vadd.f32 %v911, %v941
  %943 = vdwg.mxu0
  %s944 = scalar_lea.vmem %s2, 32
  %v945 = vld [vmem:[%s944] sm:$0xff]
  %v946 = vld [vmem:[%s944 + $0x8] sm:$0x3]
  %947 = vrot.lane.b32.xlu0 %v808, 56
  %v948 = vpop.permute.xlu0 %947
  %949 = vrot.lane.b32.xlu0 %v810, 56
  %v950 = vpop.permute.xlu0 %949
  %v953 = vsel %vm880, %v945, 0
  %v956 = vsel %vm880, %v946, 0
  %v958 = vsel %vm887, %v950, 0
  %960 = vmatpush.msra.mxu0 0.0
  %961 = vmatpush.msra.mxu0 0.0
  %962 = vmatpush.msra.mxu0 0.0
  %963 = vmatpush.msra.mxu0 0.0
  %964 = vmatpush.msra.mxu0 0.0
  %965 = vmatpush.msra.mxu0 0.0
  %966 = vmatpush.msra.mxu0 0.0
  %967 = vmatpush.msra.mxu0 0.0
  %968 = vmatpush.msra.mxu0 0.0
  %969 = vmatpush.msra.mxu0 0.0
  %970 = vmatpush.msra.mxu0 0.0
  %971 = vmatpush.msra.mxu0 0.0
  %972 = vmatpush.msra.mxu0 0.0
  %973 = vmatpush.msra.mxu0 0.0
  %974 = vmatpush.msra.mxu0 %v958
  %975 = vmatpush.msra.mxu0 %v948
  %976 = vmatmul.f32.gmra.mxu0 %v953
  %v977 = vpop.f32.mrf.mxu0
  %v978 = vadd.f32 0.0, %v977
  %979 = vmatmul.f32.gmra.mxu0 %v956
  %v980 = vpop.f32.mrf.mxu0
  %v981 = vadd.f32 0.0, %v980
  %982 = vdwg.mxu0
  %v983 = vadd.f32 %v939, %v978
  %v984 = vadd.f32 %v942, %v981
  %s985 = scalar_lea.vmem %s2, 48
  %v986 = vld [vmem:[%s985] sm:$0xff]
  %v987 = vld [vmem:[%s985 + $0x8] sm:$0x3]
  %990 = vrot.lane.b32.xlu0 %v808, 20
  %v991 = vpop.permute.xlu0 %990
  %992 = vrot.lane.b32.xlu0 %v836, 20
  %v993 = vpop.permute.xlu0 %992
  %994 = vrot.lane.b32.xlu0 %v810, 20
  %v995 = vpop.permute.xlu0 %994
  %996 = vrot.lane.b32.xlu0 %v838, 20
  %v997 = vpop.permute.xlu0 %996
  %vm998 = vcmask 162816
  %v999 = vsel %vm998, %v991, %v993
  %v1000 = vsel %vm998, %v995, %v997
  %v1003 = vsel %vm880, %v986, 0
  %v1006 = vsel %vm880, %v987, 0
  %v1008 = vsel %vm887, %v1000, 0
  %1010 = vmatpush.msra.mxu0 0.0
  %1011 = vmatpush.msra.mxu0 0.0
  %1012 = vmatpush.msra.mxu0 0.0
  %1013 = vmatpush.msra.mxu0 0.0
  %1014 = vmatpush.msra.mxu0 0.0
  %1015 = vmatpush.msra.mxu0 0.0
  %1016 = vmatpush.msra.mxu0 0.0
  %1017 = vmatpush.msra.mxu0 0.0
  %1018 = vmatpush.msra.mxu0 0.0
  %1019 = vmatpush.msra.mxu0 0.0
  %1020 = vmatpush.msra.mxu0 0.0
  %1021 = vmatpush.msra.mxu0 0.0
  %1022 = vmatpush.msra.mxu0 0.0
  %1023 = vmatpush.msra.mxu0 0.0
  %1024 = vmatpush.msra.mxu0 %v1008
  %1025 = vmatpush.msra.mxu0 %v999
  %1026 = vmatmul.f32.gmra.mxu0 %v1003
  %v1027 = vpop.f32.mrf.mxu0
  %v1028 = vadd.f32 0.0, %v1027
  %1029 = vmatmul.f32.gmra.mxu0 %v1006
  %v1030 = vpop.f32.mrf.mxu0
  %v1031 = vadd.f32 0.0, %v1030
  %1032 = vdwg.mxu0
  %v1033 = vadd.f32 %v983, %v1028
  %v1034 = vadd.f32 %v984, %v1031
  %s1035 = scalar_lea.vmem %s2, 64
  %v1036 = vld [vmem:[%s1035] sm:$0xff]
  %v1037 = vld [vmem:[%s1035 + $0x8] sm:$0x3]
  %1038 = vrot.lane.b32.xlu0 %v836, 112
  %v1039 = vpop.permute.xlu0 %1038
  %1040 = vrot.lane.b32.xlu0 %v838, 112
  %v1041 = vpop.permute.xlu0 %1040
  %v1044 = vsel %vm880, %v1036, 0
  %v1047 = vsel %vm880, %v1037, 0
  %v1049 = vsel %vm887, %v1041, 0
  %1051 = vmatpush.msra.mxu0 0.0
  %1052 = vmatpush.msra.mxu0 0.0
  %1053 = vmatpush.msra.mxu0 0.0
  %1054 = vmatpush.msra.mxu0 0.0
  %1055 = vmatpush.msra.mxu0 0.0
  %1056 = vmatpush.msra.mxu0 0.0
  %1057 = vmatpush.msra.mxu0 0.0
  %1058 = vmatpush.msra.mxu0 0.0
  %1059 = vmatpush.msra.mxu0 0.0
  %1060 = vmatpush.msra.mxu0 0.0
  %1061 = vmatpush.msra.mxu0 0.0
  %1062 = vmatpush.msra.mxu0 0.0
  %1063 = vmatpush.msra.mxu0 0.0
  %1064 = vmatpush.msra.mxu0 0.0
  %1065 = vmatpush.msra.mxu0 %v1049
  %1066 = vmatpush.msra.mxu0 %v1039
  %1067 = vmatmul.f32.gmra.mxu0 %v1044
  %v1068 = vpop.f32.mrf.mxu0
  %v1069 = vadd.f32 0.0, %v1068
  %1070 = vmatmul.f32.gmra.mxu0 %v1047
  %v1071 = vpop.f32.mrf.mxu0
  %v1072 = vadd.f32 0.0, %v1071
  %1073 = vdwg.mxu0
  %v1074 = vadd.f32 %v1033, %v1069
  %v1075 = vadd.f32 %v1034, %v1072
  %s1076 = scalar_lea.vmem %s2, 80
  %v1077 = vld [vmem:[%s1076] sm:$0xff]
  %v1078 = vld [vmem:[%s1076 + $0x8] sm:$0x3]
  %1079 = vrot.lane.b32.xlu0 %v836, 76
  %v1080 = vpop.permute.xlu0 %1079
  %1081 = vrot.lane.b32.xlu0 %v838, 76
  %v1082 = vpop.permute.xlu0 %1081
  %v1085 = vsel %vm880, %v1077, 0
  %v1088 = vsel %vm880, %v1078, 0
  %v1090 = vsel %vm887, %v1082, 0
  %1092 = vmatpush.msra.mxu0 0.0
  %1093 = vmatpush.msra.mxu0 0.0
  %1094 = vmatpush.msra.mxu0 0.0
  %1095 = vmatpush.msra.mxu0 0.0
  %1096 = vmatpush.msra.mxu0 0.0
  %1097 = vmatpush.msra.mxu0 0.0
  %1098 = vmatpush.msra.mxu0 0.0
  %1099 = vmatpush.msra.mxu0 0.0
  %1100 = vmatpush.msra.mxu0 0.0
  %1101 = vmatpush.msra.mxu0 0.0
  %1102 = vmatpush.msra.mxu0 0.0
  %1103 = vmatpush.msra.mxu0 0.0
  %1104 = vmatpush.msra.mxu0 0.0
  %1105 = vmatpush.msra.mxu0 0.0
  %1106 = vmatpush.msra.mxu0 %v1090
  %1107 = vmatpush.msra.mxu0 %v1080
  %1108 = vmatmul.f32.gmra.mxu0 %v1085
  %v1109 = vpop.f32.mrf.mxu0
  %v1110 = vadd.f32 0.0, %v1109
  %1111 = vmatmul.f32.gmra.mxu0 %v1088
  %v1112 = vpop.f32.mrf.mxu0
  %v1113 = vadd.f32 0.0, %v1112
  %1114 = vdwg.mxu0
  %v1115 = vadd.f32 %v1074, %v1110
  %v1116 = vadd.f32 %v1075, %v1113
  %s1117 = scalar_lea.vmem %s2, 96
  %v1118 = vld [vmem:[%s1117] sm:$0xff]
  %v1119 = vld [vmem:[%s1117 + $0x8] sm:$0x3]
  %1120 = vrot.lane.b32.xlu0 %v836, 40
  %v1121 = vpop.permute.xlu0 %1120
  %1122 = vrot.lane.b32.xlu0 %v838, 40
  %v1123 = vpop.permute.xlu0 %1122
  %v1126 = vsel %vm880, %v1118, 0
  %v1129 = vsel %vm880, %v1119, 0
  %v1131 = vsel %vm887, %v1123, 0
  %1133 = vmatpush.msra.mxu0 0.0
  %1134 = vmatpush.msra.mxu0 0.0
  %1135 = vmatpush.msra.mxu0 0.0
  %1136 = vmatpush.msra.mxu0 0.0
  %1137 = vmatpush.msra.mxu0 0.0
  %1138 = vmatpush.msra.mxu0 0.0
  %1139 = vmatpush.msra.mxu0 0.0
  %1140 = vmatpush.msra.mxu0 0.0
  %1141 = vmatpush.msra.mxu0 0.0
  %1142 = vmatpush.msra.mxu0 0.0
  %1143 = vmatpush.msra.mxu0 0.0
  %1144 = vmatpush.msra.mxu0 0.0
  %1145 = vmatpush.msra.mxu0 0.0
  %1146 = vmatpush.msra.mxu0 0.0
  %1147 = vmatpush.msra.mxu0 %v1131
  %1148 = vmatpush.msra.mxu0 %v1121
  %1149 = vmatmul.f32.gmra.mxu0 %v1126
  %v1150 = vpop.f32.mrf.mxu0
  %v1151 = vadd.f32 0.0, %v1150
  %1152 = vmatmul.f32.gmra.mxu0 %v1129
  %v1153 = vpop.f32.mrf.mxu0
  %v1154 = vadd.f32 0.0, %v1153
  %1155 = vdwg.mxu0
  %v1156 = vadd.f32 %v1115, %v1151
  %v1157 = vadd.f32 %v1116, %v1154
  %s1158 = scalar_lea.vmem %s2, 112
  %v1159 = vld [vmem:[%s1158] sm:$0xff]
  %v1160 = vld [vmem:[%s1158 + $0x8] sm:$0x3]
  %1163 = vrot.lane.b32.xlu0 %v836, 4
  %v1164 = vpop.permute.xlu0 %1163
  %1165 = vrot.lane.b32.xlu0 %v864, 4
  %v1166 = vpop.permute.xlu0 %1165
  %1167 = vrot.lane.b32.xlu0 %v838, 4
  %v1168 = vpop.permute.xlu0 %1167
  %1169 = vrot.lane.b32.xlu0 %v866, 4
  %v1170 = vpop.permute.xlu0 %1169
  %vm1171 = vcmask 31744
  %v1172 = vsel %vm1171, %v1164, %v1166
  %v1173 = vsel %vm1171, %v1168, %v1170
  %v1176 = vsel %vm880, %v1159, 0
  %v1179 = vsel %vm880, %v1160, 0
  %v1181 = vsel %vm887, %v1173, 0
  %1183 = vmatpush.msra.mxu0 0.0
  %1184 = vmatpush.msra.mxu0 0.0
  %1185 = vmatpush.msra.mxu0 0.0
  %1186 = vmatpush.msra.mxu0 0.0
  %1187 = vmatpush.msra.mxu0 0.0
  %1188 = vmatpush.msra.mxu0 0.0
  %1189 = vmatpush.msra.mxu0 0.0
  %1190 = vmatpush.msra.mxu0 0.0
  %1191 = vmatpush.msra.mxu0 0.0
  %1192 = vmatpush.msra.mxu0 0.0
  %1193 = vmatpush.msra.mxu0 0.0
  %1194 = vmatpush.msra.mxu0 0.0
  %1195 = vmatpush.msra.mxu0 0.0
  %1196 = vmatpush.msra.mxu0 0.0
  %1197 = vmatpush.msra.mxu0 %v1181
  %1198 = vmatpush.msra.mxu0 %v1172
  %1199 = vmatmul.f32.gmra.mxu0 %v1176
  %v1200 = vpop.f32.mrf.mxu0
  %v1201 = vadd.f32 0.0, %v1200
  %1202 = vmatmul.f32.gmra.mxu0 %v1179
  %v1203 = vpop.f32.mrf.mxu0
  %v1204 = vadd.f32 0.0, %v1203
  %1205 = vdwg.mxu0
  %v1206 = vadd.f32 %v1156, %v1201
  %v1207 = vadd.f32 %v1157, %v1204
  %s1208 = scalar_lea.vmem %s2, 128
  %v1209 = vld [vmem:[%s1208] sm:$0xff]
  %v1210 = vld [vmem:[%s1208 + $0x8] sm:$0x3]
  %1211 = vrot.lane.b32.xlu0 %v864, 96
  %v1212 = vpop.permute.xlu0 %1211
  %1213 = vrot.lane.b32.xlu0 %v866, 96
  %v1214 = vpop.permute.xlu0 %1213
  %v1217 = vsel %vm880, %v1209, 0
  %v1220 = vsel %vm880, %v1210, 0
  %v1222 = vsel %vm887, %v1214, 0
  %1224 = vmatpush.msra.mxu0 0.0
  %1225 = vmatpush.msra.mxu0 0.0
  %1226 = vmatpush.msra.mxu0 0.0
  %1227 = vmatpush.msra.mxu0 0.0
  %1228 = vmatpush.msra.mxu0 0.0
  %1229 = vmatpush.msra.mxu0 0.0
  %1230 = vmatpush.msra.mxu0 0.0
  %1231 = vmatpush.msra.mxu0 0.0
  %1232 = vmatpush.msra.mxu0 0.0
  %1233 = vmatpush.msra.mxu0 0.0
  %1234 = vmatpush.msra.mxu0 0.0
  %1235 = vmatpush.msra.mxu0 0.0
  %1236 = vmatpush.msra.mxu0 0.0
  %1237 = vmatpush.msra.mxu0 0.0
  %1238 = vmatpush.msra.mxu0 %v1222
  %1239 = vmatpush.msra.mxu0 %v1212
  %1240 = vmatmul.f32.gmra.mxu0 %v1217
  %v1241 = vpop.f32.mrf.mxu0
  %v1242 = vadd.f32 0.0, %v1241
  %1243 = vmatmul.f32.gmra.mxu0 %v1220
  %v1244 = vpop.f32.mrf.mxu0
  %v1245 = vadd.f32 0.0, %v1244
  %1246 = vdwg.mxu0
  %v1247 = vadd.f32 %v1206, %v1242
  %v1248 = vadd.f32 %v1207, %v1245
  %v1249 = vpack.c.bf16 %v456, %v454
  %v1250 = vpack.c.bf16 %v457, %v455
  %1251 = vmatpush.bf16.msra.mxu0 %v709
  %1252 = vmatpush.bf16.msra.mxu0 %v706
  %1253 = vmatpush.bf16.msra.mxu0 %v703
  %1254 = vmatpush.bf16.msra.mxu0 %v700
  %1255 = vmatpush.bf16.msra.mxu0 %v697
  %1256 = vmatpush.bf16.msra.mxu0 %v694
  %1257 = vmatpush.bf16.msra.mxu0 %v691
  %1258 = vmatpush.bf16.msra.mxu0 %v688
  %1259 = vmatmul.bf16.gmra.mxu0 %v1249
  %v1260 = vpop.f32.mrf.mxu0
  %v1261 = vadd.f32 0.0, %v1260
  %v1262 = vpop.f32.mrf.mxu0
  %v1263 = vadd.f32 0.0, %v1262
  %1264 = vdwg.mxu0
  %1265 = vmatpush.bf16.msra.mxu0 %v733
  %1266 = vmatpush.bf16.msra.mxu0 %v730
  %1267 = vmatpush.bf16.msra.mxu0 %v727
  %1268 = vmatpush.bf16.msra.mxu0 %v724
  %1269 = vmatpush.bf16.msra.mxu0 %v721
  %1270 = vmatpush.bf16.msra.mxu0 %v718
  %1271 = vmatpush.bf16.msra.mxu0 %v715
  %1272 = vmatpush.bf16.msra.mxu0 %v712
  %1273 = vmatmul.bf16.gmra.mxu0 %v1250
  %v1274 = vpop.f32.mrf.mxu0
  %v1275 = vadd.f32 %v1261, %v1274
  %v1276 = vpop.f32.mrf.mxu0
  %v1277 = vadd.f32 %v1263, %v1276
  %1278 = vdwg.mxu0
  %1279 = vmatpush.bf16.msra.mxu0 %v710
  %1280 = vmatpush.bf16.msra.mxu0 %v707
  %1281 = vmatpush.bf16.msra.mxu0 %v704
  %1282 = vmatpush.bf16.msra.mxu0 %v701
  %1283 = vmatpush.bf16.msra.mxu0 %v698
  %1284 = vmatpush.bf16.msra.mxu0 %v695
  %1285 = vmatpush.bf16.msra.mxu0 %v692
  %1286 = vmatpush.bf16.msra.mxu0 %v689
  %1287 = vmatmul.bf16.gmra.mxu0 %v1249
  %v1288 = vpop.f32.mrf.mxu0
  %v1289 = vadd.f32 0.0, %v1288
  %v1290 = vpop.f32.mrf.mxu0
  %v1291 = vadd.f32 0.0, %v1290
  %1292 = vdwg.mxu0
  %1293 = vmatpush.bf16.msra.mxu0 %v734
  %1294 = vmatpush.bf16.msra.mxu0 %v731
  %1295 = vmatpush.bf16.msra.mxu0 %v728
  %1296 = vmatpush.bf16.msra.mxu0 %v725
  %1297 = vmatpush.bf16.msra.mxu0 %v722
  %1298 = vmatpush.bf16.msra.mxu0 %v719
  %1299 = vmatpush.bf16.msra.mxu0 %v716
  %1300 = vmatpush.bf16.msra.mxu0 %v713
  %1301 = vmatmul.bf16.gmra.mxu0 %v1250
  %v1302 = vpop.f32.mrf.mxu0
  %v1303 = vadd.f32 %v1289, %v1302
  %v1304 = vpop.f32.mrf.mxu0
  %v1305 = vadd.f32 %v1291, %v1304
  %1306 = vdwg.mxu0
  %1307 = vmatpush.bf16.msra.mxu0 %v711
  %1308 = vmatpush.bf16.msra.mxu0 %v708
  %1309 = vmatpush.bf16.msra.mxu0 %v705
  %1310 = vmatpush.bf16.msra.mxu0 %v702
  %1311 = vmatpush.bf16.msra.mxu0 %v699
  %1312 = vmatpush.bf16.msra.mxu0 %v696
  %1313 = vmatpush.bf16.msra.mxu0 %v693
  %1314 = vmatpush.bf16.msra.mxu0 %v690
  %1315 = vmatmul.bf16.gmra.mxu0 %v1249
  %v1316 = vpop.f32.mrf.mxu0
  %v1317 = vadd.f32 0.0, %v1316
  %v1318 = vpop.f32.mrf.mxu0
  %v1319 = vadd.f32 0.0, %v1318
  %1320 = vdwg.mxu0
  %1321 = vmatpush.bf16.msra.mxu0 %v735
  %1322 = vmatpush.bf16.msra.mxu0 %v732
  %1323 = vmatpush.bf16.msra.mxu0 %v729
  %1324 = vmatpush.bf16.msra.mxu0 %v726
  %1325 = vmatpush.bf16.msra.mxu0 %v723
  %1326 = vmatpush.bf16.msra.mxu0 %v720
  %1327 = vmatpush.bf16.msra.mxu0 %v717
  %1328 = vmatpush.bf16.msra.mxu0 %v714
  %1329 = vmatmul.bf16.gmra.mxu0 %v1250
  %v1330 = vpop.f32.mrf.mxu0
  %v1331 = vadd.f32 %v1317, %v1330
  %v1332 = vpop.f32.mrf.mxu0
  %v1333 = vadd.f32 %v1319, %v1332
  %1334 = vdwg.mxu0
  %1337 = vrot.lane.b32.xlu0 %v1275, 92
  %v1338 = vpop.permute.xlu0 %1337
  %1339 = vrot.lane.b32.xlu0 %v1277, 92
  %v1340 = vpop.permute.xlu0 %1339
  %v1342 = vsel %vm887, %v1340, 0
  %1344 = vmatpush.msra.mxu0 0.0
  %1345 = vmatpush.msra.mxu0 0.0
  %1346 = vmatpush.msra.mxu0 0.0
  %1347 = vmatpush.msra.mxu0 0.0
  %1348 = vmatpush.msra.mxu0 0.0
  %1349 = vmatpush.msra.mxu0 0.0
  %1350 = vmatpush.msra.mxu0 0.0
  %1351 = vmatpush.msra.mxu0 0.0
  %1352 = vmatpush.msra.mxu0 0.0
  %1353 = vmatpush.msra.mxu0 0.0
  %1354 = vmatpush.msra.mxu0 0.0
  %1355 = vmatpush.msra.mxu0 0.0
  %1356 = vmatpush.msra.mxu0 0.0
  %1357 = vmatpush.msra.mxu0 0.0
  %1358 = vmatpush.msra.mxu0 %v1342
  %1359 = vmatpush.msra.mxu0 %v1338
  %1360 = vmatmul.f32.gmra.mxu0 %v882
  %v1361 = vpop.f32.mrf.mxu0
  %v1362 = vadd.f32 0.0, %v1361
  %1363 = vmatmul.f32.gmra.mxu0 %v885
  %v1364 = vpop.f32.mrf.mxu0
  %v1365 = vadd.f32 0.0, %v1364
  %1366 = vdwg.mxu0
  %v1367 = vsel %vm887, %v1277, 0
  %1369 = vmatpush.msra.mxu0 0.0
  %1370 = vmatpush.msra.mxu0 0.0
  %1371 = vmatpush.msra.mxu0 0.0
  %1372 = vmatpush.msra.mxu0 0.0
  %1373 = vmatpush.msra.mxu0 0.0
  %1374 = vmatpush.msra.mxu0 0.0
  %1375 = vmatpush.msra.mxu0 0.0
  %1376 = vmatpush.msra.mxu0 0.0
  %1377 = vmatpush.msra.mxu0 0.0
  %1378 = vmatpush.msra.mxu0 0.0
  %1379 = vmatpush.msra.mxu0 0.0
  %1380 = vmatpush.msra.mxu0 0.0
  %1381 = vmatpush.msra.mxu0 0.0
  %1382 = vmatpush.msra.mxu0 0.0
  %1383 = vmatpush.msra.mxu0 %v1367
  %1384 = vmatpush.msra.mxu0 %v1275
  %1385 = vmatmul.f32.gmra.mxu0 %v914
  %v1386 = vpop.f32.mrf.mxu0
  %v1387 = vadd.f32 %v1362, %v1386
  %1388 = vmatmul.f32.gmra.mxu0 %v917
  %v1389 = vpop.f32.mrf.mxu0
  %v1390 = vadd.f32 %v1365, %v1389
  %1391 = vdwg.mxu0
  %1392 = vrot.lane.b32.xlu0 %v1275, 56
  %v1393 = vpop.permute.xlu0 %1392
  %1394 = vrot.lane.b32.xlu0 %v1277, 56
  %v1395 = vpop.permute.xlu0 %1394
  %v1397 = vsel %vm887, %v1395, 0
  %1399 = vmatpush.msra.mxu0 0.0
  %1400 = vmatpush.msra.mxu0 0.0
  %1401 = vmatpush.msra.mxu0 0.0
  %1402 = vmatpush.msra.mxu0 0.0
  %1403 = vmatpush.msra.mxu0 0.0
  %1404 = vmatpush.msra.mxu0 0.0
  %1405 = vmatpush.msra.mxu0 0.0
  %1406 = vmatpush.msra.mxu0 0.0
  %1407 = vmatpush.msra.mxu0 0.0
  %1408 = vmatpush.msra.mxu0 0.0
  %1409 = vmatpush.msra.mxu0 0.0
  %1410 = vmatpush.msra.mxu0 0.0
  %1411 = vmatpush.msra.mxu0 0.0
  %1412 = vmatpush.msra.mxu0 0.0
  %1413 = vmatpush.msra.mxu0 %v1397
  %1414 = vmatpush.msra.mxu0 %v1393
  %1415 = vmatmul.f32.gmra.mxu0 %v953
  %v1416 = vpop.f32.mrf.mxu0
  %v1417 = vadd.f32 0.0, %v1416
  %1418 = vmatmul.f32.gmra.mxu0 %v956
  %v1419 = vpop.f32.mrf.mxu0
  %v1420 = vadd.f32 0.0, %v1419
  %1421 = vdwg.mxu0
  %v1422 = vadd.f32 %v1387, %v1417
  %v1423 = vadd.f32 %v1390, %v1420
  %1426 = vrot.lane.b32.xlu0 %v1275, 20
  %v1427 = vpop.permute.xlu0 %1426
  %1428 = vrot.lane.b32.xlu0 %v1303, 20
  %v1429 = vpop.permute.xlu0 %1428
  %1430 = vrot.lane.b32.xlu0 %v1277, 20
  %v1431 = vpop.permute.xlu0 %1430
  %1432 = vrot.lane.b32.xlu0 %v1305, 20
  %v1433 = vpop.permute.xlu0 %1432
  %v1434 = vsel %vm998, %v1427, %v1429
  %v1435 = vsel %vm998, %v1431, %v1433
  %v1437 = vsel %vm887, %v1435, 0
  %1439 = vmatpush.msra.mxu0 0.0
  %1440 = vmatpush.msra.mxu0 0.0
  %1441 = vmatpush.msra.mxu0 0.0
  %1442 = vmatpush.msra.mxu0 0.0
  %1443 = vmatpush.msra.mxu0 0.0
  %1444 = vmatpush.msra.mxu0 0.0
  %1445 = vmatpush.msra.mxu0 0.0
  %1446 = vmatpush.msra.mxu0 0.0
  %1447 = vmatpush.msra.mxu0 0.0
  %1448 = vmatpush.msra.mxu0 0.0
  %1449 = vmatpush.msra.mxu0 0.0
  %1450 = vmatpush.msra.mxu0 0.0
  %1451 = vmatpush.msra.mxu0 0.0
  %1452 = vmatpush.msra.mxu0 0.0
  %1453 = vmatpush.msra.mxu0 %v1437
  %1454 = vmatpush.msra.mxu0 %v1434
  %1455 = vmatmul.f32.gmra.mxu0 %v1003
  %v1456 = vpop.f32.mrf.mxu0
  %v1457 = vadd.f32 0.0, %v1456
  %1458 = vmatmul.f32.gmra.mxu0 %v1006
  %v1459 = vpop.f32.mrf.mxu0
  %v1460 = vadd.f32 0.0, %v1459
  %1461 = vdwg.mxu0
  %v1462 = vadd.f32 %v1422, %v1457
  %v1463 = vadd.f32 %v1423, %v1460
  %1464 = vrot.lane.b32.xlu0 %v1303, 112
  %v1465 = vpop.permute.xlu0 %1464
  %1466 = vrot.lane.b32.xlu0 %v1305, 112
  %v1467 = vpop.permute.xlu0 %1466
  %v1469 = vsel %vm887, %v1467, 0
  %1471 = vmatpush.msra.mxu0 0.0
  %1472 = vmatpush.msra.mxu0 0.0
  %1473 = vmatpush.msra.mxu0 0.0
  %1474 = vmatpush.msra.mxu0 0.0
  %1475 = vmatpush.msra.mxu0 0.0
  %1476 = vmatpush.msra.mxu0 0.0
  %1477 = vmatpush.msra.mxu0 0.0
  %1478 = vmatpush.msra.mxu0 0.0
  %1479 = vmatpush.msra.mxu0 0.0
  %1480 = vmatpush.msra.mxu0 0.0
  %1481 = vmatpush.msra.mxu0 0.0
  %1482 = vmatpush.msra.mxu0 0.0
  %1483 = vmatpush.msra.mxu0 0.0
  %1484 = vmatpush.msra.mxu0 0.0
  %1485 = vmatpush.msra.mxu0 %v1469
  %1486 = vmatpush.msra.mxu0 %v1465
  %1487 = vmatmul.f32.gmra.mxu0 %v1044
  %v1488 = vpop.f32.mrf.mxu0
  %v1489 = vadd.f32 0.0, %v1488
  %1490 = vmatmul.f32.gmra.mxu0 %v1047
  %v1491 = vpop.f32.mrf.mxu0
  %v1492 = vadd.f32 0.0, %v1491
  %1493 = vdwg.mxu0
  %v1494 = vadd.f32 %v1462, %v1489
  %v1495 = vadd.f32 %v1463, %v1492
  %1496 = vrot.lane.b32.xlu0 %v1303, 76
  %v1497 = vpop.permute.xlu0 %1496
  %1498 = vrot.lane.b32.xlu0 %v1305, 76
  %v1499 = vpop.permute.xlu0 %1498
  %v1501 = vsel %vm887, %v1499, 0
  %1503 = vmatpush.msra.mxu0 0.0
  %1504 = vmatpush.msra.mxu0 0.0
  %1505 = vmatpush.msra.mxu0 0.0
  %1506 = vmatpush.msra.mxu0 0.0
  %1507 = vmatpush.msra.mxu0 0.0
  %1508 = vmatpush.msra.mxu0 0.0
  %1509 = vmatpush.msra.mxu0 0.0
  %1510 = vmatpush.msra.mxu0 0.0
  %1511 = vmatpush.msra.mxu0 0.0
  %1512 = vmatpush.msra.mxu0 0.0
  %1513 = vmatpush.msra.mxu0 0.0
  %1514 = vmatpush.msra.mxu0 0.0
  %1515 = vmatpush.msra.mxu0 0.0
  %1516 = vmatpush.msra.mxu0 0.0
  %1517 = vmatpush.msra.mxu0 %v1501
  %1518 = vmatpush.msra.mxu0 %v1497
  %1519 = vmatmul.f32.gmra.mxu0 %v1085
  %v1520 = vpop.f32.mrf.mxu0
  %v1521 = vadd.f32 0.0, %v1520
  %1522 = vmatmul.f32.gmra.mxu0 %v1088
  %v1523 = vpop.f32.mrf.mxu0
  %v1524 = vadd.f32 0.0, %v1523
  %1525 = vdwg.mxu0
  %v1526 = vadd.f32 %v1494, %v1521
  %v1527 = vadd.f32 %v1495, %v1524
  %1528 = vrot.lane.b32.xlu0 %v1303, 40
  %v1529 = vpop.permute.xlu0 %1528
  %1530 = vrot.lane.b32.xlu0 %v1305, 40
  %v1531 = vpop.permute.xlu0 %1530
  %v1533 = vsel %vm887, %v1531, 0
  %1535 = vmatpush.msra.mxu0 0.0
  %1536 = vmatpush.msra.mxu0 0.0
  %1537 = vmatpush.msra.mxu0 0.0
  %1538 = vmatpush.msra.mxu0 0.0
  %1539 = vmatpush.msra.mxu0 0.0
  %1540 = vmatpush.msra.mxu0 0.0
  %1541 = vmatpush.msra.mxu0 0.0
  %1542 = vmatpush.msra.mxu0 0.0
  %1543 = vmatpush.msra.mxu0 0.0
  %1544 = vmatpush.msra.mxu0 0.0
  %1545 = vmatpush.msra.mxu0 0.0
  %1546 = vmatpush.msra.mxu0 0.0
  %1547 = vmatpush.msra.mxu0 0.0
  %1548 = vmatpush.msra.mxu0 0.0
  %1549 = vmatpush.msra.mxu0 %v1533
  %1550 = vmatpush.msra.mxu0 %v1529
  %1551 = vmatmul.f32.gmra.mxu0 %v1126
  %v1552 = vpop.f32.mrf.mxu0
  %v1553 = vadd.f32 0.0, %v1552
  %1554 = vmatmul.f32.gmra.mxu0 %v1129
  %v1555 = vpop.f32.mrf.mxu0
  %v1556 = vadd.f32 0.0, %v1555
  %1557 = vdwg.mxu0
  %v1558 = vadd.f32 %v1526, %v1553
  %v1559 = vadd.f32 %v1527, %v1556
  %1562 = vrot.lane.b32.xlu0 %v1303, 4
  %v1563 = vpop.permute.xlu0 %1562
  %1564 = vrot.lane.b32.xlu0 %v1331, 4
  %v1565 = vpop.permute.xlu0 %1564
  %1566 = vrot.lane.b32.xlu0 %v1305, 4
  %v1567 = vpop.permute.xlu0 %1566
  %1568 = vrot.lane.b32.xlu0 %v1333, 4
  %v1569 = vpop.permute.xlu0 %1568
  %v1570 = vsel %vm1171, %v1563, %v1565
  %v1571 = vsel %vm1171, %v1567, %v1569
  %v1573 = vsel %vm887, %v1571, 0
  %1575 = vmatpush.msra.mxu0 0.0
  %1576 = vmatpush.msra.mxu0 0.0
  %1577 = vmatpush.msra.mxu0 0.0
  %1578 = vmatpush.msra.mxu0 0.0
  %1579 = vmatpush.msra.mxu0 0.0
  %1580 = vmatpush.msra.mxu0 0.0
  %1581 = vmatpush.msra.mxu0 0.0
  %1582 = vmatpush.msra.mxu0 0.0
  %1583 = vmatpush.msra.mxu0 0.0
  %1584 = vmatpush.msra.mxu0 0.0
  %1585 = vmatpush.msra.mxu0 0.0
  %1586 = vmatpush.msra.mxu0 0.0
  %1587 = vmatpush.msra.mxu0 0.0
  %1588 = vmatpush.msra.mxu0 0.0
  %1589 = vmatpush.msra.mxu0 %v1573
  %1590 = vmatpush.msra.mxu0 %v1570
  %1591 = vmatmul.f32.gmra.mxu0 %v1176
  %v1592 = vpop.f32.mrf.mxu0
  %v1593 = vadd.f32 0.0, %v1592
  %1594 = vmatmul.f32.gmra.mxu0 %v1179
  %v1595 = vpop.f32.mrf.mxu0
  %v1596 = vadd.f32 0.0, %v1595
  %1597 = vdwg.mxu0
  %v1598 = vadd.f32 %v1558, %v1593
  %v1599 = vadd.f32 %v1559, %v1596
  %1600 = vrot.lane.b32.xlu0 %v1331, 96
  %v1601 = vpop.permute.xlu0 %1600
  %1602 = vrot.lane.b32.xlu0 %v1333, 96
  %v1603 = vpop.permute.xlu0 %1602
  %v1605 = vsel %vm887, %v1603, 0
  %1607 = vmatpush.msra.mxu0 0.0
  %1608 = vmatpush.msra.mxu0 0.0
  %1609 = vmatpush.msra.mxu0 0.0
  %1610 = vmatpush.msra.mxu0 0.0
  %1611 = vmatpush.msra.mxu0 0.0
  %1612 = vmatpush.msra.mxu0 0.0
  %1613 = vmatpush.msra.mxu0 0.0
  %1614 = vmatpush.msra.mxu0 0.0
  %1615 = vmatpush.msra.mxu0 0.0
  %1616 = vmatpush.msra.mxu0 0.0
  %1617 = vmatpush.msra.mxu0 0.0
  %1618 = vmatpush.msra.mxu0 0.0
  %1619 = vmatpush.msra.mxu0 0.0
  %1620 = vmatpush.msra.mxu0 0.0
  %1621 = vmatpush.msra.mxu0 %v1605
  %1622 = vmatpush.msra.mxu0 %v1601
  %1623 = vmatmul.f32.gmra.mxu0 %v1217
  %v1624 = vpop.f32.mrf.mxu0
  %v1625 = vadd.f32 0.0, %v1624
  %1626 = vmatmul.f32.gmra.mxu0 %v1220
  %v1627 = vpop.f32.mrf.mxu0
  %v1628 = vadd.f32 0.0, %v1627
  %1629 = vdwg.mxu0
  %v1630 = vadd.f32 %v1598, %v1625
  %v1631 = vadd.f32 %v1599, %v1628
  %vm1632 = vcmask 293888
  %v1633 = vsel %vm1632, %v1247, 0.0
  %1634 = vadd.xlane.f32.xlu0 %v1633
  %v1635 = vpop.xlane.xlu0 %1634
  %vm1636 = vcmask 287744
  %v1637 = vsel %vm1636, %v1248, 0.0
  %1638 = vadd.xlane.f32.xlu0 %v1637
  %v1639 = vpop.xlane.xlu0 %1638
  %v1640 = vadd.f32 %v1635, 0.0
  %v1641 = vadd.f32 %v1639, 0.0
  %v1642 = vsel %vm1632, %v1630, 0.0
  %1643 = vadd.xlane.f32.xlu0 %v1642
  %v1644 = vpop.xlane.xlu0 %1643
  %v1645 = vsel %vm1636, %v1631, 0.0
  %1646 = vadd.xlane.f32.xlu0 %v1645
  %v1647 = vpop.xlane.xlu0 %1646
  %v1648 = vadd.f32 %v1640, %v1644
  %v1649 = vadd.f32 %v1641, %v1647
  %v1650 = vrcp.pop 72.0
  %v1651 = vmul.f32 72.0, %v1650
  %v1652 = vsub.f32 1.0, %v1651
  %v1653 = vmul.f32 %v1650, %v1652
  %v1654 = vadd.f32 %v1650, %v1653
  %vm1655 = vweird.f32 %v1650
  %v1656 = vsel %vm1655, %v1650, %v1654
  %v1657 = vmul.f32 %v1648, %v1656
  %v1658 = vmul.f32 %v1649, %v1656
  %v1659 = vsub.f32 %v1247, %v1657
  %v1660 = vsub.f32 %v1248, %v1658
  %v1661 = vmul.f32 %v1659, %v1659
  %v1662 = vmul.f32 %v1660, %v1660
  %v1663 = vsel %vm1632, %v1661, 0.0
  %1664 = vadd.xlane.f32.xlu0 %v1663
  %v1665 = vpop.xlane.xlu0 %1664
  %v1666 = vsel %vm1636, %v1662, 0.0
  %1667 = vadd.xlane.f32.xlu0 %v1666
  %v1668 = vpop.xlane.xlu0 %1667
  %v1669 = vadd.f32 %v1665, 0.0
  %v1670 = vadd.f32 %v1668, 0.0
  %v1671 = vsub.f32 %v1630, %v1657
  %v1672 = vsub.f32 %v1631, %v1658
  %v1673 = vmul.f32 %v1671, %v1671
  %v1674 = vmul.f32 %v1672, %v1672
  %v1675 = vsel %vm1632, %v1673, 0.0
  %1676 = vadd.xlane.f32.xlu0 %v1675
  %v1677 = vpop.xlane.xlu0 %1676
  %v1678 = vsel %vm1636, %v1674, 0.0
  %1679 = vadd.xlane.f32.xlu0 %v1678
  %v1680 = vpop.xlane.xlu0 %1679
  %v1681 = vadd.f32 %v1669, %v1677
  %v1682 = vadd.f32 %v1670, %v1680
  %v1683 = vmul.f32 %v1681, %v1656
  %v1684 = vmul.f32 %v1682, %v1656
  %v1685 = vadd.f32 %v1683, 1e-05
  %v1686 = vadd.f32 %v1684, 1e-05
  %v1687 = vrsqrt.pop %v1685
  %v1688 = vmul.f32 %v1687, %v1685
  %v1689 = vmul.f32 %v1688, %v1687
  %v1690 = vmul.f32 0.5, %v1689
  %v1691 = vsub.f32 1.5, %v1690
  %v1692 = vmul.f32 %v1687, %v1691
  %vm1693 = vweird.f32 %v1685
  %vm1694 = vweird.f32 %v1687
  %vm1695 = vmor %vm1693, %vm1694
  %v1696 = vsel %vm1695, %v1687, %v1692
  %v1697 = vrsqrt.pop %v1686
  %v1698 = vmul.f32 %v1697, %v1686
  %v1699 = vmul.f32 %v1698, %v1697
  %v1700 = vmul.f32 0.5, %v1699
  %v1701 = vsub.f32 1.5, %v1700
  %v1702 = vmul.f32 %v1697, %v1701
  %vm1703 = vweird.f32 %v1686
  %vm1704 = vweird.f32 %v1697
  %vm1705 = vmor %vm1703, %vm1704
  %v1706 = vsel %vm1705, %v1697, %v1702
  %v1707 = vmul.f32 %v1696, %v299
  %v1708 = vmul.f32 %v1706, %v300
  %1710 = vset.pattern.permute.xlu0 1
  %1711 = vperm.xlu0 %1710, %v1707
  %v1712 = vpop.permute.xlu0 %1711
  %1715 = vset.pattern.permute.xlu0 1
  %1716 = vperm.xlu0 %1715, %v1708
  %v1717 = vpop.permute.xlu0 %1716
  %v1719 = vmul.f32 %v1659, %v1712
  %v1720 = vmul.f32 %v1660, %v1717
  %1721 = vset.pattern.permute.xlu0 2
  %1722 = vperm.xlu0 %1721, %v299
  %v1723 = vpop.permute.xlu0 %1722
  %1725 = vset.pattern.permute.xlu0 2
  %1726 = vperm.xlu0 %1725, %v300
  %v1727 = vpop.permute.xlu0 %1726
  %v1729 = vadd.f32 %v1719, %v1723
  %v1730 = vadd.f32 %v1720, %v1727
  %v1731 = vmax.f32 %v1729, 0.0
  %v1732 = vmax.f32 %v1730, 0.0
  %v1733 = vmul.f32 %v1671, %v1712
  %v1734 = vmul.f32 %v1672, %v1717
  %v1735 = vadd.f32 %v1733, %v1723
  %v1736 = vadd.f32 %v1734, %v1727
  %v1737 = vmax.f32 %v1735, 0.0
  %v1738 = vmax.f32 %v1736, 0.0
  %s1739 = smul.u32 4, 10
  %s1740 = smul.u32 %s1739, 5
  %s1741 = smul.u32 %s1740, 3
  %s1742 = sshll.u32 %s1741, 4
  %1743 = dma.done %s132, %s1742
  %v1745 = vrot.slane %v1737, 7
  %vm1747 = vcmask 1040384
  %v1748 = vsel %vm1747, %v1731, %v1745
  %v1749 = vpack.c.bf16 %v1748, %v1748
  %v1750 = vld [vmem:[#allocation3] sm:$0xff]
  %v1751 = vld [vmem:[#allocation3 + $0x8] sm:$0xf]
  %v1752 = vld [vmem:[#allocation3 + $0xc] sm:$0xff]
  %v1753 = vld [vmem:[#allocation3 + $0x14] sm:$0xf]
  %v1754 = vld [vmem:[#allocation3 + $0x18] sm:$0xff]
  %v1755 = vld [vmem:[#allocation3 + $0x20] sm:$0xf]
  %v1756 = vld [vmem:[#allocation3 + $0x24] sm:$0xff]
  %v1757 = vld [vmem:[#allocation3 + $0x2c] sm:$0xf]
  %v1758 = vld [vmem:[#allocation3 + $0x30] sm:$0x33]
  %v1759 = vld [vmem:[#allocation3 + $0x38] sm:$0x3]
  %v1761 = vrot.slane %v1731, 1
  %v1763 = vsel %vm1747, %v1761, %v1737
  %v1764 = vpack.c.bf16 %v1763, %v1763
  %s1765 = scalar_lea.vmem [#allocation3], 60
  %v1766 = vld [vmem:[%s1765] sm:$0xff]
  %v1767 = vld [vmem:[%s1765 + $0x8] sm:$0xf]
  %v1768 = vld [vmem:[%s1765 + $0xc] sm:$0xff]
  %v1769 = vld [vmem:[%s1765 + $0x14] sm:$0xf]
  %v1770 = vld [vmem:[%s1765 + $0x18] sm:$0xff]
  %v1771 = vld [vmem:[%s1765 + $0x20] sm:$0xf]
  %v1772 = vld [vmem:[%s1765 + $0x24] sm:$0xff]
  %v1773 = vld [vmem:[%s1765 + $0x2c] sm:$0xf]
  %v1774 = vld [vmem:[%s1765 + $0x30] sm:$0x33]
  %v1775 = vld [vmem:[%s1765 + $0x38] sm:$0x3]
  %v1786 = vunpack.c.l.b16 %v1766
  %v1787 = vunpack.c.h.b16 %v1766
  %v1788 = vunpack.c.l.b16 %v1767
  %v1789 = vunpack.c.l.b16 %v1768
  %v1790 = vunpack.c.h.b16 %v1768
  %v1791 = vunpack.c.l.b16 %v1769
  %v1792 = vunpack.c.l.b16 %v1770
  %v1793 = vunpack.c.h.b16 %v1770
  %v1794 = vunpack.c.l.b16 %v1771
  %v1795 = vunpack.c.l.b16 %v1772
  %v1796 = vunpack.c.h.b16 %v1772
  %v1797 = vunpack.c.l.b16 %v1773
  %v1798 = vunpack.c.l.b16 %v1774
  %v1799 = vunpack.c.h.b16 %v1774
  %v1800 = vunpack.c.l.b16 %v1775
  %v1801 = vpack.c.b16 %v1789, %v1786
  %v1802 = vpack.c.b16 %v1790, %v1787
  %v1803 = vpack.c.b16 %v1791, %v1788
  %v1804 = vpack.c.b16 %v1795, %v1792
  %v1805 = vpack.c.b16 %v1796, %v1793
  %v1806 = vpack.c.b16 %v1797, %v1794
  %v1807 = vpack.c.b16 %v1798, %v1798
  %v1808 = vpack.c.b16 %v1799, %v1799
  %v1809 = vpack.c.b16 %v1800, %v1800
  %v1817 = vsel %vm1632, %v1764, 0
  %v1820 = vsel %vm887, %v1807, 0
  %v1823 = vsel %vm887, %v1808, 0
  %v1826 = vsel %vm887, %v1809, 0
  %1828 = vmatpush.bf16.msra.mxu0 0
  %1829 = vmatpush.bf16.msra.mxu0 0
  %1830 = vmatpush.bf16.msra.mxu0 0
  %1831 = vmatpush.bf16.msra.mxu0 0
  %1832 = vmatpush.bf16.msra.mxu0 0
  %1833 = vmatpush.bf16.msra.mxu0 %v1820
  %1834 = vmatpush.bf16.msra.mxu0 %v1804
  %1835 = vmatpush.bf16.msra.mxu0 %v1801
  %1836 = vmatmul.bf16.gmra.mxu0 %v1817
  %v1837 = vpop.f32.mrf.mxu0
  %v1838 = vadd.f32 0.0, %v1837
  %v1839 = vpop.f32.mrf.mxu0
  %1840 = vdwg.mxu0
  %1841 = vmatpush.bf16.msra.mxu0 0
  %1842 = vmatpush.bf16.msra.mxu0 0
  %1843 = vmatpush.bf16.msra.mxu0 0
  %1844 = vmatpush.bf16.msra.mxu0 0
  %1845 = vmatpush.bf16.msra.mxu0 0
  %1846 = vmatpush.bf16.msra.mxu0 %v1823
  %1847 = vmatpush.bf16.msra.mxu0 %v1805
  %1848 = vmatpush.bf16.msra.mxu0 %v1802
  %1849 = vmatmul.bf16.gmra.mxu0 %v1817
  %v1850 = vpop.f32.mrf.mxu0
  %v1851 = vadd.f32 0.0, %v1850
  %v1852 = vpop.f32.mrf.mxu0
  %1853 = vdwg.mxu0
  %1854 = vmatpush.bf16.msra.mxu0 0
  %1855 = vmatpush.bf16.msra.mxu0 0
  %1856 = vmatpush.bf16.msra.mxu0 0
  %1857 = vmatpush.bf16.msra.mxu0 0
  %1858 = vmatpush.bf16.msra.mxu0 0
  %1859 = vmatpush.bf16.msra.mxu0 %v1826
  %1860 = vmatpush.bf16.msra.mxu0 %v1806
  %1861 = vmatpush.bf16.msra.mxu0 %v1803
  %1862 = vmatmul.bf16.gmra.mxu0 %v1817
  %v1863 = vpop.f32.mrf.mxu0
  %v1864 = vadd.f32 0.0, %v1863
  %v1865 = vpop.f32.mrf.mxu0
  %1866 = vdwg.mxu0
  %v1877 = vunpack.c.l.b16 %v1750
  %v1878 = vunpack.c.h.b16 %v1750
  %v1879 = vunpack.c.l.b16 %v1751
  %v1880 = vunpack.c.l.b16 %v1752
  %v1881 = vunpack.c.h.b16 %v1752
  %v1882 = vunpack.c.l.b16 %v1753
  %v1883 = vunpack.c.l.b16 %v1754
  %v1884 = vunpack.c.h.b16 %v1754
  %v1885 = vunpack.c.l.b16 %v1755
  %v1886 = vunpack.c.l.b16 %v1756
  %v1887 = vunpack.c.h.b16 %v1756
  %v1888 = vunpack.c.l.b16 %v1757
  %v1889 = vunpack.c.l.b16 %v1758
  %v1890 = vunpack.c.h.b16 %v1758
  %v1891 = vunpack.c.l.b16 %v1759
  %v1892 = vpack.c.b16 %v1880, %v1877
  %v1893 = vpack.c.b16 %v1881, %v1878
  %v1894 = vpack.c.b16 %v1882, %v1879
  %v1895 = vpack.c.b16 %v1886, %v1883
  %v1896 = vpack.c.b16 %v1887, %v1884
  %v1897 = vpack.c.b16 %v1888, %v1885
  %v1898 = vpack.c.b16 %v1889, %v1889
  %v1899 = vpack.c.b16 %v1890, %v1890
  %v1900 = vpack.c.b16 %v1891, %v1891
  %v1908 = vsel %vm1632, %v1749, 0
  %v1911 = vsel %vm887, %v1898, 0
  %v1914 = vsel %vm887, %v1899, 0
  %v1917 = vsel %vm887, %v1900, 0
  %1919 = vmatpush.bf16.msra.mxu0 0
  %1920 = vmatpush.bf16.msra.mxu0 0
  %1921 = vmatpush.bf16.msra.mxu0 0
  %1922 = vmatpush.bf16.msra.mxu0 0
  %1923 = vmatpush.bf16.msra.mxu0 0
  %1924 = vmatpush.bf16.msra.mxu0 %v1911
  %1925 = vmatpush.bf16.msra.mxu0 %v1895
  %1926 = vmatpush.bf16.msra.mxu0 %v1892
  %1927 = vmatmul.bf16.gmra.mxu0 %v1908
  %v1928 = vpop.f32.mrf.mxu0
  %v1929 = vadd.f32 %v1838, %v1928
  %v1930 = vpop.f32.mrf.mxu0
  %1931 = vdwg.mxu0
  %1932 = vmatpush.bf16.msra.mxu0 0
  %1933 = vmatpush.bf16.msra.mxu0 0
  %1934 = vmatpush.bf16.msra.mxu0 0
  %1935 = vmatpush.bf16.msra.mxu0 0
  %1936 = vmatpush.bf16.msra.mxu0 0
  %1937 = vmatpush.bf16.msra.mxu0 %v1914
  %1938 = vmatpush.bf16.msra.mxu0 %v1896
  %1939 = vmatpush.bf16.msra.mxu0 %v1893
  %1940 = vmatmul.bf16.gmra.mxu0 %v1908
  %v1941 = vpop.f32.mrf.mxu0
  %v1942 = vadd.f32 %v1851, %v1941
  %v1943 = vpop.f32.mrf.mxu0
  %1944 = vdwg.mxu0
  %1945 = vmatpush.bf16.msra.mxu0 0
  %1946 = vmatpush.bf16.msra.mxu0 0
  %1947 = vmatpush.bf16.msra.mxu0 0
  %1948 = vmatpush.bf16.msra.mxu0 0
  %1949 = vmatpush.bf16.msra.mxu0 0
  %1950 = vmatpush.bf16.msra.mxu0 %v1917
  %1951 = vmatpush.bf16.msra.mxu0 %v1897
  %1952 = vmatpush.bf16.msra.mxu0 %v1894
  %1953 = vmatmul.bf16.gmra.mxu0 %v1908
  %v1954 = vpop.f32.mrf.mxu0
  %v1955 = vadd.f32 %v1864, %v1954
  %v1956 = vpop.f32.mrf.mxu0
  %1957 = vdwg.mxu0
  %v1958 = vrot.slane %v1731, 2
  %v1960 = vrot.slane %v1737, 1
  %v1962 = vsel %vm1747, %v1958, %v1960
  %v1963 = vpack.c.bf16 %v1962, %v1962
  %s1964 = scalar_lea.vmem [#allocation3], 120
  %v1965 = vld [vmem:[%s1964] sm:$0xff]
  %v1966 = vld [vmem:[%s1964 + $0x8] sm:$0xf]
  %v1967 = vld [vmem:[%s1964 + $0xc] sm:$0xff]
  %v1968 = vld [vmem:[%s1964 + $0x14] sm:$0xf]
  %v1969 = vld [vmem:[%s1964 + $0x18] sm:$0xff]
  %v1970 = vld [vmem:[%s1964 + $0x20] sm:$0xf]
  %v1971 = vld [vmem:[%s1964 + $0x24] sm:$0xff]
  %v1972 = vld [vmem:[%s1964 + $0x2c] sm:$0xf]
  %v1973 = vld [vmem:[%s1964 + $0x30] sm:$0x33]
  %v1974 = vld [vmem:[%s1964 + $0x38] sm:$0x3]
  %v1985 = vunpack.c.l.b16 %v1965
  %v1986 = vunpack.c.h.b16 %v1965
  %v1987 = vunpack.c.l.b16 %v1966
  %v1988 = vunpack.c.l.b16 %v1967
  %v1989 = vunpack.c.h.b16 %v1967
  %v1990 = vunpack.c.l.b16 %v1968
  %v1991 = vunpack.c.l.b16 %v1969
  %v1992 = vunpack.c.h.b16 %v1969
  %v1993 = vunpack.c.l.b16 %v1970
  %v1994 = vunpack.c.l.b16 %v1971
  %v1995 = vunpack.c.h.b16 %v1971
  %v1996 = vunpack.c.l.b16 %v1972
  %v1997 = vunpack.c.l.b16 %v1973
  %v1998 = vunpack.c.h.b16 %v1973
  %v1999 = vunpack.c.l.b16 %v1974
  %v2000 = vpack.c.b16 %v1988, %v1985
  %v2001 = vpack.c.b16 %v1989, %v1986
  %v2002 = vpack.c.b16 %v1990, %v1987
  %v2003 = vpack.c.b16 %v1994, %v1991
  %v2004 = vpack.c.b16 %v1995, %v1992
  %v2005 = vpack.c.b16 %v1996, %v1993
  %v2006 = vpack.c.b16 %v1997, %v1997
  %v2007 = vpack.c.b16 %v1998, %v1998
  %v2008 = vpack.c.b16 %v1999, %v1999
  %v2016 = vsel %vm1632, %v1963, 0
  %v2019 = vsel %vm887, %v2006, 0
  %v2022 = vsel %vm887, %v2007, 0
  %v2025 = vsel %vm887, %v2008, 0
  %2027 = vmatpush.bf16.msra.mxu0 0
  %2028 = vmatpush.bf16.msra.mxu0 0
  %2029 = vmatpush.bf16.msra.mxu0 0
  %2030 = vmatpush.bf16.msra.mxu0 0
  %2031 = vmatpush.bf16.msra.mxu0 0
  %2032 = vmatpush.bf16.msra.mxu0 %v2019
  %2033 = vmatpush.bf16.msra.mxu0 %v2003
  %2034 = vmatpush.bf16.msra.mxu0 %v2000
  %2035 = vmatmul.bf16.gmra.mxu0 %v2016
  %v2036 = vpop.f32.mrf.mxu0
  %v2037 = vadd.f32 0.0, %v2036
  %v2038 = vpop.f32.mrf.mxu0
  %2039 = vdwg.mxu0
  %2040 = vmatpush.bf16.msra.mxu0 0
  %2041 = vmatpush.bf16.msra.mxu0 0
  %2042 = vmatpush.bf16.msra.mxu0 0
  %2043 = vmatpush.bf16.msra.mxu0 0
  %2044 = vmatpush.bf16.msra.mxu0 0
  %2045 = vmatpush.bf16.msra.mxu0 %v2022
  %2046 = vmatpush.bf16.msra.mxu0 %v2004
  %2047 = vmatpush.bf16.msra.mxu0 %v2001
  %2048 = vmatmul.bf16.gmra.mxu0 %v2016
  %v2049 = vpop.f32.mrf.mxu0
  %v2050 = vadd.f32 0.0, %v2049
  %v2051 = vpop.f32.mrf.mxu0
  %2052 = vdwg.mxu0
  %2053 = vmatpush.bf16.msra.mxu0 0
  %2054 = vmatpush.bf16.msra.mxu0 0
  %2055 = vmatpush.bf16.msra.mxu0 0
  %2056 = vmatpush.bf16.msra.mxu0 0
  %2057 = vmatpush.bf16.msra.mxu0 0
  %2058 = vmatpush.bf16.msra.mxu0 %v2025
  %2059 = vmatpush.bf16.msra.mxu0 %v2005
  %2060 = vmatpush.bf16.msra.mxu0 %v2002
  %2061 = vmatmul.bf16.gmra.mxu0 %v2016
  %v2062 = vpop.f32.mrf.mxu0
  %v2063 = vadd.f32 0.0, %v2062
  %v2064 = vpop.f32.mrf.mxu0
  %2065 = vdwg.mxu0
  %v2066 = vadd.f32 %v1929, %v2037
  %v2067 = vadd.f32 %v1942, %v2050
  %v2068 = vadd.f32 %v1955, %v2063
  %v2069 = vrot.slane %v1731, 3
  %v2071 = vrot.slane %v1737, 2
  %v2073 = vsel %vm1747, %v2069, %v2071
  %v2074 = vpack.c.bf16 %v2073, %v2073
  %s2075 = scalar_lea.vmem [#allocation3], 180
  %v2076 = vld [vmem:[%s2075] sm:$0xff]
  %v2077 = vld [vmem:[%s2075 + $0x8] sm:$0xf]
  %v2078 = vld [vmem:[%s2075 + $0xc] sm:$0xff]
  %v2079 = vld [vmem:[%s2075 + $0x14] sm:$0xf]
  %v2080 = vld [vmem:[%s2075 + $0x18] sm:$0xff]
  %v2081 = vld [vmem:[%s2075 + $0x20] sm:$0xf]
  %v2082 = vld [vmem:[%s2075 + $0x24] sm:$0xff]
  %v2083 = vld [vmem:[%s2075 + $0x2c] sm:$0xf]
  %v2084 = vld [vmem:[%s2075 + $0x30] sm:$0x33]
  %v2085 = vld [vmem:[%s2075 + $0x38] sm:$0x3]
  %v2096 = vunpack.c.l.b16 %v2076
  %v2097 = vunpack.c.h.b16 %v2076
  %v2098 = vunpack.c.l.b16 %v2077
  %v2099 = vunpack.c.l.b16 %v2078
  %v2100 = vunpack.c.h.b16 %v2078
  %v2101 = vunpack.c.l.b16 %v2079
  %v2102 = vunpack.c.l.b16 %v2080
  %v2103 = vunpack.c.h.b16 %v2080
  %v2104 = vunpack.c.l.b16 %v2081
  %v2105 = vunpack.c.l.b16 %v2082
  %v2106 = vunpack.c.h.b16 %v2082
  %v2107 = vunpack.c.l.b16 %v2083
  %v2108 = vunpack.c.l.b16 %v2084
  %v2109 = vunpack.c.h.b16 %v2084
  %v2110 = vunpack.c.l.b16 %v2085
  %v2111 = vpack.c.b16 %v2099, %v2096
  %v2112 = vpack.c.b16 %v2100, %v2097
  %v2113 = vpack.c.b16 %v2101, %v2098
  %v2114 = vpack.c.b16 %v2105, %v2102
  %v2115 = vpack.c.b16 %v2106, %v2103
  %v2116 = vpack.c.b16 %v2107, %v2104
  %v2117 = vpack.c.b16 %v2108, %v2108
  %v2118 = vpack.c.b16 %v2109, %v2109
  %v2119 = vpack.c.b16 %v2110, %v2110
  %v2127 = vsel %vm1632, %v2074, 0
  %v2130 = vsel %vm887, %v2117, 0
  %v2133 = vsel %vm887, %v2118, 0
  %v2136 = vsel %vm887, %v2119, 0
  %2138 = vmatpush.bf16.msra.mxu0 0
  %2139 = vmatpush.bf16.msra.mxu0 0
  %2140 = vmatpush.bf16.msra.mxu0 0
  %2141 = vmatpush.bf16.msra.mxu0 0
  %2142 = vmatpush.bf16.msra.mxu0 0
  %2143 = vmatpush.bf16.msra.mxu0 %v2130
  %2144 = vmatpush.bf16.msra.mxu0 %v2114
  %2145 = vmatpush.bf16.msra.mxu0 %v2111
  %2146 = vmatmul.bf16.gmra.mxu0 %v2127
  %v2147 = vpop.f32.mrf.mxu0
  %v2148 = vadd.f32 0.0, %v2147
  %v2149 = vpop.f32.mrf.mxu0
  %2150 = vdwg.mxu0
  %2151 = vmatpush.bf16.msra.mxu0 0
  %2152 = vmatpush.bf16.msra.mxu0 0
  %2153 = vmatpush.bf16.msra.mxu0 0
  %2154 = vmatpush.bf16.msra.mxu0 0
  %2155 = vmatpush.bf16.msra.mxu0 0
  %2156 = vmatpush.bf16.msra.mxu0 %v2133
  %2157 = vmatpush.bf16.msra.mxu0 %v2115
  %2158 = vmatpush.bf16.msra.mxu0 %v2112
  %2159 = vmatmul.bf16.gmra.mxu0 %v2127
  %v2160 = vpop.f32.mrf.mxu0
  %v2161 = vadd.f32 0.0, %v2160
  %v2162 = vpop.f32.mrf.mxu0
  %2163 = vdwg.mxu0
  %2164 = vmatpush.bf16.msra.mxu0 0
  %2165 = vmatpush.bf16.msra.mxu0 0
  %2166 = vmatpush.bf16.msra.mxu0 0
  %2167 = vmatpush.bf16.msra.mxu0 0
  %2168 = vmatpush.bf16.msra.mxu0 0
  %2169 = vmatpush.bf16.msra.mxu0 %v2136
  %2170 = vmatpush.bf16.msra.mxu0 %v2116
  %2171 = vmatpush.bf16.msra.mxu0 %v2113
  %2172 = vmatmul.bf16.gmra.mxu0 %v2127
  %v2173 = vpop.f32.mrf.mxu0
  %v2174 = vadd.f32 0.0, %v2173
  %v2175 = vpop.f32.mrf.mxu0
  %2176 = vdwg.mxu0
  %v2177 = vadd.f32 %v2066, %v2148
  %v2178 = vadd.f32 %v2067, %v2161
  %v2179 = vadd.f32 %v2068, %v2174
  %v2180 = vrot.slane %v1731, 4
  %v2182 = vrot.slane %v1737, 3
  %v2184 = vsel %vm1747, %v2180, %v2182
  %v2185 = vpack.c.bf16 %v2184, %v2184
  %s2186 = scalar_lea.vmem [#allocation3], 240
  %v2187 = vld [vmem:[%s2186] sm:$0xff]
  %v2188 = vld [vmem:[%s2186 + $0x8] sm:$0xf]
  %v2189 = vld [vmem:[%s2186 + $0xc] sm:$0xff]
  %v2190 = vld [vmem:[%s2186 + $0x14] sm:$0xf]
  %v2191 = vld [vmem:[%s2186 + $0x18] sm:$0xff]
  %v2192 = vld [vmem:[%s2186 + $0x20] sm:$0xf]
  %v2193 = vld [vmem:[%s2186 + $0x24] sm:$0xff]
  %v2194 = vld [vmem:[%s2186 + $0x2c] sm:$0xf]
  %v2195 = vld [vmem:[%s2186 + $0x30] sm:$0x33]
  %v2196 = vld [vmem:[%s2186 + $0x38] sm:$0x3]
  %v2207 = vunpack.c.l.b16 %v2187
  %v2208 = vunpack.c.h.b16 %v2187
  %v2209 = vunpack.c.l.b16 %v2188
  %v2210 = vunpack.c.l.b16 %v2189
  %v2211 = vunpack.c.h.b16 %v2189
  %v2212 = vunpack.c.l.b16 %v2190
  %v2213 = vunpack.c.l.b16 %v2191
  %v2214 = vunpack.c.h.b16 %v2191
  %v2215 = vunpack.c.l.b16 %v2192
  %v2216 = vunpack.c.l.b16 %v2193
  %v2217 = vunpack.c.h.b16 %v2193
  %v2218 = vunpack.c.l.b16 %v2194
  %v2219 = vunpack.c.l.b16 %v2195
  %v2220 = vunpack.c.h.b16 %v2195
  %v2221 = vunpack.c.l.b16 %v2196
  %v2222 = vpack.c.b16 %v2210, %v2207
  %v2223 = vpack.c.b16 %v2211, %v2208
  %v2224 = vpack.c.b16 %v2212, %v2209
  %v2225 = vpack.c.b16 %v2216, %v2213
  %v2226 = vpack.c.b16 %v2217, %v2214
  %v2227 = vpack.c.b16 %v2218, %v2215
  %v2228 = vpack.c.b16 %v2219, %v2219
  %v2229 = vpack.c.b16 %v2220, %v2220
  %v2230 = vpack.c.b16 %v2221, %v2221
  %v2238 = vsel %vm1632, %v2185, 0
  %v2241 = vsel %vm887, %v2228, 0
  %v2244 = vsel %vm887, %v2229, 0
  %v2247 = vsel %vm887, %v2230, 0
  %2249 = vmatpush.bf16.msra.mxu0 0
  %2250 = vmatpush.bf16.msra.mxu0 0
  %2251 = vmatpush.bf16.msra.mxu0 0
  %2252 = vmatpush.bf16.msra.mxu0 0
  %2253 = vmatpush.bf16.msra.mxu0 0
  %2254 = vmatpush.bf16.msra.mxu0 %v2241
  %2255 = vmatpush.bf16.msra.mxu0 %v2225
  %2256 = vmatpush.bf16.msra.mxu0 %v2222
  %2257 = vmatmul.bf16.gmra.mxu0 %v2238
  %v2258 = vpop.f32.mrf.mxu0
  %v2259 = vadd.f32 0.0, %v2258
  %v2260 = vpop.f32.mrf.mxu0
  %2261 = vdwg.mxu0
  %2262 = vmatpush.bf16.msra.mxu0 0
  %2263 = vmatpush.bf16.msra.mxu0 0
  %2264 = vmatpush.bf16.msra.mxu0 0
  %2265 = vmatpush.bf16.msra.mxu0 0
  %2266 = vmatpush.bf16.msra.mxu0 0
  %2267 = vmatpush.bf16.msra.mxu0 %v2244
  %2268 = vmatpush.bf16.msra.mxu0 %v2226
  %2269 = vmatpush.bf16.msra.mxu0 %v2223
  %2270 = vmatmul.bf16.gmra.mxu0 %v2238
  %v2271 = vpop.f32.mrf.mxu0
  %v2272 = vadd.f32 0.0, %v2271
  %v2273 = vpop.f32.mrf.mxu0
  %2274 = vdwg.mxu0
  %2275 = vmatpush.bf16.msra.mxu0 0
  %2276 = vmatpush.bf16.msra.mxu0 0
  %2277 = vmatpush.bf16.msra.mxu0 0
  %2278 = vmatpush.bf16.msra.mxu0 0
  %2279 = vmatpush.bf16.msra.mxu0 0
  %2280 = vmatpush.bf16.msra.mxu0 %v2247
  %2281 = vmatpush.bf16.msra.mxu0 %v2227
  %2282 = vmatpush.bf16.msra.mxu0 %v2224
  %2283 = vmatmul.bf16.gmra.mxu0 %v2238
  %v2284 = vpop.f32.mrf.mxu0
  %v2285 = vadd.f32 0.0, %v2284
  %v2286 = vpop.f32.mrf.mxu0
  %2287 = vdwg.mxu0
  %v2288 = vadd.f32 %v2177, %v2259
  %v2289 = vadd.f32 %v2178, %v2272
  %v2290 = vadd.f32 %v2179, %v2285
  %v2291 = vrot.slane %v1731, 5
  %v2293 = vrot.slane %v1737, 4
  %v2295 = vsel %vm1747, %v2291, %v2293
  %v2296 = vpack.c.bf16 %v2295, %v2295
  %s2297 = scalar_lea.vmem [#allocation3], 300
  %v2298 = vld [vmem:[%s2297] sm:$0xff]
  %v2299 = vld [vmem:[%s2297 + $0x8] sm:$0xf]
  %v2300 = vld [vmem:[%s2297 + $0xc] sm:$0xff]
  %v2301 = vld [vmem:[%s2297 + $0x14] sm:$0xf]
  %v2302 = vld [vmem:[%s2297 + $0x18] sm:$0xff]
  %v2303 = vld [vmem:[%s2297 + $0x20] sm:$0xf]
  %v2304 = vld [vmem:[%s2297 + $0x24] sm:$0xff]
  %v2305 = vld [vmem:[%s2297 + $0x2c] sm:$0xf]
  %v2306 = vld [vmem:[%s2297 + $0x30] sm:$0x33]
  %v2307 = vld [vmem:[%s2297 + $0x38] sm:$0x3]
  %v2318 = vunpack.c.l.b16 %v2298
  %v2319 = vunpack.c.h.b16 %v2298
  %v2320 = vunpack.c.l.b16 %v2299
  %v2321 = vunpack.c.l.b16 %v2300
  %v2322 = vunpack.c.h.b16 %v2300
  %v2323 = vunpack.c.l.b16 %v2301
  %v2324 = vunpack.c.l.b16 %v2302
  %v2325 = vunpack.c.h.b16 %v2302
  %v2326 = vunpack.c.l.b16 %v2303
  %v2327 = vunpack.c.l.b16 %v2304
  %v2328 = vunpack.c.h.b16 %v2304
  %v2329 = vunpack.c.l.b16 %v2305
  %v2330 = vunpack.c.l.b16 %v2306
  %v2331 = vunpack.c.h.b16 %v2306
  %v2332 = vunpack.c.l.b16 %v2307
  %v2333 = vpack.c.b16 %v2321, %v2318
  %v2334 = vpack.c.b16 %v2322, %v2319
  %v2335 = vpack.c.b16 %v2323, %v2320
  %v2336 = vpack.c.b16 %v2327, %v2324
  %v2337 = vpack.c.b16 %v2328, %v2325
  %v2338 = vpack.c.b16 %v2329, %v2326
  %v2339 = vpack.c.b16 %v2330, %v2330
  %v2340 = vpack.c.b16 %v2331, %v2331
  %v2341 = vpack.c.b16 %v2332, %v2332
  %v2349 = vsel %vm1632, %v2296, 0
  %v2352 = vsel %vm887, %v2339, 0
  %v2355 = vsel %vm887, %v2340, 0
  %v2358 = vsel %vm887, %v2341, 0
  %2360 = vmatpush.bf16.msra.mxu0 0
  %2361 = vmatpush.bf16.msra.mxu0 0
  %2362 = vmatpush.bf16.msra.mxu0 0
  %2363 = vmatpush.bf16.msra.mxu0 0
  %2364 = vmatpush.bf16.msra.mxu0 0
  %2365 = vmatpush.bf16.msra.mxu0 %v2352
  %2366 = vmatpush.bf16.msra.mxu0 %v2336
  %2367 = vmatpush.bf16.msra.mxu0 %v2333
  %2368 = vmatmul.bf16.gmra.mxu0 %v2349
  %v2369 = vpop.f32.mrf.mxu0
  %v2370 = vadd.f32 0.0, %v2369
  %v2371 = vpop.f32.mrf.mxu0
  %2372 = vdwg.mxu0
  %2373 = vmatpush.bf16.msra.mxu0 0
  %2374 = vmatpush.bf16.msra.mxu0 0
  %2375 = vmatpush.bf16.msra.mxu0 0
  %2376 = vmatpush.bf16.msra.mxu0 0
  %2377 = vmatpush.bf16.msra.mxu0 0
  %2378 = vmatpush.bf16.msra.mxu0 %v2355
  %2379 = vmatpush.bf16.msra.mxu0 %v2337
  %2380 = vmatpush.bf16.msra.mxu0 %v2334
  %2381 = vmatmul.bf16.gmra.mxu0 %v2349
  %v2382 = vpop.f32.mrf.mxu0
  %v2383 = vadd.f32 0.0, %v2382
  %v2384 = vpop.f32.mrf.mxu0
  %2385 = vdwg.mxu0
  %2386 = vmatpush.bf16.msra.mxu0 0
  %2387 = vmatpush.bf16.msra.mxu0 0
  %2388 = vmatpush.bf16.msra.mxu0 0
  %2389 = vmatpush.bf16.msra.mxu0 0
  %2390 = vmatpush.bf16.msra.mxu0 0
  %2391 = vmatpush.bf16.msra.mxu0 %v2358
  %2392 = vmatpush.bf16.msra.mxu0 %v2338
  %2393 = vmatpush.bf16.msra.mxu0 %v2335
  %2394 = vmatmul.bf16.gmra.mxu0 %v2349
  %v2395 = vpop.f32.mrf.mxu0
  %v2396 = vadd.f32 0.0, %v2395
  %v2397 = vpop.f32.mrf.mxu0
  %2398 = vdwg.mxu0
  %v2399 = vadd.f32 %v2288, %v2370
  %v2400 = vadd.f32 %v2289, %v2383
  %v2401 = vadd.f32 %v2290, %v2396
  %v2402 = vrot.slane %v1731, 6
  %v2404 = vrot.slane %v1737, 5
  %v2406 = vsel %vm1747, %v2402, %v2404
  %v2407 = vpack.c.bf16 %v2406, %v2406
  %s2408 = scalar_lea.vmem [#allocation3], 360
  %v2409 = vld [vmem:[%s2408] sm:$0xff]
  %v2410 = vld [vmem:[%s2408 + $0x8] sm:$0xf]
  %v2411 = vld [vmem:[%s2408 + $0xc] sm:$0xff]
  %v2412 = vld [vmem:[%s2408 + $0x14] sm:$0xf]
  %v2413 = vld [vmem:[%s2408 + $0x18] sm:$0xff]
  %v2414 = vld [vmem:[%s2408 + $0x20] sm:$0xf]
  %v2415 = vld [vmem:[%s2408 + $0x24] sm:$0xff]
  %v2416 = vld [vmem:[%s2408 + $0x2c] sm:$0xf]
  %v2417 = vld [vmem:[%s2408 + $0x30] sm:$0x33]
  %v2418 = vld [vmem:[%s2408 + $0x38] sm:$0x3]
  %v2429 = vunpack.c.l.b16 %v2409
  %v2430 = vunpack.c.h.b16 %v2409
  %v2431 = vunpack.c.l.b16 %v2410
  %v2432 = vunpack.c.l.b16 %v2411
  %v2433 = vunpack.c.h.b16 %v2411
  %v2434 = vunpack.c.l.b16 %v2412
  %v2435 = vunpack.c.l.b16 %v2413
  %v2436 = vunpack.c.h.b16 %v2413
  %v2437 = vunpack.c.l.b16 %v2414
  %v2438 = vunpack.c.l.b16 %v2415
  %v2439 = vunpack.c.h.b16 %v2415
  %v2440 = vunpack.c.l.b16 %v2416
  %v2441 = vunpack.c.l.b16 %v2417
  %v2442 = vunpack.c.h.b16 %v2417
  %v2443 = vunpack.c.l.b16 %v2418
  %v2444 = vpack.c.b16 %v2432, %v2429
  %v2445 = vpack.c.b16 %v2433, %v2430
  %v2446 = vpack.c.b16 %v2434, %v2431
  %v2447 = vpack.c.b16 %v2438, %v2435
  %v2448 = vpack.c.b16 %v2439, %v2436
  %v2449 = vpack.c.b16 %v2440, %v2437
  %v2450 = vpack.c.b16 %v2441, %v2441
  %v2451 = vpack.c.b16 %v2442, %v2442
  %v2452 = vpack.c.b16 %v2443, %v2443
  %v2460 = vsel %vm1632, %v2407, 0
  %v2463 = vsel %vm887, %v2450, 0
  %v2466 = vsel %vm887, %v2451, 0
  %v2469 = vsel %vm887, %v2452, 0
  %2471 = vmatpush.bf16.msra.mxu0 0
  %2472 = vmatpush.bf16.msra.mxu0 0
  %2473 = vmatpush.bf16.msra.mxu0 0
  %2474 = vmatpush.bf16.msra.mxu0 0
  %2475 = vmatpush.bf16.msra.mxu0 0
  %2476 = vmatpush.bf16.msra.mxu0 %v2463
  %2477 = vmatpush.bf16.msra.mxu0 %v2447
  %2478 = vmatpush.bf16.msra.mxu0 %v2444
  %2479 = vmatmul.bf16.gmra.mxu0 %v2460
  %v2480 = vpop.f32.mrf.mxu0
  %v2481 = vadd.f32 0.0, %v2480
  %v2482 = vpop.f32.mrf.mxu0
  %2483 = vdwg.mxu0
  %2484 = vmatpush.bf16.msra.mxu0 0
  %2485 = vmatpush.bf16.msra.mxu0 0
  %2486 = vmatpush.bf16.msra.mxu0 0
  %2487 = vmatpush.bf16.msra.mxu0 0
  %2488 = vmatpush.bf16.msra.mxu0 0
  %2489 = vmatpush.bf16.msra.mxu0 %v2466
  %2490 = vmatpush.bf16.msra.mxu0 %v2448
  %2491 = vmatpush.bf16.msra.mxu0 %v2445
  %2492 = vmatmul.bf16.gmra.mxu0 %v2460
  %v2493 = vpop.f32.mrf.mxu0
  %v2494 = vadd.f32 0.0, %v2493
  %v2495 = vpop.f32.mrf.mxu0
  %2496 = vdwg.mxu0
  %2497 = vmatpush.bf16.msra.mxu0 0
  %2498 = vmatpush.bf16.msra.mxu0 0
  %2499 = vmatpush.bf16.msra.mxu0 0
  %2500 = vmatpush.bf16.msra.mxu0 0
  %2501 = vmatpush.bf16.msra.mxu0 0
  %2502 = vmatpush.bf16.msra.mxu0 %v2469
  %2503 = vmatpush.bf16.msra.mxu0 %v2449
  %2504 = vmatpush.bf16.msra.mxu0 %v2446
  %2505 = vmatmul.bf16.gmra.mxu0 %v2460
  %v2506 = vpop.f32.mrf.mxu0
  %v2507 = vadd.f32 0.0, %v2506
  %v2508 = vpop.f32.mrf.mxu0
  %2509 = vdwg.mxu0
  %v2510 = vadd.f32 %v2399, %v2481
  %v2511 = vadd.f32 %v2400, %v2494
  %v2512 = vadd.f32 %v2401, %v2507
  %v2513 = vrot.slane %v1731, 7
  %v2515 = vrot.slane %v1737, 6
  %v2517 = vsel %vm1747, %v2513, %v2515
  %v2518 = vpack.c.bf16 %v2517, %v2517
  %s2519 = scalar_lea.vmem [#allocation3], 420
  %v2520 = vld [vmem:[%s2519] sm:$0xff]
  %v2521 = vld [vmem:[%s2519 + $0x8] sm:$0xf]
  %v2522 = vld [vmem:[%s2519 + $0xc] sm:$0xff]
  %v2523 = vld [vmem:[%s2519 + $0x14] sm:$0xf]
  %v2524 = vld [vmem:[%s2519 + $0x18] sm:$0xff]
  %v2525 = vld [vmem:[%s2519 + $0x20] sm:$0xf]
  %v2526 = vld [vmem:[%s2519 + $0x24] sm:$0xff]
  %v2527 = vld [vmem:[%s2519 + $0x2c] sm:$0xf]
  %v2528 = vld [vmem:[%s2519 + $0x30] sm:$0x33]
  %v2529 = vld [vmem:[%s2519 + $0x38] sm:$0x3]
  %v2540 = vunpack.c.l.b16 %v2520
  %v2541 = vunpack.c.h.b16 %v2520
  %v2542 = vunpack.c.l.b16 %v2521
  %v2543 = vunpack.c.l.b16 %v2522
  %v2544 = vunpack.c.h.b16 %v2522
  %v2545 = vunpack.c.l.b16 %v2523
  %v2546 = vunpack.c.l.b16 %v2524
  %v2547 = vunpack.c.h.b16 %v2524
  %v2548 = vunpack.c.l.b16 %v2525
  %v2549 = vunpack.c.l.b16 %v2526
  %v2550 = vunpack.c.h.b16 %v2526
  %v2551 = vunpack.c.l.b16 %v2527
  %v2552 = vunpack.c.l.b16 %v2528
  %v2553 = vunpack.c.h.b16 %v2528
  %v2554 = vunpack.c.l.b16 %v2529
  %v2555 = vpack.c.b16 %v2543, %v2540
  %v2556 = vpack.c.b16 %v2544, %v2541
  %v2557 = vpack.c.b16 %v2545, %v2542
  %v2558 = vpack.c.b16 %v2549, %v2546
  %v2559 = vpack.c.b16 %v2550, %v2547
  %v2560 = vpack.c.b16 %v2551, %v2548
  %v2561 = vpack.c.b16 %v2552, %v2552
  %v2562 = vpack.c.b16 %v2553, %v2553
  %v2563 = vpack.c.b16 %v2554, %v2554
  %v2571 = vsel %vm1632, %v2518, 0
  %v2574 = vsel %vm887, %v2561, 0
  %v2577 = vsel %vm887, %v2562, 0
  %v2580 = vsel %vm887, %v2563, 0
  %2582 = vmatpush.bf16.msra.mxu0 0
  %2583 = vmatpush.bf16.msra.mxu0 0
  %2584 = vmatpush.bf16.msra.mxu0 0
  %2585 = vmatpush.bf16.msra.mxu0 0
  %2586 = vmatpush.bf16.msra.mxu0 0
  %2587 = vmatpush.bf16.msra.mxu0 %v2574
  %2588 = vmatpush.bf16.msra.mxu0 %v2558
  %2589 = vmatpush.bf16.msra.mxu0 %v2555
  %2590 = vmatmul.bf16.gmra.mxu0 %v2571
  %v2591 = vpop.f32.mrf.mxu0
  %v2592 = vadd.f32 0.0, %v2591
  %v2593 = vpop.f32.mrf.mxu0
  %2594 = vdwg.mxu0
  %2595 = vmatpush.bf16.msra.mxu0 0
  %2596 = vmatpush.bf16.msra.mxu0 0
  %2597 = vmatpush.bf16.msra.mxu0 0
  %2598 = vmatpush.bf16.msra.mxu0 0
  %2599 = vmatpush.bf16.msra.mxu0 0
  %2600 = vmatpush.bf16.msra.mxu0 %v2577
  %2601 = vmatpush.bf16.msra.mxu0 %v2559
  %2602 = vmatpush.bf16.msra.mxu0 %v2556
  %2603 = vmatmul.bf16.gmra.mxu0 %v2571
  %v2604 = vpop.f32.mrf.mxu0
  %v2605 = vadd.f32 0.0, %v2604
  %v2606 = vpop.f32.mrf.mxu0
  %2607 = vdwg.mxu0
  %2608 = vmatpush.bf16.msra.mxu0 0
  %2609 = vmatpush.bf16.msra.mxu0 0
  %2610 = vmatpush.bf16.msra.mxu0 0
  %2611 = vmatpush.bf16.msra.mxu0 0
  %2612 = vmatpush.bf16.msra.mxu0 0
  %2613 = vmatpush.bf16.msra.mxu0 %v2580
  %2614 = vmatpush.bf16.msra.mxu0 %v2560
  %2615 = vmatpush.bf16.msra.mxu0 %v2557
  %2616 = vmatmul.bf16.gmra.mxu0 %v2571
  %v2617 = vpop.f32.mrf.mxu0
  %v2618 = vadd.f32 0.0, %v2617
  %v2619 = vpop.f32.mrf.mxu0
  %2620 = vdwg.mxu0
  %v2621 = vadd.f32 %v2510, %v2592
  %v2622 = vadd.f32 %v2511, %v2605
  %v2623 = vadd.f32 %v2512, %v2618
  %v2625 = vrot.slane %v1738, 7
  %v2627 = vsel %vm1747, %v1732, %v2625
  %v2628 = vpack.c.bf16 %v2627, %v2627
  %s2629 = scalar_lea.vmem [#allocation3], 480
  %v2630 = vld [vmem:[%s2629] sm:$0xff]
  %v2631 = vld [vmem:[%s2629 + $0x8] sm:$0xf]
  %v2632 = vld [vmem:[%s2629 + $0xc] sm:$0xff]
  %v2633 = vld [vmem:[%s2629 + $0x14] sm:$0xf]
  %v2634 = vld [vmem:[%s2629 + $0x18] sm:$0xff]
  %v2635 = vld [vmem:[%s2629 + $0x20] sm:$0xf]
  %v2636 = vld [vmem:[%s2629 + $0x24] sm:$0xff]
  %v2637 = vld [vmem:[%s2629 + $0x2c] sm:$0xf]
  %v2638 = vld [vmem:[%s2629 + $0x30] sm:$0x33]
  %v2639 = vld [vmem:[%s2629 + $0x38] sm:$0x3]
  %v2650 = vunpack.c.l.b16 %v2630
  %v2651 = vunpack.c.h.b16 %v2630
  %v2652 = vunpack.c.l.b16 %v2631
  %v2653 = vunpack.c.l.b16 %v2632
  %v2654 = vunpack.c.h.b16 %v2632
  %v2655 = vunpack.c.l.b16 %v2633
  %v2656 = vunpack.c.l.b16 %v2634
  %v2657 = vunpack.c.h.b16 %v2634
  %v2658 = vunpack.c.l.b16 %v2635
  %v2659 = vunpack.c.l.b16 %v2636
  %v2660 = vunpack.c.h.b16 %v2636
  %v2661 = vunpack.c.l.b16 %v2637
  %v2662 = vunpack.c.l.b16 %v2638
  %v2663 = vunpack.c.h.b16 %v2638
  %v2664 = vunpack.c.l.b16 %v2639
  %v2665 = vpack.c.b16 %v2653, %v2650
  %v2666 = vpack.c.b16 %v2654, %v2651
  %v2667 = vpack.c.b16 %v2655, %v2652
  %v2668 = vpack.c.b16 %v2659, %v2656
  %v2669 = vpack.c.b16 %v2660, %v2657
  %v2670 = vpack.c.b16 %v2661, %v2658
  %v2671 = vpack.c.b16 %v2662, %v2662
  %v2672 = vpack.c.b16 %v2663, %v2663
  %v2673 = vpack.c.b16 %v2664, %v2664
  %v2681 = vsel %vm1632, %v2628, 0
  %v2684 = vsel %vm887, %v2671, 0
  %v2687 = vsel %vm887, %v2672, 0
  %v2690 = vsel %vm887, %v2673, 0
  %2692 = vmatpush.bf16.msra.mxu0 0
  %2693 = vmatpush.bf16.msra.mxu0 0
  %2694 = vmatpush.bf16.msra.mxu0 0
  %2695 = vmatpush.bf16.msra.mxu0 0
  %2696 = vmatpush.bf16.msra.mxu0 0
  %2697 = vmatpush.bf16.msra.mxu0 %v2684
  %2698 = vmatpush.bf16.msra.mxu0 %v2668
  %2699 = vmatpush.bf16.msra.mxu0 %v2665
  %2700 = vmatmul.bf16.gmra.mxu0 %v2681
  %v2701 = vpop.f32.mrf.mxu0
  %v2702 = vadd.f32 0.0, %v2701
  %v2703 = vpop.f32.mrf.mxu0
  %2704 = vdwg.mxu0
  %2705 = vmatpush.bf16.msra.mxu0 0
  %2706 = vmatpush.bf16.msra.mxu0 0
  %2707 = vmatpush.bf16.msra.mxu0 0
  %2708 = vmatpush.bf16.msra.mxu0 0
  %2709 = vmatpush.bf16.msra.mxu0 0
  %2710 = vmatpush.bf16.msra.mxu0 %v2687
  %2711 = vmatpush.bf16.msra.mxu0 %v2669
  %2712 = vmatpush.bf16.msra.mxu0 %v2666
  %2713 = vmatmul.bf16.gmra.mxu0 %v2681
  %v2714 = vpop.f32.mrf.mxu0
  %v2715 = vadd.f32 0.0, %v2714
  %v2716 = vpop.f32.mrf.mxu0
  %2717 = vdwg.mxu0
  %2718 = vmatpush.bf16.msra.mxu0 0
  %2719 = vmatpush.bf16.msra.mxu0 0
  %2720 = vmatpush.bf16.msra.mxu0 0
  %2721 = vmatpush.bf16.msra.mxu0 0
  %2722 = vmatpush.bf16.msra.mxu0 0
  %2723 = vmatpush.bf16.msra.mxu0 %v2690
  %2724 = vmatpush.bf16.msra.mxu0 %v2670
  %2725 = vmatpush.bf16.msra.mxu0 %v2667
  %2726 = vmatmul.bf16.gmra.mxu0 %v2681
  %v2727 = vpop.f32.mrf.mxu0
  %v2728 = vadd.f32 0.0, %v2727
  %v2729 = vpop.f32.mrf.mxu0
  %2730 = vdwg.mxu0
  %v2731 = vadd.f32 %v2621, %v2702
  %v2732 = vadd.f32 %v2622, %v2715
  %v2733 = vadd.f32 %v2623, %v2728
  %v2735 = vrot.slane %v1732, 1
  %v2737 = vsel %vm1747, %v2735, %v1738
  %v2738 = vpack.c.bf16 %v2737, %v2737
  %s2739 = scalar_lea.vmem [#allocation3], 540
  %v2740 = vld [vmem:[%s2739] sm:$0xff]
  %v2741 = vld [vmem:[%s2739 + $0x8] sm:$0xf]
  %v2742 = vld [vmem:[%s2739 + $0xc] sm:$0xff]
  %v2743 = vld [vmem:[%s2739 + $0x14] sm:$0xf]
  %v2744 = vld [vmem:[%s2739 + $0x18] sm:$0xff]
  %v2745 = vld [vmem:[%s2739 + $0x20] sm:$0xf]
  %v2746 = vld [vmem:[%s2739 + $0x24] sm:$0xff]
  %v2747 = vld [vmem:[%s2739 + $0x2c] sm:$0xf]
  %v2748 = vld [vmem:[%s2739 + $0x30] sm:$0x33]
  %v2749 = vld [vmem:[%s2739 + $0x38] sm:$0x3]
  %v2760 = vunpack.c.l.b16 %v2740
  %v2761 = vunpack.c.h.b16 %v2740
  %v2762 = vunpack.c.l.b16 %v2741
  %v2763 = vunpack.c.l.b16 %v2742
  %v2764 = vunpack.c.h.b16 %v2742
  %v2765 = vunpack.c.l.b16 %v2743
  %v2766 = vunpack.c.l.b16 %v2744
  %v2767 = vunpack.c.h.b16 %v2744
  %v2768 = vunpack.c.l.b16 %v2745
  %v2769 = vunpack.c.l.b16 %v2746
  %v2770 = vunpack.c.h.b16 %v2746
  %v2771 = vunpack.c.l.b16 %v2747
  %v2772 = vunpack.c.l.b16 %v2748
  %v2773 = vunpack.c.h.b16 %v2748
  %v2774 = vunpack.c.l.b16 %v2749
  %v2775 = vpack.c.b16 %v2763, %v2760
  %v2776 = vpack.c.b16 %v2764, %v2761
  %v2777 = vpack.c.b16 %v2765, %v2762
  %v2778 = vpack.c.b16 %v2769, %v2766
  %v2779 = vpack.c.b16 %v2770, %v2767
  %v2780 = vpack.c.b16 %v2771, %v2768
  %v2781 = vpack.c.b16 %v2772, %v2772
  %v2782 = vpack.c.b16 %v2773, %v2773
  %v2783 = vpack.c.b16 %v2774, %v2774
  %v2791 = vsel %vm1632, %v2738, 0
  %v2794 = vsel %vm887, %v2781, 0
  %v2797 = vsel %vm887, %v2782, 0
  %v2800 = vsel %vm887, %v2783, 0
  %2802 = vmatpush.bf16.msra.mxu0 0
  %2803 = vmatpush.bf16.msra.mxu0 0
  %2804 = vmatpush.bf16.msra.mxu0 0
  %2805 = vmatpush.bf16.msra.mxu0 0
  %2806 = vmatpush.bf16.msra.mxu0 0
  %2807 = vmatpush.bf16.msra.mxu0 %v2794
  %2808 = vmatpush.bf16.msra.mxu0 %v2778
  %2809 = vmatpush.bf16.msra.mxu0 %v2775
  %2810 = vmatmul.bf16.gmra.mxu0 %v2791
  %v2811 = vpop.f32.mrf.mxu0
  %v2812 = vadd.f32 0.0, %v2811
  %v2813 = vpop.f32.mrf.mxu0
  %2814 = vdwg.mxu0
  %2815 = vmatpush.bf16.msra.mxu0 0
  %2816 = vmatpush.bf16.msra.mxu0 0
  %2817 = vmatpush.bf16.msra.mxu0 0
  %2818 = vmatpush.bf16.msra.mxu0 0
  %2819 = vmatpush.bf16.msra.mxu0 0
  %2820 = vmatpush.bf16.msra.mxu0 %v2797
  %2821 = vmatpush.bf16.msra.mxu0 %v2779
  %2822 = vmatpush.bf16.msra.mxu0 %v2776
  %2823 = vmatmul.bf16.gmra.mxu0 %v2791
  %v2824 = vpop.f32.mrf.mxu0
  %v2825 = vadd.f32 0.0, %v2824
  %v2826 = vpop.f32.mrf.mxu0
  %2827 = vdwg.mxu0
  %2828 = vmatpush.bf16.msra.mxu0 0
  %2829 = vmatpush.bf16.msra.mxu0 0
  %2830 = vmatpush.bf16.msra.mxu0 0
  %2831 = vmatpush.bf16.msra.mxu0 0
  %2832 = vmatpush.bf16.msra.mxu0 0
  %2833 = vmatpush.bf16.msra.mxu0 %v2800
  %2834 = vmatpush.bf16.msra.mxu0 %v2780
  %2835 = vmatpush.bf16.msra.mxu0 %v2777
  %2836 = vmatmul.bf16.gmra.mxu0 %v2791
  %v2837 = vpop.f32.mrf.mxu0
  %v2838 = vadd.f32 0.0, %v2837
  %v2839 = vpop.f32.mrf.mxu0
  %2840 = vdwg.mxu0
  %v2841 = vadd.f32 %v2731, %v2812
  %v2842 = vadd.f32 %v2732, %v2825
  %v2843 = vadd.f32 %v2733, %v2838
  %2844 = vrot.lane.b32.xlu0 %v299, 125
  %v2845 = vpop.permute.xlu0 %2844
  %s2846 = vtos %v2845
  %v2847 = vstv %s2846
  %v2849 = vadd.f32 %v2841, %v2847
  %v2850 = vadd.f32 %v2842, %v2847
  %v2851 = vadd.f32 %v2843, %v2847
  %v2852 = vtanh.pop %v2849
  %v2853 = vtanh.pop %v2850
  %v2854 = vtanh.pop %v2851
  %v2858 = vrot.slane %v2853, 6
  %v2859 = vrot.slane %v2854, 4
  %v2860 = vsel %vm887, %v2852, %v2858
  %vm2861 = vcmask 1043456
  %v2862 = vsel %vm2861, %v2860, %v2859
  %vm2864 = vcmask 1043458
  %vm2865 = vmor %vm2864, %vm887
  %vm2866 = vcmask 553988
  %vm2867 = vmor %vm2866, %vm2865
  %2868 = vst.msk [vmem:[%s6] sm:$0x3f] %vm2867, %v2862
  // Predicated region
  $region56: #{forecast_net_forward.1} parent=0 // pred_check
    _
  $region57: #{forecast_net_forward.1} parent=0 // pred_check_branch
    %2870 = sbr.rel (0) target = $region59
  $region58: #{forecast_net_forward.1} parent=0 // pred_region
    _
  $region59: #{forecast_net_forward.1} parent=0 // pred_fallthru
    _
  // Predicated region
  $region60: #{forecast_net_forward.1} parent=0 // pred_check
    _
  $region61: #{forecast_net_forward.1} parent=0 // pred_check_branch
    %2872 = sbr.rel (0) target = $region63
  $region62: #{forecast_net_forward.1} parent=0 // pred_region
    _
  $region63: #{forecast_net_forward.1} parent=0 // pred_fallthru
    _
  %2873 = vsyncmov [#allocation4]
  %s2874 = vpop.sfrf %2873
  %p2875 = scmp.eq.s32.totalorder %s2874, 0
  %p2876 = pneg %p2875
  %2878 = shalt.err (%p2876)
  %s2879 = scalar_lea.sflag [#allocation4], 1
  %2880 = vsyncmov %s2879
  %s2881 = vpop.sfrf %2880
  %p2882 = scmp.eq.s32.totalorder %s2881, 0
  %p2883 = pneg %p2882
  %2885 = shalt.err (%p2883)

</llo_original>
